<compile_context>
chip_gen: v7x
topology: tpu7x:2x2x1
jax: 0.10.0
libtpu: 0.0.40
codegen_flags: <defaults>
</compile_context>

<pallas_src>
import functools

import jax
import jax.numpy as jnp
from jax import lax
from jax.experimental import pallas as pl
from jax.experimental.pallas import tpu as pltpu


def _round_up(x, m):
    return (x + m - 1) // m * m


# ----------------------------------------------------------------------------
# Fused Bottleneck kernel (one grid step = one batch element x one row block)
# ----------------------------------------------------------------------------
def bottleneck_kernel(x_ref, w1_ref, b1_ref, w2_ref, b2_ref, w3_ref, b3_ref,
                      o_ref, *, TH, Wo, H, W):
    """Shapes seen by the kernel:

      x_ref : (Hp+2, Wx, Cin_p)  bf16  zero-padded input, resident per batch
      w1_ref: (Cin_p, P_p)       bf16  conv1 weight, BN1 scale folded in
      b1_ref: (1, P_p)           f32
      w2_ref: (9, P_p, P_p)      bf16  conv2 taps (ky*3+kx), BN2 scale folded in
      b2_ref: (1, P_p)           f32
      w3_ref: (P_p, Cout_p)      bf16  conv3 weight, BN3 scale folded in
      b3_ref: (1, Cout_p)        f32
      o_ref : (TH, Wo, Cout_p)   f32
    """
    r = pl.program_id(1)
    Wx = x_ref.shape[1]
    Cin_p = x_ref.shape[2]
    P_p = w1_ref.shape[1]
    Cout_p = w3_ref.shape[1]

    row0 = r * TH
    if TH % 8 == 0:
        row0 = pl.multiple_of(row0, 8)

    # ---- conv1 (1x1) + bn1 + relu over the (TH+2)-row halo ------------------
    xh = x_ref[pl.ds(row0, TH + 2), :, :]            # (TH+2, Wx, Cin_p) bf16
    h1 = jnp.dot(xh.reshape((TH + 2) * Wx, Cin_p), w1_ref[...],
                 preferred_element_type=jnp.float32)
    h1 = jnp.maximum(h1 + b1_ref[...], 0.0)
    h1 = h1.reshape(TH + 2, Wx, P_p)

    # conv2's zero padding applies to h1 (not x): zero every halo position
    # outside the real image (conv pad row/cols, alignment pad cols, rows > H).
    grow = row0 + lax.broadcasted_iota(jnp.int32, (TH + 2, Wx, 1), 0)
    gcol = lax.broadcasted_iota(jnp.int32, (TH + 2, Wx, 1), 1)
    valid = (grow >= 1) & (grow <= H) & (gcol >= 1) & (gcol <= W)
    h1 = jnp.where(valid, h1, 0.0).astype(jnp.bfloat16)

    # ---- conv2 (3x3) as 9 shifted matmuls, accumulated in f32 ---------------
    acc = jnp.zeros((TH * Wo, P_p), jnp.float32)
    for ky in range(3):
        for kx in range(3):
            patch = h1[ky:ky + TH, kx:kx + Wo, :].reshape(TH * Wo, P_p)
            acc = acc + jnp.dot(patch, w2_ref[ky * 3 + kx],
                                preferred_element_type=jnp.float32)
    h2 = jnp.maximum(acc + b2_ref[...], 0.0).astype(jnp.bfloat16)

    # ---- conv3 (1x1) + bn3 + residual add + relu ----------------------------
    h3 = jnp.dot(h2, w3_ref[...], preferred_element_type=jnp.float32)
    h3 = h3 + b3_ref[...]
    res = x_ref[pl.ds(row0 + 1, TH), pl.ds(1, Wo), :]     # (TH, Wo, Cin_p) bf16
    res = res.reshape(TH * Wo, Cin_p).astype(jnp.float32)  # Cin_p == Cout_p
    out = jnp.maximum(h3 + res, 0.0)
    o_ref[...] = out.reshape(TH, Wo, Cout_p)


# ----------------------------------------------------------------------------
# Wrapper
# ----------------------------------------------------------------------------
def bottleneck_forward(x_nchw, params, *, tile_h=8):
    (w1, s1, b1, w2_hwio, s2, b2, w3, s3, b3) = params
    B, Cin, H, W = x_nchw.shape
    P = w1.shape[1]
    Cout = w3.shape[1]
    assert Cout == Cin, "identity residual requires inplanes == planes * 4"

    LANE = 128     # lane width  (last-dim alignment)
    SUBL = 16      # sublane alignment that is tile-exact for both bf16 and f32
    Cin_p = _round_up(Cin, LANE)
    P_p = _round_up(P, LANE)
    Cout_p = _round_up(Cout, LANE)
    assert Cin_p == Cout_p

    TH = max(1, min(tile_h, H))          # row-block height
    NB = (H + TH - 1) // TH              # number of row blocks (handles remainder)
    Hp = NB * TH                         # padded height
    Wo = _round_up(W, SUBL)              # stored output width (sublane aligned)
    Wx = Wo + SUBL                       # padded input width (>= Wo+2, aligned)

    # ---- fold BN scale into conv weights (one-time), pad channels, bf16 -----
    w1f = w1 * s1.reshape(1, P)                                   # (Cin, P)
    w2f = (w2_hwio * s2.reshape(1, 1, 1, P)).reshape(9, P, P)     # HWIO -> (9,P,P)
    w3f = w3 * s3.reshape(1, Cout)                                # (P, Cout)

    w1p = jnp.zeros((Cin_p, P_p), jnp.float32).at[:Cin, :P].set(w1f)
    w2p = jnp.zeros((9, P_p, P_p), jnp.float32).at[:, :P, :P].set(w2f)
    w3p = jnp.zeros((P_p, Cout_p), jnp.float32).at[:P, :Cout].set(w3f)
    w1p = w1p.astype(jnp.bfloat16)
    w2p = w2p.astype(jnp.bfloat16)
    w3p = w3p.astype(jnp.bfloat16)
    b1p = jnp.zeros((1, P_p), jnp.float32).at[:, :P].set(b1.reshape(1, P))
    b2p = jnp.zeros((1, P_p), jnp.float32).at[:, :P].set(b2.reshape(1, P))
    b3p = jnp.zeros((1, Cout_p), jnp.float32).at[:, :Cout].set(b3.reshape(1, Cout))

    # ---- NCHW -> NHWC, conv-halo + alignment + channel padding, bf16 --------
    x = jnp.transpose(x_nchw, (0, 2, 3, 1)).astype(jnp.bfloat16)
    x_pad = jnp.zeros((B, Hp + 2, Wx, Cin_p), jnp.bfloat16)
    x_pad = x_pad.at[:, 1:H + 1, 1:W + 1, :Cin].set(x)

    kernel = functools.partial(bottleneck_kernel, TH=TH, Wo=Wo, H=H, W=W)

    out_pad = pl.pallas_call(
        kernel,
        out_shape=jax.ShapeDtypeStruct((B, Hp, Wo, Cout_p), jnp.float32),
        grid_spec=pltpu.PrefetchScalarGridSpec(
            num_scalar_prefetch=0,
            grid=(B, NB),
            in_specs=[
                # per-batch padded image: resident across the row-block axis
                pl.BlockSpec((None, Hp + 2, Wx, Cin_p), lambda b, r: (b, 0, 0, 0)),
                # weights / biases: constant index maps -> stay resident
                pl.BlockSpec((Cin_p, P_p), lambda b, r: (0, 0)),
                pl.BlockSpec((1, P_p), lambda b, r: (0, 0)),
                pl.BlockSpec((9, P_p, P_p), lambda b, r: (0, 0, 0)),
                pl.BlockSpec((1, P_p), lambda b, r: (0, 0)),
                pl.BlockSpec((P_p, Cout_p), lambda b, r: (0, 0)),
                pl.BlockSpec((1, Cout_p), lambda b, r: (0, 0)),
            ],
            out_specs=pl.BlockSpec((None, TH, Wo, Cout_p),
                                   lambda b, r: (b, r, 0, 0)),
        ),
        compiler_params=pltpu.CompilerParams(
            dimension_semantics=("parallel", "parallel"),
            vmem_limit_bytes=48 * 1024 * 1024),
    )(x_pad, w1p, b1p, w2p, b2p, w3p, b3p)

    out = out_pad[:, :H, :W, :Cout]                 # drop H/W/channel padding
    return jnp.transpose(out, (0, 3, 1, 2))         # back to NCHW


# ----------------------------------------------------------------------------
# Deterministic parameter construction (folded BN) + pure-JAX reference
# ----------------------------------------------------------------------------
def make_params(key, inplanes, planes):
    eps = 1e-5
    ks = jax.random.split(key, 15)

    def bn_fold(kg, kb, km, kv, c):
        gamma = 1.0 + 0.1 * jax.random.normal(kg, (c,), jnp.float32)
        beta = 0.1 * jax.random.normal(kb, (c,), jnp.float32)
        mean = 0.1 * jax.random.normal(km, (c,), jnp.float32)
        var = jnp.abs(jax.random.normal(kv, (c,), jnp.float32)) + 1.0
        scale = gamma / jnp.sqrt(var + eps)
        bias = beta - mean * scale
        return scale, bias

    w1 = 0.1 * jax.random.normal(ks[0], (inplanes, planes), jnp.float32)
    s1, b1 = bn_fold(ks[1], ks[2], ks[3], ks[4], planes)
    w2 = 0.1 * jax.random.normal(ks[5], (3, 3, planes, planes), jnp.float32)  # HWIO
    s2, b2 = bn_fold(ks[6], ks[7], ks[8], ks[9], planes)
    w3 = 0.1 * jax.random.normal(ks[10], (planes, planes * 4), jnp.float32)
    s3, b3 = bn_fold(ks[11], ks[12], ks[13], ks[14], planes * 4)
    return (w1, s1, b1, w2, s2, b2, w3, s3, b3)


def bottleneck_reference(x_nchw, params):
    (w1, s1, b1, w2_hwio, s2, b2, w3, s3, b3) = params
    x = jnp.transpose(x_nchw, (0, 2, 3, 1)).astype(jnp.float32)   # NHWC
    dn = ("NHWC", "HWIO", "NHWC")
    conv = functools.partial(lax.conv_general_dilated,
                             window_strides=(1, 1), dimension_numbers=dn)
    Cin, P = w1.shape
    h = conv(x, w1.reshape(1, 1, Cin, P), padding="VALID")
    h = jnp.maximum(h * s1.reshape(1, 1, 1, -1) + b1.reshape(1, 1, 1, -1), 0.0)
    h = conv(h, w2_hwio, padding=((1, 1), (1, 1)))
    h = jnp.maximum(h * s2.reshape(1, 1, 1, -1) + b2.reshape(1, 1, 1, -1), 0.0)
    h = conv(h, w3.reshape(1, 1, P, 4 * P), padding="VALID")
    h = h * s3.reshape(1, 1, 1, -1) + b3.reshape(1, 1, 1, -1)
    out = jnp.maximum(h + x, 0.0)
    return jnp.transpose(out, (0, 3, 1, 2))


if __name__ == "__main__":
    # Small shapes: inplanes = planes * expansion so the identity residual
    # (downsample=None) is valid, as in the PyTorch module.
    B, H, W = 2, 16, 16
    planes = 4
    inplanes = planes * 4  # 16

    key = jax.random.PRNGKey(0)
    kx, kp = jax.random.split(key)
    x = jax.random.normal(kx, (B, inplanes, H, W), jnp.float32)   # NCHW
    # The kernel streams the residual in bf16; round x to bf16 precision so the
    # f32 reference sees the same operand on the (dominant) residual path.
    x = x.astype(jnp.bfloat16).astype(jnp.float32)
    params = make_params(kp, inplanes, planes)

    out = jax.block_until_ready(bottleneck_forward(x, params, tile_h=8))
    ref = jax.block_until_ready(bottleneck_reference(x, params))

    assert out.shape == (B, planes * 4, H, W), out.shape
    max_err = float(jnp.max(jnp.abs(out - ref)))
    assert max_err < 3e-2, f"mismatch vs reference, max abs err = {max_err}"

    print("KERNEL_OK")
</pallas_src>

<mosaic_0001>
module attributes {stable_mosaic.version = 11 : i64} {
  func.func @bottleneck_kernel(%arg0: i32, %arg1: i32, %arg2: memref<1x18x32x128xbf16, #tpu.memory_space<vmem>>, %arg3: memref<128x128xbf16, #tpu.memory_space<vmem>>, %arg4: memref<1x128xf32, #tpu.memory_space<vmem>>, %arg5: memref<9x128x128xbf16, #tpu.memory_space<vmem>>, %arg6: memref<1x128xf32, #tpu.memory_space<vmem>>, %arg7: memref<128x128xbf16, #tpu.memory_space<vmem>>, %arg8: memref<1x128xf32, #tpu.memory_space<vmem>>, %arg9: memref<1x8x16x128xf32, #tpu.memory_space<vmem>>) attributes {dimension_semantics = [#tpu.dimension_semantics<parallel>, #tpu.dimension_semantics<parallel>], iteration_bounds = array<i64: 2, 2>, scalar_prefetch = 0 : i64, scratch_operands = 0 : i64, tpu.core_type = #tpu.core_type<tc>, window_params = [{transform_indices = @transform_0, window_bounds = array<i64: 1, 18, 32, 128>}, {pipeline_mode = #tpu.pipeline_mode<synchronous>, transform_indices = @transform_1, window_bounds = array<i64: 128, 128>}, {pipeline_mode = #tpu.pipeline_mode<synchronous>, transform_indices = @transform_2, window_bounds = array<i64: 1, 128>}, {pipeline_mode = #tpu.pipeline_mode<synchronous>, transform_indices = @transform_3, window_bounds = array<i64: 9, 128, 128>}, {pipeline_mode = #tpu.pipeline_mode<synchronous>, transform_indices = @transform_4, window_bounds = array<i64: 1, 128>}, {pipeline_mode = #tpu.pipeline_mode<synchronous>, transform_indices = @transform_5, window_bounds = array<i64: 128, 128>}, {pipeline_mode = #tpu.pipeline_mode<synchronous>, transform_indices = @transform_6, window_bounds = array<i64: 1, 128>}, {transform_indices = @transform_7, window_bounds = array<i64: 1, 8, 16, 128>}]} {
    %c8_i32 = arith.constant 8 : i32
    %0 = arith.muli %arg1, %c8_i32 : i32
    %1 = tpu.assume_multiple %0, 8 : i32
    %c0 = arith.constant 0 : index
    %2 = arith.index_cast %1 : i32 to index
    %c0_0 = arith.constant 0 : index
    %c0_1 = arith.constant 0 : index
    %3 = vector.load %arg2[%c0, %2, %c0_0, %c0_1] : memref<1x18x32x128xbf16, #tpu.memory_space<vmem>>, vector<1x10x32x128xbf16>
    %4 = vector.shape_cast %3 : vector<1x10x32x128xbf16> to vector<10x32x128xbf16>
    %5 = vector.shape_cast %4 : vector<10x32x128xbf16> to vector<320x128xbf16>
    %c0_2 = arith.constant 0 : index
    %c0_3 = arith.constant 0 : index
    %6 = vector.load %arg3[%c0_2, %c0_3] : memref<128x128xbf16, #tpu.memory_space<vmem>>, vector<128x128xbf16>
    %cst = arith.constant dense<0.000000e+00> : vector<320x128xf32>
    %7 = tpu.matmul %5, %6, %cst {dimension_numbers = #tpu.dot_dimension_numbers<[1], [0], [0], [1], [0, 0, 1, 1], [], []>} : vector<320x128xbf16>, vector<128x128xbf16>, vector<320x128xf32> -> vector<320x128xf32>
    %c0_4 = arith.constant 0 : index
    %c0_5 = arith.constant 0 : index
    %8 = vector.load %arg4[%c0_4, %c0_5] : memref<1x128xf32, #tpu.memory_space<vmem>>, vector<1x128xf32>
    %9 = vector.broadcast %8 : vector<1x128xf32> to vector<320x128xf32>
    %10 = arith.addf %7, %9 : vector<320x128xf32>
    %cst_6 = arith.constant 0.000000e+00 : f32
    %11 = vector.broadcast %cst_6 : f32 to vector<320x128xf32>
    %12 = arith.maximumf %10, %11 : vector<320x128xf32>
    %13 = vector.shape_cast %12 : vector<320x128xf32> to vector<10x32x128xf32>
    %14 = tpu.iota {dimensions = array<i32: 0>} : vector<10x32x1xi32>
    %15 = vector.broadcast %1 : i32 to vector<10x32x1xi32>
    %16 = arith.addi %15, %14 : vector<10x32x1xi32>
    %17 = tpu.iota {dimensions = array<i32: 1>} : vector<10x32x1xi32>
    %c1_i32 = arith.constant 1 : i32
    %18 = vector.broadcast %c1_i32 : i32 to vector<10x32x1xi32>
    %19 = arith.cmpi sge, %16, %18 : vector<10x32x1xi32>
    %c16_i32 = arith.constant 16 : i32
    %20 = vector.broadcast %c16_i32 : i32 to vector<10x32x1xi32>
    %21 = arith.cmpi sle, %16, %20 : vector<10x32x1xi32>
    %22 = arith.andi %19, %21 : vector<10x32x1xi1>
    %c1_i32_7 = arith.constant 1 : i32
    %23 = vector.broadcast %c1_i32_7 : i32 to vector<10x32x1xi32>
    %24 = arith.cmpi sge, %17, %23 : vector<10x32x1xi32>
    %25 = arith.andi %22, %24 : vector<10x32x1xi1>
    %c16_i32_8 = arith.constant 16 : i32
    %26 = vector.broadcast %c16_i32_8 : i32 to vector<10x32x1xi32>
    %27 = arith.cmpi sle, %17, %26 : vector<10x32x1xi32>
    %28 = arith.andi %25, %27 : vector<10x32x1xi1>
    %cst_9 = arith.constant 0.000000e+00 : f32
    %29 = vector.shape_cast %28 : vector<10x32x1xi1> to vector<10x32x1xi1>
    %30 = vector.broadcast %29 : vector<10x32x1xi1> to vector<10x32x128xi1>
    %31 = vector.broadcast %cst_9 : f32 to vector<10x32x128xf32>
    %32 = arith.select %30, %13, %31 : vector<10x32x128xi1>, vector<10x32x128xf32>
    %33 = arith.truncf %32 : vector<10x32x128xf32> to vector<10x32x128xbf16>
    %cst_10 = arith.constant 0.000000e+00 : f32
    %34 = vector.broadcast %cst_10 : f32 to vector<128x128xf32>
    %35 = vector.extract_strided_slice %33 {offsets = [0, 0, 0], sizes = [8, 16, 128], strides = [1, 1, 1]} : vector<10x32x128xbf16> to vector<8x16x128xbf16>
    %36 = vector.shape_cast %35 : vector<8x16x128xbf16> to vector<128x128xbf16>
    %c0_11 = arith.constant 0 : index
    %c0_12 = arith.constant 0 : index
    %c0_13 = arith.constant 0 : index
    %37 = vector.load %arg5[%c0_11, %c0_12, %c0_13] : memref<9x128x128xbf16, #tpu.memory_space<vmem>>, vector<1x128x128xbf16>
    %38 = vector.shape_cast %37 : vector<1x128x128xbf16> to vector<128x128xbf16>
    %cst_14 = arith.constant dense<0.000000e+00> : vector<128x128xf32>
    %39 = tpu.matmul %36, %38, %cst_14 {dimension_numbers = #tpu.dot_dimension_numbers<[1], [0], [0], [1], [0, 0, 1, 1], [], []>} : vector<128x128xbf16>, vector<128x128xbf16>, vector<128x128xf32> -> vector<128x128xf32>
    %40 = arith.addf %34, %39 : vector<128x128xf32>
    %41 = vector.extract_strided_slice %33 {offsets = [0, 1, 0], sizes = [8, 16, 128], strides = [1, 1, 1]} : vector<10x32x128xbf16> to vector<8x16x128xbf16>
    %42 = vector.shape_cast %41 : vector<8x16x128xbf16> to vector<128x128xbf16>
    %c1 = arith.constant 1 : index
    %c0_15 = arith.constant 0 : index
    %c0_16 = arith.constant 0 : index
    %43 = vector.load %arg5[%c1, %c0_15, %c0_16] : memref<9x128x128xbf16, #tpu.memory_space<vmem>>, vector<1x128x128xbf16>
    %44 = vector.shape_cast %43 : vector<1x128x128xbf16> to vector<128x128xbf16>
    %cst_17 = arith.constant dense<0.000000e+00> : vector<128x128xf32>
    %45 = tpu.matmul %42, %44, %cst_17 {dimension_numbers = #tpu.dot_dimension_numbers<[1], [0], [0], [1], [0, 0, 1, 1], [], []>} : vector<128x128xbf16>, vector<128x128xbf16>, vector<128x128xf32> -> vector<128x128xf32>
    %46 = arith.addf %40, %45 : vector<128x128xf32>
    %47 = vector.extract_strided_slice %33 {offsets = [0, 2, 0], sizes = [8, 16, 128], strides = [1, 1, 1]} : vector<10x32x128xbf16> to vector<8x16x128xbf16>
    %48 = vector.shape_cast %47 : vector<8x16x128xbf16> to vector<128x128xbf16>
    %c2 = arith.constant 2 : index
    %c0_18 = arith.constant 0 : index
    %c0_19 = arith.constant 0 : index
    %49 = vector.load %arg5[%c2, %c0_18, %c0_19] : memref<9x128x128xbf16, #tpu.memory_space<vmem>>, vector<1x128x128xbf16>
    %50 = vector.shape_cast %49 : vector<1x128x128xbf16> to vector<128x128xbf16>
    %cst_20 = arith.constant dense<0.000000e+00> : vector<128x128xf32>
    %51 = tpu.matmul %48, %50, %cst_20 {dimension_numbers = #tpu.dot_dimension_numbers<[1], [0], [0], [1], [0, 0, 1, 1], [], []>} : vector<128x128xbf16>, vector<128x128xbf16>, vector<128x128xf32> -> vector<128x128xf32>
    %52 = arith.addf %46, %51 : vector<128x128xf32>
    %53 = vector.extract_strided_slice %33 {offsets = [1, 0, 0], sizes = [8, 16, 128], strides = [1, 1, 1]} : vector<10x32x128xbf16> to vector<8x16x128xbf16>
    %54 = vector.shape_cast %53 : vector<8x16x128xbf16> to vector<128x128xbf16>
    %c3 = arith.constant 3 : index
    %c0_21 = arith.constant 0 : index
    %c0_22 = arith.constant 0 : index
    %55 = vector.load %arg5[%c3, %c0_21, %c0_22] : memref<9x128x128xbf16, #tpu.memory_space<vmem>>, vector<1x128x128xbf16>
    %56 = vector.shape_cast %55 : vector<1x128x128xbf16> to vector<128x128xbf16>
    %cst_23 = arith.constant dense<0.000000e+00> : vector<128x128xf32>
    %57 = tpu.matmul %54, %56, %cst_23 {dimension_numbers = #tpu.dot_dimension_numbers<[1], [0], [0], [1], [0, 0, 1, 1], [], []>} : vector<128x128xbf16>, vector<128x128xbf16>, vector<128x128xf32> -> vector<128x128xf32>
    %58 = arith.addf %52, %57 : vector<128x128xf32>
    %59 = vector.extract_strided_slice %33 {offsets = [1, 1, 0], sizes = [8, 16, 128], strides = [1, 1, 1]} : vector<10x32x128xbf16> to vector<8x16x128xbf16>
    %60 = vector.shape_cast %59 : vector<8x16x128xbf16> to vector<128x128xbf16>
    %c4 = arith.constant 4 : index
    %c0_24 = arith.constant 0 : index
    %c0_25 = arith.constant 0 : index
    %61 = vector.load %arg5[%c4, %c0_24, %c0_25] : memref<9x128x128xbf16, #tpu.memory_space<vmem>>, vector<1x128x128xbf16>
    %62 = vector.shape_cast %61 : vector<1x128x128xbf16> to vector<128x128xbf16>
    %cst_26 = arith.constant dense<0.000000e+00> : vector<128x128xf32>
    %63 = tpu.matmul %60, %62, %cst_26 {dimension_numbers = #tpu.dot_dimension_numbers<[1], [0], [0], [1], [0, 0, 1, 1], [], []>} : vector<128x128xbf16>, vector<128x128xbf16>, vector<128x128xf32> -> vector<128x128xf32>
    %64 = arith.addf %58, %63 : vector<128x128xf32>
    %65 = vector.extract_strided_slice %33 {offsets = [1, 2, 0], sizes = [8, 16, 128], strides = [1, 1, 1]} : vector<10x32x128xbf16> to vector<8x16x128xbf16>
    %66 = vector.shape_cast %65 : vector<8x16x128xbf16> to vector<128x128xbf16>
    %c5 = arith.constant 5 : index
    %c0_27 = arith.constant 0 : index
    %c0_28 = arith.constant 0 : index
    %67 = vector.load %arg5[%c5, %c0_27, %c0_28] : memref<9x128x128xbf16, #tpu.memory_space<vmem>>, vector<1x128x128xbf16>
    %68 = vector.shape_cast %67 : vector<1x128x128xbf16> to vector<128x128xbf16>
    %cst_29 = arith.constant dense<0.000000e+00> : vector<128x128xf32>
    %69 = tpu.matmul %66, %68, %cst_29 {dimension_numbers = #tpu.dot_dimension_numbers<[1], [0], [0], [1], [0, 0, 1, 1], [], []>} : vector<128x128xbf16>, vector<128x128xbf16>, vector<128x128xf32> -> vector<128x128xf32>
    %70 = arith.addf %64, %69 : vector<128x128xf32>
    %71 = vector.extract_strided_slice %33 {offsets = [2, 0, 0], sizes = [8, 16, 128], strides = [1, 1, 1]} : vector<10x32x128xbf16> to vector<8x16x128xbf16>
    %72 = vector.shape_cast %71 : vector<8x16x128xbf16> to vector<128x128xbf16>
    %c6 = arith.constant 6 : index
    %c0_30 = arith.constant 0 : index
    %c0_31 = arith.constant 0 : index
    %73 = vector.load %arg5[%c6, %c0_30, %c0_31] : memref<9x128x128xbf16, #tpu.memory_space<vmem>>, vector<1x128x128xbf16>
    %74 = vector.shape_cast %73 : vector<1x128x128xbf16> to vector<128x128xbf16>
    %cst_32 = arith.constant dense<0.000000e+00> : vector<128x128xf32>
    %75 = tpu.matmul %72, %74, %cst_32 {dimension_numbers = #tpu.dot_dimension_numbers<[1], [0], [0], [1], [0, 0, 1, 1], [], []>} : vector<128x128xbf16>, vector<128x128xbf16>, vector<128x128xf32> -> vector<128x128xf32>
    %76 = arith.addf %70, %75 : vector<128x128xf32>
    %77 = vector.extract_strided_slice %33 {offsets = [2, 1, 0], sizes = [8, 16, 128], strides = [1, 1, 1]} : vector<10x32x128xbf16> to vector<8x16x128xbf16>
    %78 = vector.shape_cast %77 : vector<8x16x128xbf16> to vector<128x128xbf16>
    %c7 = arith.constant 7 : index
    %c0_33 = arith.constant 0 : index
    %c0_34 = arith.constant 0 : index
    %79 = vector.load %arg5[%c7, %c0_33, %c0_34] : memref<9x128x128xbf16, #tpu.memory_space<vmem>>, vector<1x128x128xbf16>
    %80 = vector.shape_cast %79 : vector<1x128x128xbf16> to vector<128x128xbf16>
    %cst_35 = arith.constant dense<0.000000e+00> : vector<128x128xf32>
    %81 = tpu.matmul %78, %80, %cst_35 {dimension_numbers = #tpu.dot_dimension_numbers<[1], [0], [0], [1], [0, 0, 1, 1], [], []>} : vector<128x128xbf16>, vector<128x128xbf16>, vector<128x128xf32> -> vector<128x128xf32>
    %82 = arith.addf %76, %81 : vector<128x128xf32>
    %83 = vector.extract_strided_slice %33 {offsets = [2, 2, 0], sizes = [8, 16, 128], strides = [1, 1, 1]} : vector<10x32x128xbf16> to vector<8x16x128xbf16>
    %84 = vector.shape_cast %83 : vector<8x16x128xbf16> to vector<128x128xbf16>
    %c8 = arith.constant 8 : index
    %c0_36 = arith.constant 0 : index
    %c0_37 = arith.constant 0 : index
    %85 = vector.load %arg5[%c8, %c0_36, %c0_37] : memref<9x128x128xbf16, #tpu.memory_space<vmem>>, vector<1x128x128xbf16>
    %86 = vector.shape_cast %85 : vector<1x128x128xbf16> to vector<128x128xbf16>
    %cst_38 = arith.constant dense<0.000000e+00> : vector<128x128xf32>
    %87 = tpu.matmul %84, %86, %cst_38 {dimension_numbers = #tpu.dot_dimension_numbers<[1], [0], [0], [1], [0, 0, 1, 1], [], []>} : vector<128x128xbf16>, vector<128x128xbf16>, vector<128x128xf32> -> vector<128x128xf32>
    %88 = arith.addf %82, %87 : vector<128x128xf32>
    %c0_39 = arith.constant 0 : index
    %c0_40 = arith.constant 0 : index
    %89 = vector.load %arg6[%c0_39, %c0_40] : memref<1x128xf32, #tpu.memory_space<vmem>>, vector<1x128xf32>
    %90 = vector.broadcast %89 : vector<1x128xf32> to vector<128x128xf32>
    %91 = arith.addf %88, %90 : vector<128x128xf32>
    %cst_41 = arith.constant 0.000000e+00 : f32
    %92 = vector.broadcast %cst_41 : f32 to vector<128x128xf32>
    %93 = arith.maximumf %91, %92 : vector<128x128xf32>
    %94 = arith.truncf %93 : vector<128x128xf32> to vector<128x128xbf16>
    %c0_42 = arith.constant 0 : index
    %c0_43 = arith.constant 0 : index
    %95 = vector.load %arg7[%c0_42, %c0_43] : memref<128x128xbf16, #tpu.memory_space<vmem>>, vector<128x128xbf16>
    %cst_44 = arith.constant dense<0.000000e+00> : vector<128x128xf32>
    %96 = tpu.matmul %94, %95, %cst_44 {dimension_numbers = #tpu.dot_dimension_numbers<[1], [0], [0], [1], [0, 0, 1, 1], [], []>} : vector<128x128xbf16>, vector<128x128xbf16>, vector<128x128xf32> -> vector<128x128xf32>
    %c0_45 = arith.constant 0 : index
    %c0_46 = arith.constant 0 : index
    %97 = vector.load %arg8[%c0_45, %c0_46] : memref<1x128xf32, #tpu.memory_space<vmem>>, vector<1x128xf32>
    %98 = vector.broadcast %97 : vector<1x128xf32> to vector<128x128xf32>
    %99 = arith.addf %96, %98 : vector<128x128xf32>
    %c1_i32_47 = arith.constant 1 : i32
    %100 = arith.addi %1, %c1_i32_47 : i32
    %c0_48 = arith.constant 0 : index
    %101 = arith.index_cast %100 : i32 to index
    %c1_49 = arith.constant 1 : index
    %c0_50 = arith.constant 0 : index
    %102 = vector.load %arg2[%c0_48, %101, %c1_49, %c0_50] : memref<1x18x32x128xbf16, #tpu.memory_space<vmem>>, vector<1x8x16x128xbf16>
    %103 = vector.shape_cast %102 : vector<1x8x16x128xbf16> to vector<8x16x128xbf16>
    %104 = vector.shape_cast %103 : vector<8x16x128xbf16> to vector<128x128xbf16>
    %105 = arith.extf %104 : vector<128x128xbf16> to vector<128x128xf32>
    %106 = arith.addf %99, %105 : vector<128x128xf32>
    %cst_51 = arith.constant 0.000000e+00 : f32
    %107 = vector.broadcast %cst_51 : f32 to vector<128x128xf32>
    %108 = arith.maximumf %106, %107 : vector<128x128xf32>
    %109 = vector.shape_cast %108 : vector<128x128xf32> to vector<8x16x128xf32>
    %c0_52 = arith.constant 0 : index
    %c0_53 = arith.constant 0 : index
    %c0_54 = arith.constant 0 : index
    %c0_55 = arith.constant 0 : index
    %110 = vector.load %arg9[%c0_52, %c0_53, %c0_54, %c0_55] : memref<1x8x16x128xf32, #tpu.memory_space<vmem>>, vector<1x8x16x128xf32>
    %111 = vector.shape_cast %110 : vector<1x8x16x128xf32> to vector<8x16x128xf32>
    %112 = vector.shape_cast %109 : vector<8x16x128xf32> to vector<1x8x16x128xf32>
    tpu.vector_store %arg9[%c0_52, %c0_53, %c0_54, %c0_55], %112 {strides = array<i32>} : memref<1x8x16x128xf32, #tpu.memory_space<vmem>>, vector<1x8x16x128xf32>,
    return
  }
  func.func @transform_0(%arg0: i32, %arg1: i32) -> (i32, i32, i32, i32) {
    %c0_i32 = arith.constant 0 : i32
    %c0_i32_0 = arith.constant 0 : i32
    %c0_i32_1 = arith.constant 0 : i32
    %c0_i32_2 = arith.constant 0 : i32
    return %arg0, %c0_i32, %c0_i32_0, %c0_i32_1 : i32, i32, i32, i32
  }
  func.func @transform_1(%arg0: i32, %arg1: i32) -> (i32, i32) {
    %c0_i32 = arith.constant 0 : i32
    %c0_i32_0 = arith.constant 0 : i32
    %c0_i32_1 = arith.constant 0 : i32
    return %c0_i32, %c0_i32_0 : i32, i32
  }
  func.func @transform_2(%arg0: i32, %arg1: i32) -> (i32, i32) {
    %c0_i32 = arith.constant 0 : i32
    %c0_i32_0 = arith.constant 0 : i32
    %c0_i32_1 = arith.constant 0 : i32
    return %c0_i32, %c0_i32_0 : i32, i32
  }
  func.func @transform_3(%arg0: i32, %arg1: i32) -> (i32, i32, i32) {
    %c0_i32 = arith.constant 0 : i32
    %c0_i32_0 = arith.constant 0 : i32
    %c0_i32_1 = arith.constant 0 : i32
    %c0_i32_2 = arith.constant 0 : i32
    return %c0_i32, %c0_i32_0, %c0_i32_1 : i32, i32, i32
  }
  func.func @transform_4(%arg0: i32, %arg1: i32) -> (i32, i32) {
    %c0_i32 = arith.constant 0 : i32
    %c0_i32_0 = arith.constant 0 : i32
    %c0_i32_1 = arith.constant 0 : i32
    return %c0_i32, %c0_i32_0 : i32, i32
  }
  func.func @transform_5(%arg0: i32, %arg1: i32) -> (i32, i32) {
    %c0_i32 = arith.constant 0 : i32
    %c0_i32_0 = arith.constant 0 : i32
    %c0_i32_1 = arith.constant 0 : i32
    return %c0_i32, %c0_i32_0 : i32, i32
  }
  func.func @transform_6(%arg0: i32, %arg1: i32) -> (i32, i32) {
    %c0_i32 = arith.constant 0 : i32
    %c0_i32_0 = arith.constant 0 : i32
    %c0_i32_1 = arith.constant 0 : i32
    return %c0_i32, %c0_i32_0 : i32, i32
  }
  func.func @transform_7(%arg0: i32, %arg1: i32) -> (i32, i32, i32, i32) {
    %c0_i32 = arith.constant 0 : i32
    %c0_i32_0 = arith.constant 0 : i32
    %c0_i32_1 = arith.constant 0 : i32
    return %arg0, %arg1, %c0_i32, %c0_i32_0 : i32, i32, i32, i32
  }
}

</mosaic_0001>

<llo_original>
// kernel: tpu_custom_call.1
$region0: #{tpu_custom_call.1}
  #allocation0 [shape = 'u32[]', space=smem, size = 0x4, offset = 0x4, fixed_abs, tag = 'smem constant byte address 0x4 - core index']
  #allocation1 [shape = 'u32[144,128]{1,0:T(1,128)}', space=vmem, size = 0x12000, scoped, tag = 'internal scratch']
  %s0 = inlined_call_operand.hbm [shape: bf16[2,18,32,128], index: 0, kind: input, shape index: {}]
  %s1 = inlined_call_operand.hbm [shape: bf16[128,128], index: 1, kind: input, shape index: {}]
  %s2 = inlined_call_operand.vmem [shape: f32[1,128], index: 2, kind: input, shape index: {}]
  %s3 = inlined_call_operand.hbm [shape: bf16[9,128,128], index: 3, kind: input, shape index: {}]
  %s4 = inlined_call_operand.vmem [shape: f32[1,128], index: 4, kind: input, shape index: {}]
  %s5 = inlined_call_operand.hbm [shape: bf16[128,128], index: 5, kind: input, shape index: {}]
  %s6 = inlined_call_operand.vmem [shape: f32[1,128], index: 6, kind: input, shape index: {}]
  %s7 = inlined_call_operand.hbm [shape: f32[2,16,16,128], index: 7, kind: output, shape index: {}]
  %s8 = sld [smem:[#allocation0]]
  $region77: #{tpu_custom_call.1} parent=0
    _
  %s10 = ssub.s32 1, %s8
  %s11 = scalar_select 0, %s10, %s8
  $region1: #{tpu_custom_call.1} parent=0
    #allocation2 [shape = 'u8[294912]{0}', space=vmem, size = 0x48000, scoped, tag = 'input window, operand 0']
    #allocation3 [shape = 's32[2]{0}', space=sflag, size = 0x8, scoped, tag = 'scoped memory for tpu_custom_call.1']
    #allocation4 [shape = 's32[2]{0}', space=sflag, size = 0x8, scoped, tag = 'scoped memory for tpu_custom_call.1']
    #allocation5 [shape = 'u8[32768]{0}', space=vmem, size = 0x8000, scoped, tag = 'input window, operand 1, single buffered']
    #allocation6 [shape = 's32[1]{0}', space=sflag, size = 0x4, scoped, tag = 'scoped memory for tpu_custom_call.1']
    #allocation7 [shape = 'u8[294912]{0}', space=vmem, size = 0x48000, scoped, tag = 'input window, operand 3, single buffered']
    #allocation8 [shape = 'u8[32768]{0}', space=vmem, size = 0x8000, scoped, tag = 'input window, operand 5, single buffered']
    #allocation9 [shape = 's32[1]{0}', space=sflag, size = 0x4, scoped, tag = 'scoped memory for tpu_custom_call.1']
    #allocation10 [shape = 'u8[131072]{0}', space=vmem, size = 0x20000, scoped, tag = 'output window, operand 0']
    %12 = vsyncpa [#allocation3], 0
    %s13 = scalar_lea.sflag [#allocation3], 1
    %14 = vsyncpa %s13, 0
    %15 = vsyncpa [#allocation6], 0
    %16 = vsyncpa [#allocation9], 0
    %17 = vsyncpa [#allocation4], 0
    %s18 = scalar_lea.sflag [#allocation4], 1
    %19 = vsyncpa %s18, 0
    loop: start=0, step=1, limit=6
    $region2: #{tpu_custom_call.1} parent=1 // loop_pre_header
      _
    $region3: #{tpu_custom_call.1} parent=1 // loop_header
      %s21 = sphi 0, %s25
      %p22 = scmp.ge.s32.totalorder %s21, 6
      %s28 = sphi 0, %s40
      %s29 = sphi 0, %s36
      %s30 = sphi 0, %s28
      %s31 = sphi 0, %s29
      %s32 = sphi 0, %s30
      %s33 = sphi 0, %s31
      %s43 = sphi 0, %s45
      %s46 = sphi 0, %s43
      %s47 = sphi 0, %s46
      %s63 = sphi 0, %s47
      %s67 = sphi 0, %s67
      %s69 = sphi 0, %s67
      %s70 = sphi 0, %s69
      %s84 = sphi 0, %s70
      %s88 = sphi 0, %s88
      %s90 = sphi 0, %s88
      %s91 = sphi 0, %s90
      %s105 = sphi 0, %s91
      %s109 = sphi 0, %s109
      %s111 = sphi 0, %s109
      %s112 = sphi 0, %s111
      %s126 = sphi 0, %s112
      %s130 = sphi 0, %s130
      %s132 = sphi 0, %s130
      %s133 = sphi 0, %s132
      %s147 = sphi 0, %s133
      %s151 = sphi 0, %s151
      %s153 = sphi 0, %s151
      %s154 = sphi 0, %s153
      %s168 = sphi 0, %s154
      %s172 = sphi 0, %s172
      %s174 = sphi 0, %s172
      %s175 = sphi 0, %s174
      %s189 = sphi 0, %s175
      %s197 = sphi 0, %s199
      %s200 = sphi 0, %s197
      %s201 = sphi 0, %s200
      %s217 = sphi 0, %s201
    $region4: #{tpu_custom_call.1} parent=1 // loop_header_branch
      %24 = sbr.rel (%p22) target = $region8
    $region5: #{tpu_custom_call.1} parent=1 // loop_body
      %s26 = ssub.s32 %s21, 1
      %s27 = ssub.s32 %s21, 2
      %s34 = sadd.s32 1, %s29
      %p35 = scmp.ge.s32.totalorder %s34, 2
      %s36 = scalar_select %p35, 0, %s34
      %s37 = sadd.s32 1, %s28
      %s38 = scalar_select %p35, %s37, %s28
      %p39 = scmp.ge.s32.totalorder %s38, 2
      %s40 = scalar_select %p39, 0, %s38
      %s41 = ssub.s32 %s28, %s40
      %p42 = scmp.eq.s32.totalorder %s41, 0
      %s44 = sadd.s32 %s43, 1
      %s45 = scalar_select %p42, %s43, %s44
      %p48 = pneg %p42
      %p49 = scmp.eq.s32.totalorder %s21, 3
      %p50 = por %p48, %p49
      %p51 = scmp.ne.s32.totalorder %s43, %s46
      %p52 = scmp.eq.s32.totalorder %s21, 0
      %p53 = por %p51, %p52
      %p54 = scmp.ne.s32.totalorder %s43, %s46
      %p55 = scmp.eq.s32.totalorder %s26, 3
      %p56 = por %p54, %p55
      %p57 = scmp.ne.s32.totalorder %s46, %s47
      %p58 = scmp.eq.s32.totalorder %s26, 0
      %p59 = por %p57, %p58
      %p60 = scmp.ne.s32.totalorder %s46, %s47
      %p61 = scmp.eq.s32.totalorder %s27, 3
      %p62 = por %p60, %p61
      %p64 = scmp.ne.s32.totalorder %s47, %s63
      %p65 = scmp.eq.s32.totalorder %s27, 0
      %p66 = por %p64, %p65
      %s68 = sadd.s32 %s67, 1
      %p71 = scmp.eq.s32.totalorder %s21, 3
      %p72 = scmp.ne.s32.totalorder %s67, %s69
      %p73 = scmp.eq.s32.totalorder %s21, 0
      %p74 = por %p72, %p73
      %p75 = scmp.ne.s32.totalorder %s67, %s69
      %p76 = scmp.eq.s32.totalorder %s26, 3
      %p77 = por %p75, %p76
      %p78 = scmp.ne.s32.totalorder %s69, %s70
      %p79 = scmp.eq.s32.totalorder %s26, 0
      %p80 = por %p78, %p79
      %p81 = scmp.ne.s32.totalorder %s69, %s70
      %p82 = scmp.eq.s32.totalorder %s27, 3
      %p83 = por %p81, %p82
      %p85 = scmp.ne.s32.totalorder %s70, %s84
      %p86 = scmp.eq.s32.totalorder %s27, 0
      %p87 = por %p85, %p86
      %s89 = sadd.s32 %s88, 1
      %p92 = scmp.eq.s32.totalorder %s21, 3
      %p93 = scmp.ne.s32.totalorder %s88, %s90
      %p94 = scmp.eq.s32.totalorder %s21, 0
      %p95 = por %p93, %p94
      %p96 = scmp.ne.s32.totalorder %s88, %s90
      %p97 = scmp.eq.s32.totalorder %s26, 3
      %p98 = por %p96, %p97
      %p99 = scmp.ne.s32.totalorder %s90, %s91
      %p100 = scmp.eq.s32.totalorder %s26, 0
      %p101 = por %p99, %p100
      %p102 = scmp.ne.s32.totalorder %s90, %s91
      %p103 = scmp.eq.s32.totalorder %s27, 3
      %p104 = por %p102, %p103
      %p106 = scmp.ne.s32.totalorder %s91, %s105
      %p107 = scmp.eq.s32.totalorder %s27, 0
      %p108 = por %p106, %p107
      %s110 = sadd.s32 %s109, 1
      %p113 = scmp.eq.s32.totalorder %s21, 3
      %p114 = scmp.ne.s32.totalorder %s109, %s111
      %p115 = scmp.eq.s32.totalorder %s21, 0
      %p116 = por %p114, %p115
      %p117 = scmp.ne.s32.totalorder %s109, %s111
      %p118 = scmp.eq.s32.totalorder %s26, 3
      %p119 = por %p117, %p118
      %p120 = scmp.ne.s32.totalorder %s111, %s112
      %p121 = scmp.eq.s32.totalorder %s26, 0
      %p122 = por %p120, %p121
      %p123 = scmp.ne.s32.totalorder %s111, %s112
      %p124 = scmp.eq.s32.totalorder %s27, 3
      %p125 = por %p123, %p124
      %p127 = scmp.ne.s32.totalorder %s112, %s126
      %p128 = scmp.eq.s32.totalorder %s27, 0
      %p129 = por %p127, %p128
      %s131 = sadd.s32 %s130, 1
      %p134 = scmp.eq.s32.totalorder %s21, 3
      %p135 = scmp.ne.s32.totalorder %s130, %s132
      %p136 = scmp.eq.s32.totalorder %s21, 0
      %p137 = por %p135, %p136
      %p138 = scmp.ne.s32.totalorder %s130, %s132
      %p139 = scmp.eq.s32.totalorder %s26, 3
      %p140 = por %p138, %p139
      %p141 = scmp.ne.s32.totalorder %s132, %s133
      %p142 = scmp.eq.s32.totalorder %s26, 0
      %p143 = por %p141, %p142
      %p144 = scmp.ne.s32.totalorder %s132, %s133
      %p145 = scmp.eq.s32.totalorder %s27, 3
      %p146 = por %p144, %p145
      %p148 = scmp.ne.s32.totalorder %s133, %s147
      %p149 = scmp.eq.s32.totalorder %s27, 0
      %p150 = por %p148, %p149
      %s152 = sadd.s32 %s151, 1
      %p155 = scmp.eq.s32.totalorder %s21, 3
      %p156 = scmp.ne.s32.totalorder %s151, %s153
      %p157 = scmp.eq.s32.totalorder %s21, 0
      %p158 = por %p156, %p157
      %p159 = scmp.ne.s32.totalorder %s151, %s153
      %p160 = scmp.eq.s32.totalorder %s26, 3
      %p161 = por %p159, %p160
      %p162 = scmp.ne.s32.totalorder %s153, %s154
      %p163 = scmp.eq.s32.totalorder %s26, 0
      %p164 = por %p162, %p163
      %p165 = scmp.ne.s32.totalorder %s153, %s154
      %p166 = scmp.eq.s32.totalorder %s27, 3
      %p167 = por %p165, %p166
      %p169 = scmp.ne.s32.totalorder %s154, %s168
      %p170 = scmp.eq.s32.totalorder %s27, 0
      %p171 = por %p169, %p170
      %s173 = sadd.s32 %s172, 1
      %p176 = scmp.eq.s32.totalorder %s21, 3
      %p177 = scmp.ne.s32.totalorder %s172, %s174
      %p178 = scmp.eq.s32.totalorder %s21, 0
      %p179 = por %p177, %p178
      %p180 = scmp.ne.s32.totalorder %s172, %s174
      %p181 = scmp.eq.s32.totalorder %s26, 3
      %p182 = por %p180, %p181
      %p183 = scmp.ne.s32.totalorder %s174, %s175
      %p184 = scmp.eq.s32.totalorder %s26, 0
      %p185 = por %p183, %p184
      %p186 = scmp.ne.s32.totalorder %s174, %s175
      %p187 = scmp.eq.s32.totalorder %s27, 3
      %p188 = por %p186, %p187
      %p190 = scmp.ne.s32.totalorder %s175, %s189
      %p191 = scmp.eq.s32.totalorder %s27, 0
      %p192 = por %p190, %p191
      %s193 = ssub.s32 %s28, %s40
      %s194 = ssub.s32 %s29, %s36
      %s195 = sor.u32 %s193, %s194
      %p196 = scmp.eq.s32.totalorder %s195, 0
      %s198 = sadd.s32 %s197, 1
      %s199 = scalar_select %p196, %s197, %s198
      %p202 = pneg %p196
      %p203 = scmp.eq.s32.totalorder %s21, 3
      %p204 = por %p202, %p203
      %p205 = scmp.ne.s32.totalorder %s197, %s200
      %p206 = scmp.eq.s32.totalorder %s21, 0
      %p207 = por %p205, %p206
      %p208 = scmp.ne.s32.totalorder %s197, %s200
      %p209 = scmp.eq.s32.totalorder %s26, 3
      %p210 = por %p208, %p209
      %p211 = scmp.ne.s32.totalorder %s200, %s201
      %p212 = scmp.eq.s32.totalorder %s26, 0
      %p213 = por %p211, %p212
      %p214 = scmp.ne.s32.totalorder %s200, %s201
      %p215 = scmp.eq.s32.totalorder %s27, 3
      %p216 = por %p214, %p215
      %p218 = scmp.ne.s32.totalorder %s201, %s217
      %p219 = scmp.eq.s32.totalorder %s27, 0
      %p220 = por %p218, %p219
      %p221 = scmp.le.s32.totalorder 1, %s21
      %p222 = scmp.lt.s32.totalorder %s21, 5
      %p223 = pnand %p221, %p222
      %p224 = pneg %p223
      // Predicated region
      $region9: #{tpu_custom_call.1} parent=5 // pred_check
        _
      $region10: #{tpu_custom_call.1} parent=5 // pred_check_branch
        %226 = sbr.rel (%p223) target = $region12
      $region11: #{tpu_custom_call.1} parent=5 // pred_region
        %s227 = ssub.s32 %s21, 1
        // Predicated region
        $region13: #{tpu_custom_call.1} parent=11 // pred_check
          %p228 = pneg %p80
        $region14: #{tpu_custom_call.1} parent=11 // pred_check_branch
          %230 = sbr.rel (%p228) target = $region16
        $region15: #{tpu_custom_call.1} parent=11 // pred_region
          %s232 = ssub.s32 1024, 1024
          %233 = vsyncadd [#allocation6], %s232
          %s234 = sshll.u32 [#allocation5], 4
          %s235 = int_to_ptr.vmem [resolvable:$true] %s234
          %240 = dma.hbm_to_vmem [thread:$0]  %s1, 1024, %s235, [#allocation6], 64, 64, 4
        $region16: #{tpu_custom_call.1} parent=11 // pred_fallthru
          _
        // Predicated region
        $region17: #{tpu_custom_call.1} parent=11 // pred_check
          %p241 = pneg %p101
        $region18: #{tpu_custom_call.1} parent=11 // pred_check_branch
          %243 = sbr.rel (%p241) target = $region20
        $region19: #{tpu_custom_call.1} parent=11 // pred_region
          _
        $region20: #{tpu_custom_call.1} parent=11 // pred_fallthru
          _
        // Predicated region
        $region21: #{tpu_custom_call.1} parent=11 // pred_check
          %p244 = pneg %p122
        $region22: #{tpu_custom_call.1} parent=11 // pred_check_branch
          %246 = sbr.rel (%p244) target = $region24
        $region23: #{tpu_custom_call.1} parent=11 // pred_region
          %s248 = ssub.s32 9216, 9216
          %249 = vsyncadd [#allocation6], %s248
          %s250 = sshll.u32 [#allocation7], 4
          %s251 = int_to_ptr.vmem [resolvable:$true] %s250
          %256 = dma.hbm_to_vmem [thread:$0]  %s3, 9216, %s251, [#allocation6], 64, 64, 4
        $region24: #{tpu_custom_call.1} parent=11 // pred_fallthru
          _
        // Predicated region
        $region25: #{tpu_custom_call.1} parent=11 // pred_check
          %p257 = pneg %p143
        $region26: #{tpu_custom_call.1} parent=11 // pred_check_branch
          %259 = sbr.rel (%p257) target = $region28
        $region27: #{tpu_custom_call.1} parent=11 // pred_region
          _
        $region28: #{tpu_custom_call.1} parent=11 // pred_fallthru
          _
        // Predicated region
        $region29: #{tpu_custom_call.1} parent=11 // pred_check
          %p260 = pneg %p164
        $region30: #{tpu_custom_call.1} parent=11 // pred_check_branch
          %262 = sbr.rel (%p260) target = $region32
        $region31: #{tpu_custom_call.1} parent=11 // pred_region
          %s264 = ssub.s32 1024, 1024
          %265 = vsyncadd [#allocation9], %s264
          %s266 = sshll.u32 [#allocation8], 4
          %s267 = int_to_ptr.vmem [resolvable:$true] %s266
          %272 = dma.hbm_to_vmem [thread:$0]  %s5, 1024, %s267, [#allocation9], 64, 64, 4
        $region32: #{tpu_custom_call.1} parent=11 // pred_fallthru
          _
        // Predicated region
        $region33: #{tpu_custom_call.1} parent=11 // pred_check
          %p273 = pneg %p185
        $region34: #{tpu_custom_call.1} parent=11 // pred_check_branch
          %275 = sbr.rel (%p273) target = $region36
        $region35: #{tpu_custom_call.1} parent=11 // pred_region
          _
        $region36: #{tpu_custom_call.1} parent=11 // pred_fallthru
          _
      $region12: #{tpu_custom_call.1} parent=5 // pred_fallthru
        _
      %p276 = scmp.lt.s32.totalorder %s21, 4
      // Predicated region
      $region37: #{tpu_custom_call.1} parent=5 // pred_check
        %p277 = pneg %p276
      $region38: #{tpu_custom_call.1} parent=5 // pred_check_branch
        %279 = sbr.rel (%p277) target = $region40
      $region39: #{tpu_custom_call.1} parent=5 // pred_region
        // Predicated region
        $region41: #{tpu_custom_call.1} parent=39 // pred_check
          %p280 = pneg %p53
        $region42: #{tpu_custom_call.1} parent=39 // pred_check_branch
          %282 = sbr.rel (%p280) target = $region44
        $region43: #{tpu_custom_call.1} parent=39 // pred_region
          %s283 = sand.u32 %s43, 1
          %s284 = scalar_lea.sflag [#allocation3], %s283
          %s285 = sand.u32 %s43, 1
          %s286 = smul.addr %s285, 288
          %s287 = scalar_lea.vmem [#allocation2], %s286
          %s289 = ssub.s32 4608, 4608
          %290 = vsyncadd %s284, %s289
          %s291 = smul.addr %s28, 72
          %s292 = smul.addr %s291, 64
          %s293 = scalar_lea.hbm %s0, %s292
          %s294 = sshll.u32 %s287, 4
          %s295 = int_to_ptr.vmem [resolvable:$true] %s294
          %300 = dma.hbm_to_vmem [thread:$0]  %s293, 4608, %s295, %s284, 64, 64, 4
        $region44: #{tpu_custom_call.1} parent=39 // pred_fallthru
          _
      $region40: #{tpu_custom_call.1} parent=5 // pred_fallthru
        _
      %p301 = scmp.le.s32.totalorder 1, %s21
      %p302 = scmp.lt.s32.totalorder %s21, 5
      %p303 = pnand %p301, %p302
      %p304 = pneg %p303
      // Predicated region
      $region45: #{tpu_custom_call.1} parent=5 // pred_check
        _
      $region46: #{tpu_custom_call.1} parent=5 // pred_check_branch
        %306 = sbr.rel (%p303) target = $region48
      $region47: #{tpu_custom_call.1} parent=5 // pred_region
        %s307 = ssub.s32 %s21, 1
        %s308 = sand.u32 %s46, 1
        %s309 = scalar_lea.sflag [#allocation3], %s308
        %s310 = sand.u32 %s46, 1
        %s311 = smul.addr %s310, 288
        %s312 = scalar_lea.vmem [#allocation2], %s311
        // Predicated region
        $region49: #{tpu_custom_call.1} parent=47 // pred_check
          %p313 = pneg %p59
        $region50: #{tpu_custom_call.1} parent=47 // pred_check_branch
          %315 = sbr.rel (%p313) target = $region52
        $region51: #{tpu_custom_call.1} parent=47 // pred_region
          %316 = dma.done %s309, 4608
        $region52: #{tpu_custom_call.1} parent=47 // pred_fallthru
          _
        // Predicated region
        $region53: #{tpu_custom_call.1} parent=47 // pred_check
          %p317 = pneg %p80
        $region54: #{tpu_custom_call.1} parent=47 // pred_check_branch
          %319 = sbr.rel (%p317) target = $region56
        $region55: #{tpu_custom_call.1} parent=47 // pred_region
          %320 = dma.done [#allocation6], 1024
        $region56: #{tpu_custom_call.1} parent=47 // pred_fallthru
          _
        // Predicated region
        $region57: #{tpu_custom_call.1} parent=47 // pred_check
          %p321 = pneg %p122
        $region58: #{tpu_custom_call.1} parent=47 // pred_check_branch
          %323 = sbr.rel (%p321) target = $region60
        $region59: #{tpu_custom_call.1} parent=47 // pred_region
          %324 = dma.done [#allocation6], 9216
        $region60: #{tpu_custom_call.1} parent=47 // pred_fallthru
          _
        // Predicated region
        $region61: #{tpu_custom_call.1} parent=47 // pred_check
          %p325 = pneg %p164
        $region62: #{tpu_custom_call.1} parent=47 // pred_check_branch
          %327 = sbr.rel (%p325) target = $region64
        $region63: #{tpu_custom_call.1} parent=47 // pred_region
          %328 = dma.done [#allocation9], 1024
        $region64: #{tpu_custom_call.1} parent=47 // pred_fallthru
          _
        %s329 = sand.u32 %s46, 1
        %s330 = scalar_lea.sflag [#allocation3], %s329
        %s331 = sand.u32 %s46, 1
        %s332 = smul.addr %s331, 288
        %s333 = scalar_lea.vmem [#allocation2], %s332
        %p334 = pneg %p59
        %p335 = pneg %p56
        %p336 = pneg %p80
        %p337 = pneg %p77
        %p338 = pneg %p101
        %p339 = pneg %p98
        %p340 = pneg %p122
        %p341 = pneg %p119
        %p342 = pneg %p143
        %p343 = pneg %p140
        %p344 = pneg %p164
        %p345 = pneg %p161
        %p346 = pneg %p185
        %p347 = pneg %p182
        %p348 = pneg %p213
        %p349 = pneg %p210
        %s350 = sand.u32 %s200, 1
        %s351 = scalar_lea.sflag [#allocation4], %s350
        %s352 = sand.u32 %s200, 1
        %s353 = smul.addr %s352, 128
        %s354 = scalar_lea.vmem [#allocation10], %s353
        %s355 = smul.u32 8, %s31
        %s357 = smul.u32 %s31, 8
        %s358 = smul.u32 %s357, 4
        %s359 = smul.addr %s358, 4
        %s360 = scalar_lea.vmem %s312, %s359 [#allocation2]
        %v361 = vld [vmem:[%s360] sm:$0xf]
        %v362 = vld [vmem:[%s360 + $0x4] sm:$0xf]
        %v363 = vld [vmem:[%s360 + $0x8] sm:$0xf]
        %v364 = vld [vmem:[%s360 + $0xc] sm:$0xf]
        %v365 = vld [vmem:[%s360 + $0x10] sm:$0xf]
        %v366 = vld [vmem:[%s360 + $0x14] sm:$0xf]
        %v367 = vld [vmem:[%s360 + $0x18] sm:$0xf]
        %v368 = vld [vmem:[%s360 + $0x1c] sm:$0xf]
        %v369 = vld [vmem:[%s360 + $0x20] sm:$0xf]
        %v370 = vld [vmem:[%s360 + $0x24] sm:$0xf]
        %v371 = vld [vmem:[%s360 + $0x28] sm:$0xf]
        %v372 = vld [vmem:[%s360 + $0x2c] sm:$0xf]
        %v373 = vld [vmem:[%s360 + $0x30] sm:$0xf]
        %v374 = vld [vmem:[%s360 + $0x34] sm:$0xf]
        %v375 = vld [vmem:[%s360 + $0x38] sm:$0xf]
        %v376 = vld [vmem:[%s360 + $0x3c] sm:$0xf]
        %v377 = vld [vmem:[%s360 + $0x40] sm:$0xf]
        %v378 = vld [vmem:[%s360 + $0x44] sm:$0xf]
        %v379 = vld [vmem:[%s360 + $0x48] sm:$0xf]
        %v380 = vld [vmem:[%s360 + $0x4c] sm:$0xf]
        %v381 = vld [vmem:[%s360 + $0x50] sm:$0xf]
        %v382 = vld [vmem:[%s360 + $0x54] sm:$0xf]
        %v383 = vld [vmem:[%s360 + $0x58] sm:$0xf]
        %v384 = vld [vmem:[%s360 + $0x5c] sm:$0xf]
        %v385 = vld [vmem:[%s360 + $0x60] sm:$0xf]
        %v386 = vld [vmem:[%s360 + $0x64] sm:$0xf]
        %v387 = vld [vmem:[%s360 + $0x68] sm:$0xf]
        %v388 = vld [vmem:[%s360 + $0x6c] sm:$0xf]
        %v389 = vld [vmem:[%s360 + $0x70] sm:$0xf]
        %v390 = vld [vmem:[%s360 + $0x74] sm:$0xf]
        %v391 = vld [vmem:[%s360 + $0x78] sm:$0xf]
        %v392 = vld [vmem:[%s360 + $0x7c] sm:$0xf]
        %v393 = vld [vmem:[%s360 + $0x80] sm:$0xf]
        %v394 = vld [vmem:[%s360 + $0x84] sm:$0xf]
        %v395 = vld [vmem:[%s360 + $0x88] sm:$0xf]
        %v396 = vld [vmem:[%s360 + $0x8c] sm:$0xf]
        %v397 = vld [vmem:[%s360 + $0x90] sm:$0xf]
        %v398 = vld [vmem:[%s360 + $0x94] sm:$0xf]
        %v399 = vld [vmem:[%s360 + $0x98] sm:$0xf]
        %v400 = vld [vmem:[%s360 + $0x9c] sm:$0xf]
        %v401 = vld [vmem:[#allocation5] sm:$0xf]
        %v402 = vld [vmem:[#allocation5 + $0x4] sm:$0xf]
        %v403 = vld [vmem:[#allocation5 + $0x8] sm:$0xf]
        %v404 = vld [vmem:[#allocation5 + $0xc] sm:$0xf]
        %v405 = vld [vmem:[#allocation5 + $0x10] sm:$0xf]
        %v406 = vld [vmem:[#allocation5 + $0x14] sm:$0xf]
        %v407 = vld [vmem:[#allocation5 + $0x18] sm:$0xf]
        %v408 = vld [vmem:[#allocation5 + $0x1c] sm:$0xf]
        %v409 = vld [vmem:[#allocation5 + $0x20] sm:$0xf]
        %v410 = vld [vmem:[#allocation5 + $0x24] sm:$0xf]
        %v411 = vld [vmem:[#allocation5 + $0x28] sm:$0xf]
        %v412 = vld [vmem:[#allocation5 + $0x2c] sm:$0xf]
        %v413 = vld [vmem:[#allocation5 + $0x30] sm:$0xf]
        %v414 = vld [vmem:[#allocation5 + $0x34] sm:$0xf]
        %v415 = vld [vmem:[#allocation5 + $0x38] sm:$0xf]
        %v416 = vld [vmem:[#allocation5 + $0x3c] sm:$0xf]
        %v417 = vld [vmem:[%s2] sm:$0x1]
        %v419 = vlaneseq
        %v420 = vshrl.u32 %v419, 7
        %v421 = vsub.s32 0, %v420
        %v422 = vrot.slane %v417, %v421
        %v464 = vunpack.c.l.b16 %v361
        %v465 = vunpack.c.l.b16 %v362
        %v466 = vunpack.c.l.b16 %v363
        %v467 = vunpack.c.l.b16 %v364
        %v468 = vunpack.c.l.b16 %v365
        %v469 = vunpack.c.l.b16 %v366
        %v470 = vunpack.c.l.b16 %v367
        %v471 = vunpack.c.l.b16 %v368
        %v472 = vunpack.c.l.b16 %v369
        %v473 = vunpack.c.l.b16 %v370
        %v474 = vunpack.c.l.b16 %v371
        %v475 = vunpack.c.l.b16 %v372
        %v476 = vunpack.c.l.b16 %v373
        %v477 = vunpack.c.l.b16 %v374
        %v478 = vunpack.c.l.b16 %v375
        %v479 = vunpack.c.l.b16 %v376
        %v480 = vunpack.c.l.b16 %v377
        %v481 = vunpack.c.l.b16 %v378
        %v482 = vunpack.c.l.b16 %v379
        %v483 = vunpack.c.l.b16 %v380
        %v484 = vunpack.c.l.b16 %v381
        %v485 = vunpack.c.l.b16 %v382
        %v486 = vunpack.c.l.b16 %v383
        %v487 = vunpack.c.l.b16 %v384
        %v488 = vunpack.c.l.b16 %v385
        %v489 = vunpack.c.l.b16 %v386
        %v490 = vunpack.c.l.b16 %v387
        %v491 = vunpack.c.l.b16 %v388
        %v492 = vunpack.c.l.b16 %v389
        %v493 = vunpack.c.l.b16 %v390
        %v494 = vunpack.c.l.b16 %v391
        %v495 = vunpack.c.l.b16 %v392
        %v496 = vunpack.c.l.b16 %v393
        %v497 = vunpack.c.l.b16 %v394
        %v498 = vunpack.c.l.b16 %v395
        %v499 = vunpack.c.l.b16 %v396
        %v500 = vunpack.c.l.b16 %v397
        %v501 = vunpack.c.l.b16 %v398
        %v502 = vunpack.c.l.b16 %v399
        %v503 = vunpack.c.l.b16 %v400
        %v504 = vpack.c.b16 %v465, %v464
        %v505 = vpack.c.b16 %v467, %v466
        %v506 = vpack.c.b16 %v469, %v468
        %v507 = vpack.c.b16 %v471, %v470
        %v508 = vpack.c.b16 %v473, %v472
        %v509 = vpack.c.b16 %v475, %v474
        %v510 = vpack.c.b16 %v477, %v476
        %v511 = vpack.c.b16 %v479, %v478
        %v512 = vpack.c.b16 %v481, %v480
        %v513 = vpack.c.b16 %v483, %v482
        %v514 = vpack.c.b16 %v485, %v484
        %v515 = vpack.c.b16 %v487, %v486
        %v516 = vpack.c.b16 %v489, %v488
        %v517 = vpack.c.b16 %v491, %v490
        %v518 = vpack.c.b16 %v493, %v492
        %v519 = vpack.c.b16 %v495, %v494
        %v520 = vpack.c.b16 %v497, %v496
        %v521 = vpack.c.b16 %v499, %v498
        %v522 = vpack.c.b16 %v501, %v500
        %v523 = vpack.c.b16 %v503, %v502
        %v560 = vunpack.c.l.b16 %v401
        %v561 = vunpack.c.l.b16 %v402
        %v562 = vunpack.c.l.b16 %v403
        %v563 = vunpack.c.l.b16 %v404
        %v564 = vunpack.c.l.b16 %v405
        %v565 = vunpack.c.l.b16 %v406
        %v566 = vunpack.c.l.b16 %v407
        %v567 = vunpack.c.l.b16 %v408
        %v568 = vunpack.c.l.b16 %v409
        %v569 = vunpack.c.l.b16 %v410
        %v570 = vunpack.c.l.b16 %v411
        %v571 = vunpack.c.l.b16 %v412
        %v572 = vunpack.c.l.b16 %v413
        %v573 = vunpack.c.l.b16 %v414
        %v574 = vunpack.c.l.b16 %v415
        %v575 = vunpack.c.l.b16 %v416
        %v576 = vpack.c.b16 %v561, %v560
        %v577 = vpack.c.b16 %v563, %v562
        %v578 = vpack.c.b16 %v565, %v564
        %v579 = vpack.c.b16 %v567, %v566
        %v580 = vpack.c.b16 %v569, %v568
        %v581 = vpack.c.b16 %v571, %v570
        %v582 = vpack.c.b16 %v573, %v572
        %v583 = vpack.c.b16 %v575, %v574
        %592 = vmatprep.subr.bf16.mxu0 0
        %593 = vmatpush1.bf16.msra.mxu0 %v576
        %594 = vmatprep.subr.bf16.mxu0 0
        %595 = vmatpush1.bf16.msra.mxu0 %v577
        %596 = vmatprep.subr.bf16.mxu0 0
        %597 = vmatpush1.bf16.msra.mxu0 %v578
        %598 = vmatprep.subr.bf16.mxu0 0
        %599 = vmatpush1.bf16.msra.mxu0 %v579
        %600 = vmatprep.subr.bf16.mxu0 0
        %601 = vmatpush1.bf16.msra.mxu0 %v580
        %602 = vmatprep.subr.bf16.mxu0 0
        %603 = vmatpush1.bf16.msra.mxu0 %v581
        %604 = vmatprep.subr.bf16.mxu0 0
        %605 = vmatpush1.bf16.msra.mxu0 %v582
        %606 = vmatprep.subr.bf16.mxu0 0
        %607 = vmatpush1.bf16.msra.mxu0 %v583
        %608 = vmatprep.subr.bf16.mxu0 0
        %609 = vmatpush1.bf16.msra.mxu0 0
        %610 = vmatprep.subr.bf16.mxu0 0
        %611 = vmatpush1.bf16.msra.mxu0 0
        %612 = vmatprep.subr.bf16.mxu0 0
        %613 = vmatpush1.bf16.msra.mxu0 0
        %614 = vmatprep.subr.bf16.mxu0 0
        %615 = vmatpush1.bf16.msra.mxu0 0
        %616 = vmatprep.subr.bf16.mxu0 0
        %617 = vmatpush1.bf16.msra.mxu0 0
        %618 = vmatprep.subr.bf16.mxu0 0
        %619 = vmatpush1.bf16.msra.mxu0 0
        %620 = vmatprep.subr.bf16.mxu0 0
        %621 = vmatpush1.bf16.msra.mxu0 0
        %622 = vmatprep.subr.bf16.mxu0 0
        %623 = vmatpush1.bf16.msra.mxu0 0
        %624 = vmatprep.mubr.bf16.mxu0 0
        %625 = vmatmul.mubr.bf16.gmra.mrb[0].mxu0 %v504
        %v626 = vpop.f32.mrb[0].mxu0
        %v627 = vadd.f32 %v422, %v626
        %v628 = vpop.f32.mrb[0].mxu0
        %v629 = vpop.f32.mrb[0].mxu0
        %v630 = vadd.f32 %v422, %v629
        %v631 = vpop.f32.mrb[0].mxu0
        %632 = vmatprep.mubr.bf16.mxu0 0
        %633 = vmatmul.mubr.bf16.gmra.mrb[0].mxu0 %v505
        %v634 = vpop.f32.mrb[0].mxu0
        %v635 = vadd.f32 %v422, %v634
        %v636 = vpop.f32.mrb[0].mxu0
        %v637 = vpop.f32.mrb[0].mxu0
        %v638 = vadd.f32 %v422, %v637
        %v639 = vpop.f32.mrb[0].mxu0
        %640 = vmatprep.mubr.bf16.mxu0 0
        %641 = vmatmul.mubr.bf16.gmra.mrb[0].mxu0 %v506
        %v642 = vpop.f32.mrb[0].mxu0
        %v643 = vadd.f32 %v422, %v642
        %v644 = vpop.f32.mrb[0].mxu0
        %v645 = vpop.f32.mrb[0].mxu0
        %v646 = vadd.f32 %v422, %v645
        %v647 = vpop.f32.mrb[0].mxu0
        %648 = vmatprep.mubr.bf16.mxu0 0
        %649 = vmatmul.mubr.bf16.gmra.mrb[0].mxu0 %v507
        %v650 = vpop.f32.mrb[0].mxu0
        %v651 = vadd.f32 %v422, %v650
        %v652 = vpop.f32.mrb[0].mxu0
        %v653 = vpop.f32.mrb[0].mxu0
        %v654 = vadd.f32 %v422, %v653
        %v655 = vpop.f32.mrb[0].mxu0
        %656 = vmatprep.mubr.bf16.mxu0 0
        %657 = vmatmul.mubr.bf16.gmra.mrb[0].mxu0 %v508
        %v658 = vpop.f32.mrb[0].mxu0
        %v659 = vadd.f32 %v422, %v658
        %v660 = vpop.f32.mrb[0].mxu0
        %v661 = vpop.f32.mrb[0].mxu0
        %v662 = vadd.f32 %v422, %v661
        %v663 = vpop.f32.mrb[0].mxu0
        %664 = vmatprep.mubr.bf16.mxu0 0
        %665 = vmatmul.mubr.bf16.gmra.mrb[0].mxu0 %v509
        %v666 = vpop.f32.mrb[0].mxu0
        %v667 = vadd.f32 %v422, %v666
        %v668 = vpop.f32.mrb[0].mxu0
        %v669 = vpop.f32.mrb[0].mxu0
        %v670 = vadd.f32 %v422, %v669
        %v671 = vpop.f32.mrb[0].mxu0
        %672 = vmatprep.mubr.bf16.mxu0 0
        %673 = vmatmul.mubr.bf16.gmra.mrb[0].mxu0 %v510
        %v674 = vpop.f32.mrb[0].mxu0
        %v675 = vadd.f32 %v422, %v674
        %v676 = vpop.f32.mrb[0].mxu0
        %v677 = vpop.f32.mrb[0].mxu0
        %v678 = vadd.f32 %v422, %v677
        %v679 = vpop.f32.mrb[0].mxu0
        %680 = vmatprep.mubr.bf16.mxu0 0
        %681 = vmatmul.mubr.bf16.gmra.mrb[0].mxu0 %v511
        %v682 = vpop.f32.mrb[0].mxu0
        %v683 = vadd.f32 %v422, %v682
        %v684 = vpop.f32.mrb[0].mxu0
        %v685 = vpop.f32.mrb[0].mxu0
        %v686 = vadd.f32 %v422, %v685
        %v687 = vpop.f32.mrb[0].mxu0
        %688 = vmatprep.mubr.bf16.mxu0 0
        %689 = vmatmul.mubr.bf16.gmra.mrb[0].mxu0 %v512
        %v690 = vpop.f32.mrb[0].mxu0
        %v691 = vadd.f32 %v422, %v690
        %v692 = vpop.f32.mrb[0].mxu0
        %v693 = vpop.f32.mrb[0].mxu0
        %v694 = vadd.f32 %v422, %v693
        %v695 = vpop.f32.mrb[0].mxu0
        %696 = vmatprep.mubr.bf16.mxu0 0
        %697 = vmatmul.mubr.bf16.gmra.mrb[0].mxu0 %v513
        %v698 = vpop.f32.mrb[0].mxu0
        %v699 = vadd.f32 %v422, %v698
        %v700 = vpop.f32.mrb[0].mxu0
        %v701 = vpop.f32.mrb[0].mxu0
        %v702 = vadd.f32 %v422, %v701
        %v703 = vpop.f32.mrb[0].mxu0
        %704 = vmatprep.mubr.bf16.mxu0 0
        %705 = vmatmul.mubr.bf16.gmra.mrb[0].mxu0 %v514
        %v706 = vpop.f32.mrb[0].mxu0
        %v707 = vadd.f32 %v422, %v706
        %v708 = vpop.f32.mrb[0].mxu0
        %v709 = vpop.f32.mrb[0].mxu0
        %v710 = vadd.f32 %v422, %v709
        %v711 = vpop.f32.mrb[0].mxu0
        %712 = vmatprep.mubr.bf16.mxu0 0
        %713 = vmatmul.mubr.bf16.gmra.mrb[0].mxu0 %v515
        %v714 = vpop.f32.mrb[0].mxu0
        %v715 = vadd.f32 %v422, %v714
        %v716 = vpop.f32.mrb[0].mxu0
        %v717 = vpop.f32.mrb[0].mxu0
        %v718 = vadd.f32 %v422, %v717
        %v719 = vpop.f32.mrb[0].mxu0
        %720 = vmatprep.mubr.bf16.mxu0 0
        %721 = vmatmul.mubr.bf16.gmra.mrb[0].mxu0 %v516
        %v722 = vpop.f32.mrb[0].mxu0
        %v723 = vadd.f32 %v422, %v722
        %v724 = vpop.f32.mrb[0].mxu0
        %v725 = vpop.f32.mrb[0].mxu0
        %v726 = vadd.f32 %v422, %v725
        %v727 = vpop.f32.mrb[0].mxu0
        %728 = vmatprep.mubr.bf16.mxu0 0
        %729 = vmatmul.mubr.bf16.gmra.mrb[0].mxu0 %v517
        %v730 = vpop.f32.mrb[0].mxu0
        %v731 = vadd.f32 %v422, %v730
        %v732 = vpop.f32.mrb[0].mxu0
        %v733 = vpop.f32.mrb[0].mxu0
        %v734 = vadd.f32 %v422, %v733
        %v735 = vpop.f32.mrb[0].mxu0
        %736 = vmatprep.mubr.bf16.mxu0 0
        %737 = vmatmul.mubr.bf16.gmra.mrb[0].mxu0 %v518
        %v738 = vpop.f32.mrb[0].mxu0
        %v739 = vadd.f32 %v422, %v738
        %v740 = vpop.f32.mrb[0].mxu0
        %v741 = vpop.f32.mrb[0].mxu0
        %v742 = vadd.f32 %v422, %v741
        %v743 = vpop.f32.mrb[0].mxu0
        %744 = vmatprep.mubr.bf16.mxu0 0
        %745 = vmatmul.mubr.bf16.gmra.mrb[0].mxu0 %v519
        %v746 = vpop.f32.mrb[0].mxu0
        %v747 = vadd.f32 %v422, %v746
        %v748 = vpop.f32.mrb[0].mxu0
        %v749 = vpop.f32.mrb[0].mxu0
        %v750 = vadd.f32 %v422, %v749
        %v751 = vpop.f32.mrb[0].mxu0
        %752 = vmatprep.mubr.bf16.mxu0 0
        %753 = vmatmul.mubr.bf16.gmra.mrb[0].mxu0 %v520
        %v754 = vpop.f32.mrb[0].mxu0
        %v755 = vadd.f32 %v422, %v754
        %v756 = vpop.f32.mrb[0].mxu0
        %v757 = vpop.f32.mrb[0].mxu0
        %v758 = vadd.f32 %v422, %v757
        %v759 = vpop.f32.mrb[0].mxu0
        %760 = vmatprep.mubr.bf16.mxu0 0
        %761 = vmatmul.mubr.bf16.gmra.mrb[0].mxu0 %v521
        %v762 = vpop.f32.mrb[0].mxu0
        %v763 = vadd.f32 %v422, %v762
        %v764 = vpop.f32.mrb[0].mxu0
        %v765 = vpop.f32.mrb[0].mxu0
        %v766 = vadd.f32 %v422, %v765
        %v767 = vpop.f32.mrb[0].mxu0
        %768 = vmatprep.mubr.bf16.mxu0 0
        %769 = vmatmul.mubr.bf16.gmra.mrb[0].mxu0 %v522
        %v770 = vpop.f32.mrb[0].mxu0
        %v771 = vadd.f32 %v422, %v770
        %v772 = vpop.f32.mrb[0].mxu0
        %v773 = vpop.f32.mrb[0].mxu0
        %v774 = vadd.f32 %v422, %v773
        %v775 = vpop.f32.mrb[0].mxu0
        %776 = vmatprep.mubr.bf16.mxu0 0
        %777 = vmatmul.mubr.bf16.gmra.mrb[0].mxu0 %v523
        %v778 = vpop.f32.mrb[0].mxu0
        %v779 = vadd.f32 %v422, %v778
        %v780 = vpop.f32.mrb[0].mxu0
        %v781 = vpop.f32.mrb[0].mxu0
        %v782 = vadd.f32 %v422, %v781
        %v783 = vpop.f32.mrb[0].mxu0
        %784 = vdwg.mxu0
        %v785 = vmax.f32 %v627, 0.0
        %v786 = vmax.f32 %v630, 0.0
        %v787 = vmax.f32 %v635, 0.0
        %v788 = vmax.f32 %v638, 0.0
        %v789 = vmax.f32 %v643, 0.0
        %v790 = vmax.f32 %v646, 0.0
        %v791 = vmax.f32 %v651, 0.0
        %v792 = vmax.f32 %v654, 0.0
        %v793 = vmax.f32 %v659, 0.0
        %v794 = vmax.f32 %v662, 0.0
        %v795 = vmax.f32 %v667, 0.0
        %v796 = vmax.f32 %v670, 0.0
        %v797 = vmax.f32 %v675, 0.0
        %v798 = vmax.f32 %v678, 0.0
        %v799 = vmax.f32 %v683, 0.0
        %v800 = vmax.f32 %v686, 0.0
        %v801 = vmax.f32 %v691, 0.0
        %v802 = vmax.f32 %v694, 0.0
        %v803 = vmax.f32 %v699, 0.0
        %v804 = vmax.f32 %v702, 0.0
        %v805 = vmax.f32 %v707, 0.0
        %v806 = vmax.f32 %v710, 0.0
        %v807 = vmax.f32 %v715, 0.0
        %v808 = vmax.f32 %v718, 0.0
        %v809 = vmax.f32 %v723, 0.0
        %v810 = vmax.f32 %v726, 0.0
        %v811 = vmax.f32 %v731, 0.0
        %v812 = vmax.f32 %v734, 0.0
        %v813 = vmax.f32 %v739, 0.0
        %v814 = vmax.f32 %v742, 0.0
        %v815 = vmax.f32 %v747, 0.0
        %v816 = vmax.f32 %v750, 0.0
        %v817 = vmax.f32 %v755, 0.0
        %v818 = vmax.f32 %v758, 0.0
        %v819 = vmax.f32 %v763, 0.0
        %v820 = vmax.f32 %v766, 0.0
        %v821 = vmax.f32 %v771, 0.0
        %v822 = vmax.f32 %v774, 0.0
        %v823 = vmax.f32 %v779, 0.0
        %v824 = vmax.f32 %v782, 0.0
        %v825 = vstv %s357
        %v826 = vadd.s32 %v825, 1
        %v827 = vadd.s32 %v825, 2
        %v828 = vadd.s32 %v825, 3
        %v829 = vadd.s32 %v825, 4
        %v830 = vadd.s32 %v825, 5
        %v831 = vadd.s32 %v825, 6
        %v832 = vadd.s32 %v825, 7
        %v833 = vadd.s32 %v825, 8
        %v834 = vadd.s32 %v825, 9
        %v835 = vlaneseq
        %v836 = vshrl.u32 %v835, 7
        %v837 = vadd.s32 %v836, 8
        %v838 = vadd.s32 %v836, 16
        %v839 = vadd.s32 %v836, 24
        %vm840 = vcmp.ge.s32.totalorder %v825, 1
        %vm841 = vcmp.ge.s32.totalorder %v826, 1
        %vm842 = vcmp.ge.s32.totalorder %v827, 1
        %vm843 = vcmp.ge.s32.totalorder %v828, 1
        %vm844 = vcmp.ge.s32.totalorder %v829, 1
        %vm845 = vcmp.ge.s32.totalorder %v830, 1
        %vm846 = vcmp.ge.s32.totalorder %v831, 1
        %vm847 = vcmp.ge.s32.totalorder %v832, 1
        %vm848 = vcmp.ge.s32.totalorder %v833, 1
        %vm849 = vcmp.ge.s32.totalorder %v834, 1
        %vm850 = vcmp.le.s32.totalorder %v825, 16
        %vm851 = vcmp.le.s32.totalorder %v826, 16
        %vm852 = vcmp.le.s32.totalorder %v827, 16
        %vm853 = vcmp.le.s32.totalorder %v828, 16
        %vm854 = vcmp.le.s32.totalorder %v829, 16
        %vm855 = vcmp.le.s32.totalorder %v830, 16
        %vm856 = vcmp.le.s32.totalorder %v831, 16
        %vm857 = vcmp.le.s32.totalorder %v832, 16
        %vm858 = vcmp.le.s32.totalorder %v833, 16
        %vm859 = vcmp.le.s32.totalorder %v834, 16
        %vm860 = vmand %vm840, %vm850
        %vm861 = vmand %vm841, %vm851
        %vm862 = vmand %vm842, %vm852
        %vm863 = vmand %vm843, %vm853
        %vm864 = vmand %vm844, %vm854
        %vm865 = vmand %vm845, %vm855
        %vm866 = vmand %vm846, %vm856
        %vm867 = vmand %vm847, %vm857
        %vm868 = vmand %vm848, %vm858
        %vm869 = vmand %vm849, %vm859
        %vm870 = vcmp.ge.s32.totalorder %v836, 1
        %vm871 = vcmp.ge.s32.totalorder %v837, 1
        %vm872 = vcmp.ge.s32.totalorder %v838, 1
        %vm873 = vcmp.ge.s32.totalorder %v839, 1
        %vm874 = vmand %vm860, %vm870
        %vm875 = vmand %vm860, %vm871
        %vm876 = vmand %vm860, %vm872
        %vm877 = vmand %vm860, %vm873
        %vm878 = vmand %vm861, %vm870
        %vm879 = vmand %vm861, %vm871
        %vm880 = vmand %vm861, %vm872
        %vm881 = vmand %vm861, %vm873
        %vm882 = vmand %vm862, %vm870
        %vm883 = vmand %vm862, %vm871
        %vm884 = vmand %vm862, %vm872
        %vm885 = vmand %vm862, %vm873
        %vm886 = vmand %vm863, %vm870
        %vm887 = vmand %vm863, %vm871
        %vm888 = vmand %vm863, %vm872
        %vm889 = vmand %vm863, %vm873
        %vm890 = vmand %vm864, %vm870
        %vm891 = vmand %vm864, %vm871
        %vm892 = vmand %vm864, %vm872
        %vm893 = vmand %vm864, %vm873
        %vm894 = vmand %vm865, %vm870
        %vm895 = vmand %vm865, %vm871
        %vm896 = vmand %vm865, %vm872
        %vm897 = vmand %vm865, %vm873
        %vm898 = vmand %vm866, %vm870
        %vm899 = vmand %vm866, %vm871
        %vm900 = vmand %vm866, %vm872
        %vm901 = vmand %vm866, %vm873
        %vm902 = vmand %vm867, %vm870
        %vm903 = vmand %vm867, %vm871
        %vm904 = vmand %vm867, %vm872
        %vm905 = vmand %vm867, %vm873
        %vm906 = vmand %vm868, %vm870
        %vm907 = vmand %vm868, %vm871
        %vm908 = vmand %vm868, %vm872
        %vm909 = vmand %vm868, %vm873
        %vm910 = vmand %vm869, %vm870
        %vm911 = vmand %vm869, %vm871
        %vm912 = vmand %vm869, %vm872
        %vm913 = vmand %vm869, %vm873
        %vm914 = vcmp.le.s32.totalorder %v836, 16
        %vm915 = vcmp.le.s32.totalorder %v837, 16
        %vm916 = vcmp.le.s32.totalorder %v838, 16
        %vm917 = vcmp.le.s32.totalorder %v839, 16
        %vm918 = vmand %vm874, %vm914
        %vm919 = vmand %vm875, %vm915
        %vm920 = vmand %vm876, %vm916
        %vm921 = vmand %vm877, %vm917
        %vm922 = vmand %vm878, %vm914
        %vm923 = vmand %vm879, %vm915
        %vm924 = vmand %vm880, %vm916
        %vm925 = vmand %vm881, %vm917
        %vm926 = vmand %vm882, %vm914
        %vm927 = vmand %vm883, %vm915
        %vm928 = vmand %vm884, %vm916
        %vm929 = vmand %vm885, %vm917
        %vm930 = vmand %vm886, %vm914
        %vm931 = vmand %vm887, %vm915
        %vm932 = vmand %vm888, %vm916
        %vm933 = vmand %vm889, %vm917
        %vm934 = vmand %vm890, %vm914
        %vm935 = vmand %vm891, %vm915
        %vm936 = vmand %vm892, %vm916
        %vm937 = vmand %vm893, %vm917
        %vm938 = vmand %vm894, %vm914
        %vm939 = vmand %vm895, %vm915
        %vm940 = vmand %vm896, %vm916
        %vm941 = vmand %vm897, %vm917
        %vm942 = vmand %vm898, %vm914
        %vm943 = vmand %vm899, %vm915
        %vm944 = vmand %vm900, %vm916
        %vm945 = vmand %vm901, %vm917
        %vm946 = vmand %vm902, %vm914
        %vm947 = vmand %vm903, %vm915
        %vm948 = vmand %vm904, %vm916
        %vm949 = vmand %vm905, %vm917
        %vm950 = vmand %vm906, %vm914
        %vm951 = vmand %vm907, %vm915
        %vm952 = vmand %vm908, %vm916
        %vm953 = vmand %vm909, %vm917
        %vm954 = vmand %vm910, %vm914
        %vm955 = vmand %vm911, %vm915
        %vm956 = vmand %vm912, %vm916
        %vm957 = vmand %vm913, %vm917
        %v958 = vsel %vm918, 1, 0
        %v959 = vsel %vm919, 1, 0
        %v960 = vsel %vm920, 1, 0
        %v961 = vsel %vm921, 1, 0
        %v962 = vsel %vm922, 1, 0
        %v963 = vsel %vm923, 1, 0
        %v964 = vsel %vm924, 1, 0
        %v965 = vsel %vm925, 1, 0
        %v966 = vsel %vm926, 1, 0
        %v967 = vsel %vm927, 1, 0
        %v968 = vsel %vm928, 1, 0
        %v969 = vsel %vm929, 1, 0
        %v970 = vsel %vm930, 1, 0
        %v971 = vsel %vm931, 1, 0
        %v972 = vsel %vm932, 1, 0
        %v973 = vsel %vm933, 1, 0
        %v974 = vsel %vm934, 1, 0
        %v975 = vsel %vm935, 1, 0
        %v976 = vsel %vm936, 1, 0
        %v977 = vsel %vm937, 1, 0
        %v978 = vsel %vm938, 1, 0
        %v979 = vsel %vm939, 1, 0
        %v980 = vsel %vm940, 1, 0
        %v981 = vsel %vm941, 1, 0
        %v982 = vsel %vm942, 1, 0
        %v983 = vsel %vm943, 1, 0
        %v984 = vsel %vm944, 1, 0
        %v985 = vsel %vm945, 1, 0
        %v986 = vsel %vm946, 1, 0
        %v987 = vsel %vm947, 1, 0
        %v988 = vsel %vm948, 1, 0
        %v989 = vsel %vm949, 1, 0
        %v990 = vsel %vm950, 1, 0
        %v991 = vsel %vm951, 1, 0
        %v992 = vsel %vm952, 1, 0
        %v993 = vsel %vm953, 1, 0
        %v994 = vsel %vm954, 1, 0
        %v995 = vsel %vm955, 1, 0
        %v996 = vsel %vm956, 1, 0
        %v997 = vsel %vm957, 1, 0
        %vm998 = vcmp.eq.s32.totalorder %v958, 1
        %vm999 = vcmp.eq.s32.totalorder %v959, 1
        %vm1000 = vcmp.eq.s32.totalorder %v960, 1
        %vm1001 = vcmp.eq.s32.totalorder %v961, 1
        %vm1002 = vcmp.eq.s32.totalorder %v962, 1
        %vm1003 = vcmp.eq.s32.totalorder %v963, 1
        %vm1004 = vcmp.eq.s32.totalorder %v964, 1
        %vm1005 = vcmp.eq.s32.totalorder %v965, 1
        %vm1006 = vcmp.eq.s32.totalorder %v966, 1
        %vm1007 = vcmp.eq.s32.totalorder %v967, 1
        %vm1008 = vcmp.eq.s32.totalorder %v968, 1
        %vm1009 = vcmp.eq.s32.totalorder %v969, 1
        %vm1010 = vcmp.eq.s32.totalorder %v970, 1
        %vm1011 = vcmp.eq.s32.totalorder %v971, 1
        %vm1012 = vcmp.eq.s32.totalorder %v972, 1
        %vm1013 = vcmp.eq.s32.totalorder %v973, 1
        %vm1014 = vcmp.eq.s32.totalorder %v974, 1
        %vm1015 = vcmp.eq.s32.totalorder %v975, 1
        %vm1016 = vcmp.eq.s32.totalorder %v976, 1
        %vm1017 = vcmp.eq.s32.totalorder %v977, 1
        %vm1018 = vcmp.eq.s32.totalorder %v978, 1
        %vm1019 = vcmp.eq.s32.totalorder %v979, 1
        %vm1020 = vcmp.eq.s32.totalorder %v980, 1
        %vm1021 = vcmp.eq.s32.totalorder %v981, 1
        %vm1022 = vcmp.eq.s32.totalorder %v982, 1
        %vm1023 = vcmp.eq.s32.totalorder %v983, 1
        %vm1024 = vcmp.eq.s32.totalorder %v984, 1
        %vm1025 = vcmp.eq.s32.totalorder %v985, 1
        %vm1026 = vcmp.eq.s32.totalorder %v986, 1
        %vm1027 = vcmp.eq.s32.totalorder %v987, 1
        %vm1028 = vcmp.eq.s32.totalorder %v988, 1
        %vm1029 = vcmp.eq.s32.totalorder %v989, 1
        %vm1030 = vcmp.eq.s32.totalorder %v990, 1
        %vm1031 = vcmp.eq.s32.totalorder %v991, 1
        %vm1032 = vcmp.eq.s32.totalorder %v992, 1
        %vm1033 = vcmp.eq.s32.totalorder %v993, 1
        %vm1034 = vcmp.eq.s32.totalorder %v994, 1
        %vm1035 = vcmp.eq.s32.totalorder %v995, 1
        %vm1036 = vcmp.eq.s32.totalorder %v996, 1
        %vm1037 = vcmp.eq.s32.totalorder %v997, 1
        %v1038 = vsel %vm998, %v785, 0.0
        %v1039 = vsel %vm999, %v786, 0.0
        %v1040 = vsel %vm1000, %v787, 0.0
        %v1041 = vsel %vm1001, %v788, 0.0
        %v1042 = vsel %vm1002, %v789, 0.0
        %v1043 = vsel %vm1003, %v790, 0.0
        %v1044 = vsel %vm1004, %v791, 0.0
        %v1045 = vsel %vm1005, %v792, 0.0
        %v1046 = vsel %vm1006, %v793, 0.0
        %v1047 = vsel %vm1007, %v794, 0.0
        %v1048 = vsel %vm1008, %v795, 0.0
        %v1049 = vsel %vm1009, %v796, 0.0
        %v1050 = vsel %vm1010, %v797, 0.0
        %v1051 = vsel %vm1011, %v798, 0.0
        %v1052 = vsel %vm1012, %v799, 0.0
        %v1053 = vsel %vm1013, %v800, 0.0
        %v1054 = vsel %vm1014, %v801, 0.0
        %v1055 = vsel %vm1015, %v802, 0.0
        %v1056 = vsel %vm1016, %v803, 0.0
        %v1057 = vsel %vm1017, %v804, 0.0
        %v1058 = vsel %vm1018, %v805, 0.0
        %v1059 = vsel %vm1019, %v806, 0.0
        %v1060 = vsel %vm1020, %v807, 0.0
        %v1061 = vsel %vm1021, %v808, 0.0
        %v1062 = vsel %vm1022, %v809, 0.0
        %v1063 = vsel %vm1023, %v810, 0.0
        %v1064 = vsel %vm1024, %v811, 0.0
        %v1065 = vsel %vm1025, %v812, 0.0
        %v1066 = vsel %vm1026, %v813, 0.0
        %v1067 = vsel %vm1027, %v814, 0.0
        %v1068 = vsel %vm1028, %v815, 0.0
        %v1069 = vsel %vm1029, %v816, 0.0
        %v1070 = vsel %vm1030, %v817, 0.0
        %v1071 = vsel %vm1031, %v818, 0.0
        %v1072 = vsel %vm1032, %v819, 0.0
        %v1073 = vsel %vm1033, %v820, 0.0
        %v1074 = vsel %vm1034, %v821, 0.0
        %v1075 = vsel %vm1035, %v822, 0.0
        %v1076 = vsel %vm1036, %v823, 0.0
        %v1077 = vsel %vm1037, %v824, 0.0
        %v1078 = vpack.c.bf16 %v1039, %v1038
        %v1079 = vpack.c.bf16 %v1041, %v1040
        %v1080 = vpack.c.bf16 %v1043, %v1042
        %v1081 = vpack.c.bf16 %v1045, %v1044
        %v1082 = vpack.c.bf16 %v1047, %v1046
        %v1083 = vpack.c.bf16 %v1049, %v1048
        %v1084 = vpack.c.bf16 %v1051, %v1050
        %v1085 = vpack.c.bf16 %v1053, %v1052
        %v1086 = vpack.c.bf16 %v1055, %v1054
        %v1087 = vpack.c.bf16 %v1057, %v1056
        %v1088 = vpack.c.bf16 %v1059, %v1058
        %v1089 = vpack.c.bf16 %v1061, %v1060
        %v1090 = vpack.c.bf16 %v1063, %v1062
        %v1091 = vpack.c.bf16 %v1065, %v1064
        %v1092 = vpack.c.bf16 %v1067, %v1066
        %v1093 = vpack.c.bf16 %v1069, %v1068
        %v1094 = vpack.c.bf16 %v1071, %v1070
        %v1095 = vpack.c.bf16 %v1073, %v1072
        %v1096 = vpack.c.bf16 %v1075, %v1074
        %v1097 = vpack.c.bf16 %v1077, %v1076
        %v1098 = vld [vmem:[#allocation7] sm:$0xf]
        %v1099 = vld [vmem:[#allocation7 + $0x4] sm:$0xf]
        %v1100 = vld [vmem:[#allocation7 + $0x8] sm:$0xf]
        %v1101 = vld [vmem:[#allocation7 + $0xc] sm:$0xf]
        %v1102 = vld [vmem:[#allocation7 + $0x10] sm:$0xf]
        %v1103 = vld [vmem:[#allocation7 + $0x14] sm:$0xf]
        %v1104 = vld [vmem:[#allocation7 + $0x18] sm:$0xf]
        %v1105 = vld [vmem:[#allocation7 + $0x1c] sm:$0xf]
        %v1106 = vld [vmem:[#allocation7 + $0x20] sm:$0xf]
        %v1107 = vld [vmem:[#allocation7 + $0x24] sm:$0xf]
        %v1108 = vld [vmem:[#allocation7 + $0x28] sm:$0xf]
        %v1109 = vld [vmem:[#allocation7 + $0x2c] sm:$0xf]
        %v1110 = vld [vmem:[#allocation7 + $0x30] sm:$0xf]
        %v1111 = vld [vmem:[#allocation7 + $0x34] sm:$0xf]
        %v1112 = vld [vmem:[#allocation7 + $0x38] sm:$0xf]
        %v1113 = vld [vmem:[#allocation7 + $0x3c] sm:$0xf]
        %vm1114 = vsmask.f32 7424
        %v1116 = vshrl.u32 %v1078, 16
        %v1118 = vshll.u32 %v1078, 16
        %v1120 = vrot.slane %v1118, 1
        %v1121 = vor.u32 %v1116, %v1120
        %v1123 = vshll.u32 %v1079, 16
        %v1125 = vrot.slane %v1123, 1
        %v1126 = vsel %vm1114, %v1121, %v1125
        %v1128 = vshrl.u32 %v1080, 16
        %v1130 = vshll.u32 %v1080, 16
        %v1132 = vrot.slane %v1130, 1
        %v1133 = vor.u32 %v1128, %v1132
        %v1135 = vshll.u32 %v1081, 16
        %v1137 = vrot.slane %v1135, 1
        %v1138 = vsel %vm1114, %v1133, %v1137
        %v1140 = vshrl.u32 %v1082, 16
        %v1142 = vshll.u32 %v1082, 16
        %v1144 = vrot.slane %v1142, 1
        %v1145 = vor.u32 %v1140, %v1144
        %v1147 = vshll.u32 %v1083, 16
        %v1149 = vrot.slane %v1147, 1
        %v1150 = vsel %vm1114, %v1145, %v1149
        %v1152 = vshrl.u32 %v1084, 16
        %v1154 = vshll.u32 %v1084, 16
        %v1156 = vrot.slane %v1154, 1
        %v1157 = vor.u32 %v1152, %v1156
        %v1159 = vshll.u32 %v1085, 16
        %v1161 = vrot.slane %v1159, 1
        %v1162 = vsel %vm1114, %v1157, %v1161
        %v1164 = vshrl.u32 %v1086, 16
        %v1166 = vshll.u32 %v1086, 16
        %v1168 = vrot.slane %v1166, 1
        %v1169 = vor.u32 %v1164, %v1168
        %v1171 = vshll.u32 %v1087, 16
        %v1173 = vrot.slane %v1171, 1
        %v1174 = vsel %vm1114, %v1169, %v1173
        %v1176 = vshrl.u32 %v1088, 16
        %v1178 = vshll.u32 %v1088, 16
        %v1180 = vrot.slane %v1178, 1
        %v1181 = vor.u32 %v1176, %v1180
        %v1183 = vshll.u32 %v1089, 16
        %v1185 = vrot.slane %v1183, 1
        %v1186 = vsel %vm1114, %v1181, %v1185
        %v1188 = vshrl.u32 %v1090, 16
        %v1190 = vshll.u32 %v1090, 16
        %v1192 = vrot.slane %v1190, 1
        %v1193 = vor.u32 %v1188, %v1192
        %v1195 = vshll.u32 %v1091, 16
        %v1197 = vrot.slane %v1195, 1
        %v1198 = vsel %vm1114, %v1193, %v1197
        %v1200 = vshrl.u32 %v1092, 16
        %v1202 = vshll.u32 %v1092, 16
        %v1204 = vrot.slane %v1202, 1
        %v1205 = vor.u32 %v1200, %v1204
        %v1207 = vshll.u32 %v1093, 16
        %v1209 = vrot.slane %v1207, 1
        %v1210 = vsel %vm1114, %v1205, %v1209
        %s1219 = scalar_lea.vmem [#allocation7], 64
        %v1220 = vld [vmem:[%s1219] sm:$0xf]
        %v1221 = vld [vmem:[%s1219 + $0x4] sm:$0xf]
        %v1222 = vld [vmem:[%s1219 + $0x8] sm:$0xf]
        %v1223 = vld [vmem:[%s1219 + $0xc] sm:$0xf]
        %v1224 = vld [vmem:[%s1219 + $0x10] sm:$0xf]
        %v1225 = vld [vmem:[%s1219 + $0x14] sm:$0xf]
        %v1226 = vld [vmem:[%s1219 + $0x18] sm:$0xf]
        %v1227 = vld [vmem:[%s1219 + $0x1c] sm:$0xf]
        %v1228 = vld [vmem:[%s1219 + $0x20] sm:$0xf]
        %v1229 = vld [vmem:[%s1219 + $0x24] sm:$0xf]
        %v1230 = vld [vmem:[%s1219 + $0x28] sm:$0xf]
        %v1231 = vld [vmem:[%s1219 + $0x2c] sm:$0xf]
        %v1232 = vld [vmem:[%s1219 + $0x30] sm:$0xf]
        %v1233 = vld [vmem:[%s1219 + $0x34] sm:$0xf]
        %v1234 = vld [vmem:[%s1219 + $0x38] sm:$0xf]
        %v1235 = vld [vmem:[%s1219 + $0x3c] sm:$0xf]
        %v1252 = vunpack.c.l.b16 %v1220
        %v1253 = vunpack.c.l.b16 %v1221
        %v1254 = vunpack.c.l.b16 %v1222
        %v1255 = vunpack.c.l.b16 %v1223
        %v1256 = vunpack.c.l.b16 %v1224
        %v1257 = vunpack.c.l.b16 %v1225
        %v1258 = vunpack.c.l.b16 %v1226
        %v1259 = vunpack.c.l.b16 %v1227
        %v1260 = vunpack.c.l.b16 %v1228
        %v1261 = vunpack.c.l.b16 %v1229
        %v1262 = vunpack.c.l.b16 %v1230
        %v1263 = vunpack.c.l.b16 %v1231
        %v1264 = vunpack.c.l.b16 %v1232
        %v1265 = vunpack.c.l.b16 %v1233
        %v1266 = vunpack.c.l.b16 %v1234
        %v1267 = vunpack.c.l.b16 %v1235
        %v1268 = vpack.c.b16 %v1253, %v1252
        %v1269 = vpack.c.b16 %v1255, %v1254
        %v1270 = vpack.c.b16 %v1257, %v1256
        %v1271 = vpack.c.b16 %v1259, %v1258
        %v1272 = vpack.c.b16 %v1261, %v1260
        %v1273 = vpack.c.b16 %v1263, %v1262
        %v1274 = vpack.c.b16 %v1265, %v1264
        %v1275 = vpack.c.b16 %v1267, %v1266
        %1284 = vmatprep.subr.bf16.mxu0 0
        %1285 = vmatpush1.bf16.msra.mxu0 %v1268
        %1286 = vmatprep.subr.bf16.mxu0 0
        %1287 = vmatpush1.bf16.msra.mxu0 %v1269
        %1288 = vmatprep.subr.bf16.mxu0 0
        %1289 = vmatpush1.bf16.msra.mxu0 %v1270
        %1290 = vmatprep.subr.bf16.mxu0 0
        %1291 = vmatpush1.bf16.msra.mxu0 %v1271
        %1292 = vmatprep.subr.bf16.mxu0 0
        %1293 = vmatpush1.bf16.msra.mxu0 %v1272
        %1294 = vmatprep.subr.bf16.mxu0 0
        %1295 = vmatpush1.bf16.msra.mxu0 %v1273
        %1296 = vmatprep.subr.bf16.mxu0 0
        %1297 = vmatpush1.bf16.msra.mxu0 %v1274
        %1298 = vmatprep.subr.bf16.mxu0 0
        %1299 = vmatpush1.bf16.msra.mxu0 %v1275
        %1300 = vmatprep.subr.bf16.mxu0 0
        %1301 = vmatpush1.bf16.msra.mxu0 0
        %1302 = vmatprep.subr.bf16.mxu0 0
        %1303 = vmatpush1.bf16.msra.mxu0 0
        %1304 = vmatprep.subr.bf16.mxu0 0
        %1305 = vmatpush1.bf16.msra.mxu0 0
        %1306 = vmatprep.subr.bf16.mxu0 0
        %1307 = vmatpush1.bf16.msra.mxu0 0
        %1308 = vmatprep.subr.bf16.mxu0 0
        %1309 = vmatpush1.bf16.msra.mxu0 0
        %1310 = vmatprep.subr.bf16.mxu0 0
        %1311 = vmatpush1.bf16.msra.mxu0 0
        %1312 = vmatprep.subr.bf16.mxu0 0
        %1313 = vmatpush1.bf16.msra.mxu0 0
        %1314 = vmatprep.subr.bf16.mxu0 0
        %1315 = vmatpush1.bf16.msra.mxu0 0
        %1316 = vmatprep.mubr.bf16.mxu0 0
        %1317 = vmatmul.mubr.bf16.gmra.mrb[0].mxu0 %v1126
        %v1318 = vpop.f32.mrb[0].mxu0
        %v1319 = vadd.f32 0.0, %v1318
        %v1320 = vpop.f32.mrb[0].mxu0
        %v1321 = vpop.f32.mrb[0].mxu0
        %v1322 = vadd.f32 0.0, %v1321
        %v1323 = vpop.f32.mrb[0].mxu0
        %1324 = vmatprep.mubr.bf16.mxu0 0
        %1325 = vmatmul.mubr.bf16.gmra.mrb[0].mxu0 %v1138
        %v1326 = vpop.f32.mrb[0].mxu0
        %v1327 = vadd.f32 0.0, %v1326
        %v1328 = vpop.f32.mrb[0].mxu0
        %v1329 = vpop.f32.mrb[0].mxu0
        %v1330 = vadd.f32 0.0, %v1329
        %v1331 = vpop.f32.mrb[0].mxu0
        %1332 = vmatprep.mubr.bf16.mxu0 0
        %1333 = vmatmul.mubr.bf16.gmra.mrb[0].mxu0 %v1150
        %v1334 = vpop.f32.mrb[0].mxu0
        %v1335 = vadd.f32 0.0, %v1334
        %v1336 = vpop.f32.mrb[0].mxu0
        %v1337 = vpop.f32.mrb[0].mxu0
        %v1338 = vadd.f32 0.0, %v1337
        %v1339 = vpop.f32.mrb[0].mxu0
        %1340 = vmatprep.mubr.bf16.mxu0 0
        %1341 = vmatmul.mubr.bf16.gmra.mrb[0].mxu0 %v1162
        %v1342 = vpop.f32.mrb[0].mxu0
        %v1343 = vadd.f32 0.0, %v1342
        %v1344 = vpop.f32.mrb[0].mxu0
        %v1345 = vpop.f32.mrb[0].mxu0
        %v1346 = vadd.f32 0.0, %v1345
        %v1347 = vpop.f32.mrb[0].mxu0
        %1348 = vmatprep.mubr.bf16.mxu0 0
        %1349 = vmatmul.mubr.bf16.gmra.mrb[0].mxu0 %v1174
        %v1350 = vpop.f32.mrb[0].mxu0
        %v1351 = vadd.f32 0.0, %v1350
        %v1352 = vpop.f32.mrb[0].mxu0
        %v1353 = vpop.f32.mrb[0].mxu0
        %v1354 = vadd.f32 0.0, %v1353
        %v1355 = vpop.f32.mrb[0].mxu0
        %1356 = vmatprep.mubr.bf16.mxu0 0
        %1357 = vmatmul.mubr.bf16.gmra.mrb[0].mxu0 %v1186
        %v1358 = vpop.f32.mrb[0].mxu0
        %v1359 = vadd.f32 0.0, %v1358
        %v1360 = vpop.f32.mrb[0].mxu0
        %v1361 = vpop.f32.mrb[0].mxu0
        %v1362 = vadd.f32 0.0, %v1361
        %v1363 = vpop.f32.mrb[0].mxu0
        %1364 = vmatprep.mubr.bf16.mxu0 0
        %1365 = vmatmul.mubr.bf16.gmra.mrb[0].mxu0 %v1198
        %v1366 = vpop.f32.mrb[0].mxu0
        %v1367 = vadd.f32 0.0, %v1366
        %v1368 = vpop.f32.mrb[0].mxu0
        %v1369 = vpop.f32.mrb[0].mxu0
        %v1370 = vadd.f32 0.0, %v1369
        %v1371 = vpop.f32.mrb[0].mxu0
        %1372 = vmatprep.mubr.bf16.mxu0 0
        %1373 = vmatmul.mubr.bf16.gmra.mrb[0].mxu0 %v1210
        %v1374 = vpop.f32.mrb[0].mxu0
        %v1375 = vadd.f32 0.0, %v1374
        %v1376 = vpop.f32.mrb[0].mxu0
        %v1377 = vpop.f32.mrb[0].mxu0
        %v1378 = vadd.f32 0.0, %v1377
        %v1379 = vpop.f32.mrb[0].mxu0
        %1380 = vdwg.mxu0
        %v1397 = vunpack.c.l.b16 %v1098
        %v1398 = vunpack.c.l.b16 %v1099
        %v1399 = vunpack.c.l.b16 %v1100
        %v1400 = vunpack.c.l.b16 %v1101
        %v1401 = vunpack.c.l.b16 %v1102
        %v1402 = vunpack.c.l.b16 %v1103
        %v1403 = vunpack.c.l.b16 %v1104
        %v1404 = vunpack.c.l.b16 %v1105
        %v1405 = vunpack.c.l.b16 %v1106
        %v1406 = vunpack.c.l.b16 %v1107
        %v1407 = vunpack.c.l.b16 %v1108
        %v1408 = vunpack.c.l.b16 %v1109
        %v1409 = vunpack.c.l.b16 %v1110
        %v1410 = vunpack.c.l.b16 %v1111
        %v1411 = vunpack.c.l.b16 %v1112
        %v1412 = vunpack.c.l.b16 %v1113
        %v1413 = vpack.c.b16 %v1398, %v1397
        %v1414 = vpack.c.b16 %v1400, %v1399
        %v1415 = vpack.c.b16 %v1402, %v1401
        %v1416 = vpack.c.b16 %v1404, %v1403
        %v1417 = vpack.c.b16 %v1406, %v1405
        %v1418 = vpack.c.b16 %v1408, %v1407
        %v1419 = vpack.c.b16 %v1410, %v1409
        %v1420 = vpack.c.b16 %v1412, %v1411
        %1429 = vmatprep.subr.bf16.mxu0 0
        %1430 = vmatpush1.bf16.msra.mxu0 %v1413
        %1431 = vmatprep.subr.bf16.mxu0 0
        %1432 = vmatpush1.bf16.msra.mxu0 %v1414
        %1433 = vmatprep.subr.bf16.mxu0 0
        %1434 = vmatpush1.bf16.msra.mxu0 %v1415
        %1435 = vmatprep.subr.bf16.mxu0 0
        %1436 = vmatpush1.bf16.msra.mxu0 %v1416
        %1437 = vmatprep.subr.bf16.mxu0 0
        %1438 = vmatpush1.bf16.msra.mxu0 %v1417
        %1439 = vmatprep.subr.bf16.mxu0 0
        %1440 = vmatpush1.bf16.msra.mxu0 %v1418
        %1441 = vmatprep.subr.bf16.mxu0 0
        %1442 = vmatpush1.bf16.msra.mxu0 %v1419
        %1443 = vmatprep.subr.bf16.mxu0 0
        %1444 = vmatpush1.bf16.msra.mxu0 %v1420
        %1445 = vmatprep.subr.bf16.mxu0 0
        %1446 = vmatpush1.bf16.msra.mxu0 0
        %1447 = vmatprep.subr.bf16.mxu0 0
        %1448 = vmatpush1.bf16.msra.mxu0 0
        %1449 = vmatprep.subr.bf16.mxu0 0
        %1450 = vmatpush1.bf16.msra.mxu0 0
        %1451 = vmatprep.subr.bf16.mxu0 0
        %1452 = vmatpush1.bf16.msra.mxu0 0
        %1453 = vmatprep.subr.bf16.mxu0 0
        %1454 = vmatpush1.bf16.msra.mxu0 0
        %1455 = vmatprep.subr.bf16.mxu0 0
        %1456 = vmatpush1.bf16.msra.mxu0 0
        %1457 = vmatprep.subr.bf16.mxu0 0
        %1458 = vmatpush1.bf16.msra.mxu0 0
        %1459 = vmatprep.subr.bf16.mxu0 0
        %1460 = vmatpush1.bf16.msra.mxu0 0
        %1461 = vmatprep.mubr.bf16.mxu0 0
        %1462 = vmatmul.mubr.bf16.gmra.mrb[0].mxu0 %v1078
        %v1463 = vpop.f32.mrb[0].mxu0
        %v1464 = vadd.f32 %v1319, %v1463
        %v1465 = vpop.f32.mrb[0].mxu0
        %v1466 = vpop.f32.mrb[0].mxu0
        %v1467 = vadd.f32 %v1322, %v1466
        %v1468 = vpop.f32.mrb[0].mxu0
        %1469 = vmatprep.mubr.bf16.mxu0 0
        %1470 = vmatmul.mubr.bf16.gmra.mrb[0].mxu0 %v1080
        %v1471 = vpop.f32.mrb[0].mxu0
        %v1472 = vadd.f32 %v1327, %v1471
        %v1473 = vpop.f32.mrb[0].mxu0
        %v1474 = vpop.f32.mrb[0].mxu0
        %v1475 = vadd.f32 %v1330, %v1474
        %v1476 = vpop.f32.mrb[0].mxu0
        %1477 = vmatprep.mubr.bf16.mxu0 0
        %1478 = vmatmul.mubr.bf16.gmra.mrb[0].mxu0 %v1082
        %v1479 = vpop.f32.mrb[0].mxu0
        %v1480 = vadd.f32 %v1335, %v1479
        %v1481 = vpop.f32.mrb[0].mxu0
        %v1482 = vpop.f32.mrb[0].mxu0
        %v1483 = vadd.f32 %v1338, %v1482
        %v1484 = vpop.f32.mrb[0].mxu0
        %1485 = vmatprep.mubr.bf16.mxu0 0
        %1486 = vmatmul.mubr.bf16.gmra.mrb[0].mxu0 %v1084
        %v1487 = vpop.f32.mrb[0].mxu0
        %v1488 = vadd.f32 %v1343, %v1487
        %v1489 = vpop.f32.mrb[0].mxu0
        %v1490 = vpop.f32.mrb[0].mxu0
        %v1491 = vadd.f32 %v1346, %v1490
        %v1492 = vpop.f32.mrb[0].mxu0
        %1493 = vmatprep.mubr.bf16.mxu0 0
        %1494 = vmatmul.mubr.bf16.gmra.mrb[0].mxu0 %v1086
        %v1495 = vpop.f32.mrb[0].mxu0
        %v1496 = vadd.f32 %v1351, %v1495
        %v1497 = vpop.f32.mrb[0].mxu0
        %v1498 = vpop.f32.mrb[0].mxu0
        %v1499 = vadd.f32 %v1354, %v1498
        %v1500 = vpop.f32.mrb[0].mxu0
        %1501 = vmatprep.mubr.bf16.mxu0 0
        %1502 = vmatmul.mubr.bf16.gmra.mrb[0].mxu0 %v1088
        %v1503 = vpop.f32.mrb[0].mxu0
        %v1504 = vadd.f32 %v1359, %v1503
        %v1505 = vpop.f32.mrb[0].mxu0
        %v1506 = vpop.f32.mrb[0].mxu0
        %v1507 = vadd.f32 %v1362, %v1506
        %v1508 = vpop.f32.mrb[0].mxu0
        %1509 = vmatprep.mubr.bf16.mxu0 0
        %1510 = vmatmul.mubr.bf16.gmra.mrb[0].mxu0 %v1090
        %v1511 = vpop.f32.mrb[0].mxu0
        %v1512 = vadd.f32 %v1367, %v1511
        %v1513 = vpop.f32.mrb[0].mxu0
        %v1514 = vpop.f32.mrb[0].mxu0
        %v1515 = vadd.f32 %v1370, %v1514
        %v1516 = vpop.f32.mrb[0].mxu0
        %1517 = vmatprep.mubr.bf16.mxu0 0
        %1518 = vmatmul.mubr.bf16.gmra.mrb[0].mxu0 %v1092
        %v1519 = vpop.f32.mrb[0].mxu0
        %v1520 = vadd.f32 %v1375, %v1519
        %v1521 = vpop.f32.mrb[0].mxu0
        %v1522 = vpop.f32.mrb[0].mxu0
        %v1523 = vadd.f32 %v1378, %v1522
        %v1524 = vpop.f32.mrb[0].mxu0
        %1525 = vdwg.mxu0
        %vm1542 = vcmask 1046528
        %v1543 = vrot.slane %v1078, 1
        %v1544 = vrot.slane %v1079, 1
        %v1545 = vsel %vm1542, %v1543, %v1544
        %v1546 = vrot.slane %v1080, 1
        %v1547 = vrot.slane %v1081, 1
        %v1548 = vsel %vm1542, %v1546, %v1547
        %v1549 = vrot.slane %v1082, 1
        %v1550 = vrot.slane %v1083, 1
        %v1551 = vsel %vm1542, %v1549, %v1550
        %v1552 = vrot.slane %v1084, 1
        %v1553 = vrot.slane %v1085, 1
        %v1554 = vsel %vm1542, %v1552, %v1553
        %v1555 = vrot.slane %v1086, 1
        %v1556 = vrot.slane %v1087, 1
        %v1557 = vsel %vm1542, %v1555, %v1556
        %v1558 = vrot.slane %v1088, 1
        %v1559 = vrot.slane %v1089, 1
        %v1560 = vsel %vm1542, %v1558, %v1559
        %v1561 = vrot.slane %v1090, 1
        %v1562 = vrot.slane %v1091, 1
        %v1563 = vsel %vm1542, %v1561, %v1562
        %v1564 = vrot.slane %v1092, 1
        %v1565 = vrot.slane %v1093, 1
        %v1566 = vsel %vm1542, %v1564, %v1565
        %s1575 = scalar_lea.vmem [#allocation7], 128
        %v1576 = vld [vmem:[%s1575] sm:$0xf]
        %v1577 = vld [vmem:[%s1575 + $0x4] sm:$0xf]
        %v1578 = vld [vmem:[%s1575 + $0x8] sm:$0xf]
        %v1579 = vld [vmem:[%s1575 + $0xc] sm:$0xf]
        %v1580 = vld [vmem:[%s1575 + $0x10] sm:$0xf]
        %v1581 = vld [vmem:[%s1575 + $0x14] sm:$0xf]
        %v1582 = vld [vmem:[%s1575 + $0x18] sm:$0xf]
        %v1583 = vld [vmem:[%s1575 + $0x1c] sm:$0xf]
        %v1584 = vld [vmem:[%s1575 + $0x20] sm:$0xf]
        %v1585 = vld [vmem:[%s1575 + $0x24] sm:$0xf]
        %v1586 = vld [vmem:[%s1575 + $0x28] sm:$0xf]
        %v1587 = vld [vmem:[%s1575 + $0x2c] sm:$0xf]
        %v1588 = vld [vmem:[%s1575 + $0x30] sm:$0xf]
        %v1589 = vld [vmem:[%s1575 + $0x34] sm:$0xf]
        %v1590 = vld [vmem:[%s1575 + $0x38] sm:$0xf]
        %v1591 = vld [vmem:[%s1575 + $0x3c] sm:$0xf]
        %v1608 = vunpack.c.l.b16 %v1576
        %v1609 = vunpack.c.l.b16 %v1577
        %v1610 = vunpack.c.l.b16 %v1578
        %v1611 = vunpack.c.l.b16 %v1579
        %v1612 = vunpack.c.l.b16 %v1580
        %v1613 = vunpack.c.l.b16 %v1581
        %v1614 = vunpack.c.l.b16 %v1582
        %v1615 = vunpack.c.l.b16 %v1583
        %v1616 = vunpack.c.l.b16 %v1584
        %v1617 = vunpack.c.l.b16 %v1585
        %v1618 = vunpack.c.l.b16 %v1586
        %v1619 = vunpack.c.l.b16 %v1587
        %v1620 = vunpack.c.l.b16 %v1588
        %v1621 = vunpack.c.l.b16 %v1589
        %v1622 = vunpack.c.l.b16 %v1590
        %v1623 = vunpack.c.l.b16 %v1591
        %v1624 = vpack.c.b16 %v1609, %v1608
        %v1625 = vpack.c.b16 %v1611, %v1610
        %v1626 = vpack.c.b16 %v1613, %v1612
        %v1627 = vpack.c.b16 %v1615, %v1614
        %v1628 = vpack.c.b16 %v1617, %v1616
        %v1629 = vpack.c.b16 %v1619, %v1618
        %v1630 = vpack.c.b16 %v1621, %v1620
        %v1631 = vpack.c.b16 %v1623, %v1622
        %1640 = vmatprep.subr.bf16.mxu0 0
        %1641 = vmatpush1.bf16.msra.mxu0 %v1624
        %1642 = vmatprep.subr.bf16.mxu0 0
        %1643 = vmatpush1.bf16.msra.mxu0 %v1625
        %1644 = vmatprep.subr.bf16.mxu0 0
        %1645 = vmatpush1.bf16.msra.mxu0 %v1626
        %1646 = vmatprep.subr.bf16.mxu0 0
        %1647 = vmatpush1.bf16.msra.mxu0 %v1627
        %1648 = vmatprep.subr.bf16.mxu0 0
        %1649 = vmatpush1.bf16.msra.mxu0 %v1628
        %1650 = vmatprep.subr.bf16.mxu0 0
        %1651 = vmatpush1.bf16.msra.mxu0 %v1629
        %1652 = vmatprep.subr.bf16.mxu0 0
        %1653 = vmatpush1.bf16.msra.mxu0 %v1630
        %1654 = vmatprep.subr.bf16.mxu0 0
        %1655 = vmatpush1.bf16.msra.mxu0 %v1631
        %1656 = vmatprep.subr.bf16.mxu0 0
        %1657 = vmatpush1.bf16.msra.mxu0 0
        %1658 = vmatprep.subr.bf16.mxu0 0
        %1659 = vmatpush1.bf16.msra.mxu0 0
        %1660 = vmatprep.subr.bf16.mxu0 0
        %1661 = vmatpush1.bf16.msra.mxu0 0
        %1662 = vmatprep.subr.bf16.mxu0 0
        %1663 = vmatpush1.bf16.msra.mxu0 0
        %1664 = vmatprep.subr.bf16.mxu0 0
        %1665 = vmatpush1.bf16.msra.mxu0 0
        %1666 = vmatprep.subr.bf16.mxu0 0
        %1667 = vmatpush1.bf16.msra.mxu0 0
        %1668 = vmatprep.subr.bf16.mxu0 0
        %1669 = vmatpush1.bf16.msra.mxu0 0
        %1670 = vmatprep.subr.bf16.mxu0 0
        %1671 = vmatpush1.bf16.msra.mxu0 0
        %1672 = vmatprep.mubr.bf16.mxu0 0
        %1673 = vmatmul.mubr.bf16.gmra.mrb[0].mxu0 %v1545
        %v1674 = vpop.f32.mrb[0].mxu0
        %v1675 = vadd.f32 0.0, %v1674
        %v1676 = vpop.f32.mrb[0].mxu0
        %v1677 = vpop.f32.mrb[0].mxu0
        %v1678 = vadd.f32 0.0, %v1677
        %v1679 = vpop.f32.mrb[0].mxu0
        %1680 = vmatprep.mubr.bf16.mxu0 0
        %1681 = vmatmul.mubr.bf16.gmra.mrb[0].mxu0 %v1548
        %v1682 = vpop.f32.mrb[0].mxu0
        %v1683 = vadd.f32 0.0, %v1682
        %v1684 = vpop.f32.mrb[0].mxu0
        %v1685 = vpop.f32.mrb[0].mxu0
        %v1686 = vadd.f32 0.0, %v1685
        %v1687 = vpop.f32.mrb[0].mxu0
        %1688 = vmatprep.mubr.bf16.mxu0 0
        %1689 = vmatmul.mubr.bf16.gmra.mrb[0].mxu0 %v1551
        %v1690 = vpop.f32.mrb[0].mxu0
        %v1691 = vadd.f32 0.0, %v1690
        %v1692 = vpop.f32.mrb[0].mxu0
        %v1693 = vpop.f32.mrb[0].mxu0
        %v1694 = vadd.f32 0.0, %v1693
        %v1695 = vpop.f32.mrb[0].mxu0
        %1696 = vmatprep.mubr.bf16.mxu0 0
        %1697 = vmatmul.mubr.bf16.gmra.mrb[0].mxu0 %v1554
        %v1698 = vpop.f32.mrb[0].mxu0
        %v1699 = vadd.f32 0.0, %v1698
        %v1700 = vpop.f32.mrb[0].mxu0
        %v1701 = vpop.f32.mrb[0].mxu0
        %v1702 = vadd.f32 0.0, %v1701
        %v1703 = vpop.f32.mrb[0].mxu0
        %1704 = vmatprep.mubr.bf16.mxu0 0
        %1705 = vmatmul.mubr.bf16.gmra.mrb[0].mxu0 %v1557
        %v1706 = vpop.f32.mrb[0].mxu0
        %v1707 = vadd.f32 0.0, %v1706
        %v1708 = vpop.f32.mrb[0].mxu0
        %v1709 = vpop.f32.mrb[0].mxu0
        %v1710 = vadd.f32 0.0, %v1709
        %v1711 = vpop.f32.mrb[0].mxu0
        %1712 = vmatprep.mubr.bf16.mxu0 0
        %1713 = vmatmul.mubr.bf16.gmra.mrb[0].mxu0 %v1560
        %v1714 = vpop.f32.mrb[0].mxu0
        %v1715 = vadd.f32 0.0, %v1714
        %v1716 = vpop.f32.mrb[0].mxu0
        %v1717 = vpop.f32.mrb[0].mxu0
        %v1718 = vadd.f32 0.0, %v1717
        %v1719 = vpop.f32.mrb[0].mxu0
        %1720 = vmatprep.mubr.bf16.mxu0 0
        %1721 = vmatmul.mubr.bf16.gmra.mrb[0].mxu0 %v1563
        %v1722 = vpop.f32.mrb[0].mxu0
        %v1723 = vadd.f32 0.0, %v1722
        %v1724 = vpop.f32.mrb[0].mxu0
        %v1725 = vpop.f32.mrb[0].mxu0
        %v1726 = vadd.f32 0.0, %v1725
        %v1727 = vpop.f32.mrb[0].mxu0
        %1728 = vmatprep.mubr.bf16.mxu0 0
        %1729 = vmatmul.mubr.bf16.gmra.mrb[0].mxu0 %v1566
        %v1730 = vpop.f32.mrb[0].mxu0
        %v1731 = vadd.f32 0.0, %v1730
        %v1732 = vpop.f32.mrb[0].mxu0
        %v1733 = vpop.f32.mrb[0].mxu0
        %v1734 = vadd.f32 0.0, %v1733
        %v1735 = vpop.f32.mrb[0].mxu0
        %1736 = vdwg.mxu0
        %v1737 = vadd.f32 %v1464, %v1675
        %v1738 = vadd.f32 %v1467, %v1678
        %v1739 = vadd.f32 %v1472, %v1683
        %v1740 = vadd.f32 %v1475, %v1686
        %v1741 = vadd.f32 %v1480, %v1691
        %v1742 = vadd.f32 %v1483, %v1694
        %v1743 = vadd.f32 %v1488, %v1699
        %v1744 = vadd.f32 %v1491, %v1702
        %v1745 = vadd.f32 %v1496, %v1707
        %v1746 = vadd.f32 %v1499, %v1710
        %v1747 = vadd.f32 %v1504, %v1715
        %v1748 = vadd.f32 %v1507, %v1718
        %v1749 = vadd.f32 %v1512, %v1723
        %v1750 = vadd.f32 %v1515, %v1726
        %v1751 = vadd.f32 %v1520, %v1731
        %v1752 = vadd.f32 %v1523, %v1734
        %s1753 = scalar_lea.vmem [#allocation7], 192
        %v1754 = vld [vmem:[%s1753] sm:$0xf]
        %v1755 = vld [vmem:[%s1753 + $0x4] sm:$0xf]
        %v1756 = vld [vmem:[%s1753 + $0x8] sm:$0xf]
        %v1757 = vld [vmem:[%s1753 + $0xc] sm:$0xf]
        %v1758 = vld [vmem:[%s1753 + $0x10] sm:$0xf]
        %v1759 = vld [vmem:[%s1753 + $0x14] sm:$0xf]
        %v1760 = vld [vmem:[%s1753 + $0x18] sm:$0xf]
        %v1761 = vld [vmem:[%s1753 + $0x1c] sm:$0xf]
        %v1762 = vld [vmem:[%s1753 + $0x20] sm:$0xf]
        %v1763 = vld [vmem:[%s1753 + $0x24] sm:$0xf]
        %v1764 = vld [vmem:[%s1753 + $0x28] sm:$0xf]
        %v1765 = vld [vmem:[%s1753 + $0x2c] sm:$0xf]
        %v1766 = vld [vmem:[%s1753 + $0x30] sm:$0xf]
        %v1767 = vld [vmem:[%s1753 + $0x34] sm:$0xf]
        %v1768 = vld [vmem:[%s1753 + $0x38] sm:$0xf]
        %v1769 = vld [vmem:[%s1753 + $0x3c] sm:$0xf]
        %v1786 = vunpack.c.l.b16 %v1754
        %v1787 = vunpack.c.l.b16 %v1755
        %v1788 = vunpack.c.l.b16 %v1756
        %v1789 = vunpack.c.l.b16 %v1757
        %v1790 = vunpack.c.l.b16 %v1758
        %v1791 = vunpack.c.l.b16 %v1759
        %v1792 = vunpack.c.l.b16 %v1760
        %v1793 = vunpack.c.l.b16 %v1761
        %v1794 = vunpack.c.l.b16 %v1762
        %v1795 = vunpack.c.l.b16 %v1763
        %v1796 = vunpack.c.l.b16 %v1764
        %v1797 = vunpack.c.l.b16 %v1765
        %v1798 = vunpack.c.l.b16 %v1766
        %v1799 = vunpack.c.l.b16 %v1767
        %v1800 = vunpack.c.l.b16 %v1768
        %v1801 = vunpack.c.l.b16 %v1769
        %v1802 = vpack.c.b16 %v1787, %v1786
        %v1803 = vpack.c.b16 %v1789, %v1788
        %v1804 = vpack.c.b16 %v1791, %v1790
        %v1805 = vpack.c.b16 %v1793, %v1792
        %v1806 = vpack.c.b16 %v1795, %v1794
        %v1807 = vpack.c.b16 %v1797, %v1796
        %v1808 = vpack.c.b16 %v1799, %v1798
        %v1809 = vpack.c.b16 %v1801, %v1800
        %1818 = vmatprep.subr.bf16.mxu0 0
        %1819 = vmatpush1.bf16.msra.mxu0 %v1802
        %1820 = vmatprep.subr.bf16.mxu0 0
        %1821 = vmatpush1.bf16.msra.mxu0 %v1803
        %1822 = vmatprep.subr.bf16.mxu0 0
        %1823 = vmatpush1.bf16.msra.mxu0 %v1804
        %1824 = vmatprep.subr.bf16.mxu0 0
        %1825 = vmatpush1.bf16.msra.mxu0 %v1805
        %1826 = vmatprep.subr.bf16.mxu0 0
        %1827 = vmatpush1.bf16.msra.mxu0 %v1806
        %1828 = vmatprep.subr.bf16.mxu0 0
        %1829 = vmatpush1.bf16.msra.mxu0 %v1807
        %1830 = vmatprep.subr.bf16.mxu0 0
        %1831 = vmatpush1.bf16.msra.mxu0 %v1808
        %1832 = vmatprep.subr.bf16.mxu0 0
        %1833 = vmatpush1.bf16.msra.mxu0 %v1809
        %1834 = vmatprep.subr.bf16.mxu0 0
        %1835 = vmatpush1.bf16.msra.mxu0 0
        %1836 = vmatprep.subr.bf16.mxu0 0
        %1837 = vmatpush1.bf16.msra.mxu0 0
        %1838 = vmatprep.subr.bf16.mxu0 0
        %1839 = vmatpush1.bf16.msra.mxu0 0
        %1840 = vmatprep.subr.bf16.mxu0 0
        %1841 = vmatpush1.bf16.msra.mxu0 0
        %1842 = vmatprep.subr.bf16.mxu0 0
        %1843 = vmatpush1.bf16.msra.mxu0 0
        %1844 = vmatprep.subr.bf16.mxu0 0
        %1845 = vmatpush1.bf16.msra.mxu0 0
        %1846 = vmatprep.subr.bf16.mxu0 0
        %1847 = vmatpush1.bf16.msra.mxu0 0
        %1848 = vmatprep.subr.bf16.mxu0 0
        %1849 = vmatpush1.bf16.msra.mxu0 0
        %1850 = vmatprep.mubr.bf16.mxu0 0
        %1851 = vmatmul.mubr.bf16.gmra.mrb[0].mxu0 %v1080
        %v1852 = vpop.f32.mrb[0].mxu0
        %v1853 = vadd.f32 0.0, %v1852
        %v1854 = vpop.f32.mrb[0].mxu0
        %v1855 = vpop.f32.mrb[0].mxu0
        %v1856 = vadd.f32 0.0, %v1855
        %v1857 = vpop.f32.mrb[0].mxu0
        %1858 = vmatprep.mubr.bf16.mxu0 0
        %1859 = vmatmul.mubr.bf16.gmra.mrb[0].mxu0 %v1082
        %v1860 = vpop.f32.mrb[0].mxu0
        %v1861 = vadd.f32 0.0, %v1860
        %v1862 = vpop.f32.mrb[0].mxu0
        %v1863 = vpop.f32.mrb[0].mxu0
        %v1864 = vadd.f32 0.0, %v1863
        %v1865 = vpop.f32.mrb[0].mxu0
        %1866 = vmatprep.mubr.bf16.mxu0 0
        %1867 = vmatmul.mubr.bf16.gmra.mrb[0].mxu0 %v1084
        %v1868 = vpop.f32.mrb[0].mxu0
        %v1869 = vadd.f32 0.0, %v1868
        %v1870 = vpop.f32.mrb[0].mxu0
        %v1871 = vpop.f32.mrb[0].mxu0
        %v1872 = vadd.f32 0.0, %v1871
        %v1873 = vpop.f32.mrb[0].mxu0
        %1874 = vmatprep.mubr.bf16.mxu0 0
        %1875 = vmatmul.mubr.bf16.gmra.mrb[0].mxu0 %v1086
        %v1876 = vpop.f32.mrb[0].mxu0
        %v1877 = vadd.f32 0.0, %v1876
        %v1878 = vpop.f32.mrb[0].mxu0
        %v1879 = vpop.f32.mrb[0].mxu0
        %v1880 = vadd.f32 0.0, %v1879
        %v1881 = vpop.f32.mrb[0].mxu0
        %1882 = vmatprep.mubr.bf16.mxu0 0
        %1883 = vmatmul.mubr.bf16.gmra.mrb[0].mxu0 %v1088
        %v1884 = vpop.f32.mrb[0].mxu0
        %v1885 = vadd.f32 0.0, %v1884
        %v1886 = vpop.f32.mrb[0].mxu0
        %v1887 = vpop.f32.mrb[0].mxu0
        %v1888 = vadd.f32 0.0, %v1887
        %v1889 = vpop.f32.mrb[0].mxu0
        %1890 = vmatprep.mubr.bf16.mxu0 0
        %1891 = vmatmul.mubr.bf16.gmra.mrb[0].mxu0 %v1090
        %v1892 = vpop.f32.mrb[0].mxu0
        %v1893 = vadd.f32 0.0, %v1892
        %v1894 = vpop.f32.mrb[0].mxu0
        %v1895 = vpop.f32.mrb[0].mxu0
        %v1896 = vadd.f32 0.0, %v1895
        %v1897 = vpop.f32.mrb[0].mxu0
        %1898 = vmatprep.mubr.bf16.mxu0 0
        %1899 = vmatmul.mubr.bf16.gmra.mrb[0].mxu0 %v1092
        %v1900 = vpop.f32.mrb[0].mxu0
        %v1901 = vadd.f32 0.0, %v1900
        %v1902 = vpop.f32.mrb[0].mxu0
        %v1903 = vpop.f32.mrb[0].mxu0
        %v1904 = vadd.f32 0.0, %v1903
        %v1905 = vpop.f32.mrb[0].mxu0
        %1906 = vmatprep.mubr.bf16.mxu0 0
        %1907 = vmatmul.mubr.bf16.gmra.mrb[0].mxu0 %v1094
        %v1908 = vpop.f32.mrb[0].mxu0
        %v1909 = vadd.f32 0.0, %v1908
        %v1910 = vpop.f32.mrb[0].mxu0
        %v1911 = vpop.f32.mrb[0].mxu0
        %v1912 = vadd.f32 0.0, %v1911
        %v1913 = vpop.f32.mrb[0].mxu0
        %1914 = vdwg.mxu0
        %v1915 = vadd.f32 %v1737, %v1853
        %v1916 = vadd.f32 %v1738, %v1856
        %v1917 = vadd.f32 %v1739, %v1861
        %v1918 = vadd.f32 %v1740, %v1864
        %v1919 = vadd.f32 %v1741, %v1869
        %v1920 = vadd.f32 %v1742, %v1872
        %v1921 = vadd.f32 %v1743, %v1877
        %v1922 = vadd.f32 %v1744, %v1880
        %v1923 = vadd.f32 %v1745, %v1885
        %v1924 = vadd.f32 %v1746, %v1888
        %v1925 = vadd.f32 %v1747, %v1893
        %v1926 = vadd.f32 %v1748, %v1896
        %v1927 = vadd.f32 %v1749, %v1901
        %v1928 = vadd.f32 %v1750, %v1904
        %v1929 = vadd.f32 %v1751, %v1909
        %v1930 = vadd.f32 %v1752, %v1912
        %v1932 = vshrl.u32 %v1094, 16
        %v1934 = vshll.u32 %v1094, 16
        %v1936 = vrot.slane %v1934, 1
        %v1937 = vor.u32 %v1932, %v1936
        %v1939 = vshll.u32 %v1095, 16
        %v1941 = vrot.slane %v1939, 1
        %v1942 = vsel %vm1114, %v1937, %v1941
        %s1944 = scalar_lea.vmem [#allocation7], 256
        %v1945 = vld [vmem:[%s1944] sm:$0xf]
        %v1946 = vld [vmem:[%s1944 + $0x4] sm:$0xf]
        %v1947 = vld [vmem:[%s1944 + $0x8] sm:$0xf]
        %v1948 = vld [vmem:[%s1944 + $0xc] sm:$0xf]
        %v1949 = vld [vmem:[%s1944 + $0x10] sm:$0xf]
        %v1950 = vld [vmem:[%s1944 + $0x14] sm:$0xf]
        %v1951 = vld [vmem:[%s1944 + $0x18] sm:$0xf]
        %v1952 = vld [vmem:[%s1944 + $0x1c] sm:$0xf]
        %v1953 = vld [vmem:[%s1944 + $0x20] sm:$0xf]
        %v1954 = vld [vmem:[%s1944 + $0x24] sm:$0xf]
        %v1955 = vld [vmem:[%s1944 + $0x28] sm:$0xf]
        %v1956 = vld [vmem:[%s1944 + $0x2c] sm:$0xf]
        %v1957 = vld [vmem:[%s1944 + $0x30] sm:$0xf]
        %v1958 = vld [vmem:[%s1944 + $0x34] sm:$0xf]
        %v1959 = vld [vmem:[%s1944 + $0x38] sm:$0xf]
        %v1960 = vld [vmem:[%s1944 + $0x3c] sm:$0xf]
        %v1977 = vunpack.c.l.b16 %v1945
        %v1978 = vunpack.c.l.b16 %v1946
        %v1979 = vunpack.c.l.b16 %v1947
        %v1980 = vunpack.c.l.b16 %v1948
        %v1981 = vunpack.c.l.b16 %v1949
        %v1982 = vunpack.c.l.b16 %v1950
        %v1983 = vunpack.c.l.b16 %v1951
        %v1984 = vunpack.c.l.b16 %v1952
        %v1985 = vunpack.c.l.b16 %v1953
        %v1986 = vunpack.c.l.b16 %v1954
        %v1987 = vunpack.c.l.b16 %v1955
        %v1988 = vunpack.c.l.b16 %v1956
        %v1989 = vunpack.c.l.b16 %v1957
        %v1990 = vunpack.c.l.b16 %v1958
        %v1991 = vunpack.c.l.b16 %v1959
        %v1992 = vunpack.c.l.b16 %v1960
        %v1993 = vpack.c.b16 %v1978, %v1977
        %v1994 = vpack.c.b16 %v1980, %v1979
        %v1995 = vpack.c.b16 %v1982, %v1981
        %v1996 = vpack.c.b16 %v1984, %v1983
        %v1997 = vpack.c.b16 %v1986, %v1985
        %v1998 = vpack.c.b16 %v1988, %v1987
        %v1999 = vpack.c.b16 %v1990, %v1989
        %v2000 = vpack.c.b16 %v1992, %v1991
        %2009 = vmatprep.subr.bf16.mxu0 0
        %2010 = vmatpush1.bf16.msra.mxu0 %v1993
        %2011 = vmatprep.subr.bf16.mxu0 0
        %2012 = vmatpush1.bf16.msra.mxu0 %v1994
        %2013 = vmatprep.subr.bf16.mxu0 0
        %2014 = vmatpush1.bf16.msra.mxu0 %v1995
        %2015 = vmatprep.subr.bf16.mxu0 0
        %2016 = vmatpush1.bf16.msra.mxu0 %v1996
        %2017 = vmatprep.subr.bf16.mxu0 0
        %2018 = vmatpush1.bf16.msra.mxu0 %v1997
        %2019 = vmatprep.subr.bf16.mxu0 0
        %2020 = vmatpush1.bf16.msra.mxu0 %v1998
        %2021 = vmatprep.subr.bf16.mxu0 0
        %2022 = vmatpush1.bf16.msra.mxu0 %v1999
        %2023 = vmatprep.subr.bf16.mxu0 0
        %2024 = vmatpush1.bf16.msra.mxu0 %v2000
        %2025 = vmatprep.subr.bf16.mxu0 0
        %2026 = vmatpush1.bf16.msra.mxu0 0
        %2027 = vmatprep.subr.bf16.mxu0 0
        %2028 = vmatpush1.bf16.msra.mxu0 0
        %2029 = vmatprep.subr.bf16.mxu0 0
        %2030 = vmatpush1.bf16.msra.mxu0 0
        %2031 = vmatprep.subr.bf16.mxu0 0
        %2032 = vmatpush1.bf16.msra.mxu0 0
        %2033 = vmatprep.subr.bf16.mxu0 0
        %2034 = vmatpush1.bf16.msra.mxu0 0
        %2035 = vmatprep.subr.bf16.mxu0 0
        %2036 = vmatpush1.bf16.msra.mxu0 0
        %2037 = vmatprep.subr.bf16.mxu0 0
        %2038 = vmatpush1.bf16.msra.mxu0 0
        %2039 = vmatprep.subr.bf16.mxu0 0
        %2040 = vmatpush1.bf16.msra.mxu0 0
        %2041 = vmatprep.mubr.bf16.mxu0 0
        %2042 = vmatmul.mubr.bf16.gmra.mrb[0].mxu0 %v1138
        %v2043 = vpop.f32.mrb[0].mxu0
        %v2044 = vadd.f32 0.0, %v2043
        %v2045 = vpop.f32.mrb[0].mxu0
        %v2046 = vpop.f32.mrb[0].mxu0
        %v2047 = vadd.f32 0.0, %v2046
        %v2048 = vpop.f32.mrb[0].mxu0
        %2049 = vmatprep.mubr.bf16.mxu0 0
        %2050 = vmatmul.mubr.bf16.gmra.mrb[0].mxu0 %v1150
        %v2051 = vpop.f32.mrb[0].mxu0
        %v2052 = vadd.f32 0.0, %v2051
        %v2053 = vpop.f32.mrb[0].mxu0
        %v2054 = vpop.f32.mrb[0].mxu0
        %v2055 = vadd.f32 0.0, %v2054
        %v2056 = vpop.f32.mrb[0].mxu0
        %2057 = vmatprep.mubr.bf16.mxu0 0
        %2058 = vmatmul.mubr.bf16.gmra.mrb[0].mxu0 %v1162
        %v2059 = vpop.f32.mrb[0].mxu0
        %v2060 = vadd.f32 0.0, %v2059
        %v2061 = vpop.f32.mrb[0].mxu0
        %v2062 = vpop.f32.mrb[0].mxu0
        %v2063 = vadd.f32 0.0, %v2062
        %v2064 = vpop.f32.mrb[0].mxu0
        %2065 = vmatprep.mubr.bf16.mxu0 0
        %2066 = vmatmul.mubr.bf16.gmra.mrb[0].mxu0 %v1174
        %v2067 = vpop.f32.mrb[0].mxu0
        %v2068 = vadd.f32 0.0, %v2067
        %v2069 = vpop.f32.mrb[0].mxu0
        %v2070 = vpop.f32.mrb[0].mxu0
        %v2071 = vadd.f32 0.0, %v2070
        %v2072 = vpop.f32.mrb[0].mxu0
        %2073 = vmatprep.mubr.bf16.mxu0 0
        %2074 = vmatmul.mubr.bf16.gmra.mrb[0].mxu0 %v1186
        %v2075 = vpop.f32.mrb[0].mxu0
        %v2076 = vadd.f32 0.0, %v2075
        %v2077 = vpop.f32.mrb[0].mxu0
        %v2078 = vpop.f32.mrb[0].mxu0
        %v2079 = vadd.f32 0.0, %v2078
        %v2080 = vpop.f32.mrb[0].mxu0
        %2081 = vmatprep.mubr.bf16.mxu0 0
        %2082 = vmatmul.mubr.bf16.gmra.mrb[0].mxu0 %v1198
        %v2083 = vpop.f32.mrb[0].mxu0
        %v2084 = vadd.f32 0.0, %v2083
        %v2085 = vpop.f32.mrb[0].mxu0
        %v2086 = vpop.f32.mrb[0].mxu0
        %v2087 = vadd.f32 0.0, %v2086
        %v2088 = vpop.f32.mrb[0].mxu0
        %2089 = vmatprep.mubr.bf16.mxu0 0
        %2090 = vmatmul.mubr.bf16.gmra.mrb[0].mxu0 %v1210
        %v2091 = vpop.f32.mrb[0].mxu0
        %v2092 = vadd.f32 0.0, %v2091
        %v2093 = vpop.f32.mrb[0].mxu0
        %v2094 = vpop.f32.mrb[0].mxu0
        %v2095 = vadd.f32 0.0, %v2094
        %v2096 = vpop.f32.mrb[0].mxu0
        %2097 = vmatprep.mubr.bf16.mxu0 0
        %2098 = vmatmul.mubr.bf16.gmra.mrb[0].mxu0 %v1942
        %v2099 = vpop.f32.mrb[0].mxu0
        %v2100 = vadd.f32 0.0, %v2099
        %v2101 = vpop.f32.mrb[0].mxu0
        %v2102 = vpop.f32.mrb[0].mxu0
        %v2103 = vadd.f32 0.0, %v2102
        %v2104 = vpop.f32.mrb[0].mxu0
        %2105 = vdwg.mxu0
        %v2106 = vadd.f32 %v1915, %v2044
        %v2107 = vadd.f32 %v1916, %v2047
        %v2108 = vadd.f32 %v1917, %v2052
        %v2109 = vadd.f32 %v1918, %v2055
        %v2110 = vadd.f32 %v1919, %v2060
        %v2111 = vadd.f32 %v1920, %v2063
        %v2112 = vadd.f32 %v1921, %v2068
        %v2113 = vadd.f32 %v1922, %v2071
        %v2114 = vadd.f32 %v1923, %v2076
        %v2115 = vadd.f32 %v1924, %v2079
        %v2116 = vadd.f32 %v1925, %v2084
        %v2117 = vadd.f32 %v1926, %v2087
        %v2118 = vadd.f32 %v1927, %v2092
        %v2119 = vadd.f32 %v1928, %v2095
        %v2120 = vadd.f32 %v1929, %v2100
        %v2121 = vadd.f32 %v1930, %v2103
        %v2124 = vrot.slane %v1094, 1
        %v2125 = vrot.slane %v1095, 1
        %v2126 = vsel %vm1542, %v2124, %v2125
        %s2128 = scalar_lea.vmem [#allocation7], 320
        %v2129 = vld [vmem:[%s2128] sm:$0xf]
        %v2130 = vld [vmem:[%s2128 + $0x4] sm:$0xf]
        %v2131 = vld [vmem:[%s2128 + $0x8] sm:$0xf]
        %v2132 = vld [vmem:[%s2128 + $0xc] sm:$0xf]
        %v2133 = vld [vmem:[%s2128 + $0x10] sm:$0xf]
        %v2134 = vld [vmem:[%s2128 + $0x14] sm:$0xf]
        %v2135 = vld [vmem:[%s2128 + $0x18] sm:$0xf]
        %v2136 = vld [vmem:[%s2128 + $0x1c] sm:$0xf]
        %v2137 = vld [vmem:[%s2128 + $0x20] sm:$0xf]
        %v2138 = vld [vmem:[%s2128 + $0x24] sm:$0xf]
        %v2139 = vld [vmem:[%s2128 + $0x28] sm:$0xf]
        %v2140 = vld [vmem:[%s2128 + $0x2c] sm:$0xf]
        %v2141 = vld [vmem:[%s2128 + $0x30] sm:$0xf]
        %v2142 = vld [vmem:[%s2128 + $0x34] sm:$0xf]
        %v2143 = vld [vmem:[%s2128 + $0x38] sm:$0xf]
        %v2144 = vld [vmem:[%s2128 + $0x3c] sm:$0xf]
        %v2161 = vunpack.c.l.b16 %v2129
        %v2162 = vunpack.c.l.b16 %v2130
        %v2163 = vunpack.c.l.b16 %v2131
        %v2164 = vunpack.c.l.b16 %v2132
        %v2165 = vunpack.c.l.b16 %v2133
        %v2166 = vunpack.c.l.b16 %v2134
        %v2167 = vunpack.c.l.b16 %v2135
        %v2168 = vunpack.c.l.b16 %v2136
        %v2169 = vunpack.c.l.b16 %v2137
        %v2170 = vunpack.c.l.b16 %v2138
        %v2171 = vunpack.c.l.b16 %v2139
        %v2172 = vunpack.c.l.b16 %v2140
        %v2173 = vunpack.c.l.b16 %v2141
        %v2174 = vunpack.c.l.b16 %v2142
        %v2175 = vunpack.c.l.b16 %v2143
        %v2176 = vunpack.c.l.b16 %v2144
        %v2177 = vpack.c.b16 %v2162, %v2161
        %v2178 = vpack.c.b16 %v2164, %v2163
        %v2179 = vpack.c.b16 %v2166, %v2165
        %v2180 = vpack.c.b16 %v2168, %v2167
        %v2181 = vpack.c.b16 %v2170, %v2169
        %v2182 = vpack.c.b16 %v2172, %v2171
        %v2183 = vpack.c.b16 %v2174, %v2173
        %v2184 = vpack.c.b16 %v2176, %v2175
        %2193 = vmatprep.subr.bf16.mxu0 0
        %2194 = vmatpush1.bf16.msra.mxu0 %v2177
        %2195 = vmatprep.subr.bf16.mxu0 0
        %2196 = vmatpush1.bf16.msra.mxu0 %v2178
        %2197 = vmatprep.subr.bf16.mxu0 0
        %2198 = vmatpush1.bf16.msra.mxu0 %v2179
        %2199 = vmatprep.subr.bf16.mxu0 0
        %2200 = vmatpush1.bf16.msra.mxu0 %v2180
        %2201 = vmatprep.subr.bf16.mxu0 0
        %2202 = vmatpush1.bf16.msra.mxu0 %v2181
        %2203 = vmatprep.subr.bf16.mxu0 0
        %2204 = vmatpush1.bf16.msra.mxu0 %v2182
        %2205 = vmatprep.subr.bf16.mxu0 0
        %2206 = vmatpush1.bf16.msra.mxu0 %v2183
        %2207 = vmatprep.subr.bf16.mxu0 0
        %2208 = vmatpush1.bf16.msra.mxu0 %v2184
        %2209 = vmatprep.subr.bf16.mxu0 0
        %2210 = vmatpush1.bf16.msra.mxu0 0
        %2211 = vmatprep.subr.bf16.mxu0 0
        %2212 = vmatpush1.bf16.msra.mxu0 0
        %2213 = vmatprep.subr.bf16.mxu0 0
        %2214 = vmatpush1.bf16.msra.mxu0 0
        %2215 = vmatprep.subr.bf16.mxu0 0
        %2216 = vmatpush1.bf16.msra.mxu0 0
        %2217 = vmatprep.subr.bf16.mxu0 0
        %2218 = vmatpush1.bf16.msra.mxu0 0
        %2219 = vmatprep.subr.bf16.mxu0 0
        %2220 = vmatpush1.bf16.msra.mxu0 0
        %2221 = vmatprep.subr.bf16.mxu0 0
        %2222 = vmatpush1.bf16.msra.mxu0 0
        %2223 = vmatprep.subr.bf16.mxu0 0
        %2224 = vmatpush1.bf16.msra.mxu0 0
        %2225 = vmatprep.mubr.bf16.mxu0 0
        %2226 = vmatmul.mubr.bf16.gmra.mrb[0].mxu0 %v1548
        %v2227 = vpop.f32.mrb[0].mxu0
        %v2228 = vadd.f32 0.0, %v2227
        %v2229 = vpop.f32.mrb[0].mxu0
        %v2230 = vpop.f32.mrb[0].mxu0
        %v2231 = vadd.f32 0.0, %v2230
        %v2232 = vpop.f32.mrb[0].mxu0
        %2233 = vmatprep.mubr.bf16.mxu0 0
        %2234 = vmatmul.mubr.bf16.gmra.mrb[0].mxu0 %v1551
        %v2235 = vpop.f32.mrb[0].mxu0
        %v2236 = vadd.f32 0.0, %v2235
        %v2237 = vpop.f32.mrb[0].mxu0
        %v2238 = vpop.f32.mrb[0].mxu0
        %v2239 = vadd.f32 0.0, %v2238
        %v2240 = vpop.f32.mrb[0].mxu0
        %2241 = vmatprep.mubr.bf16.mxu0 0
        %2242 = vmatmul.mubr.bf16.gmra.mrb[0].mxu0 %v1554
        %v2243 = vpop.f32.mrb[0].mxu0
        %v2244 = vadd.f32 0.0, %v2243
        %v2245 = vpop.f32.mrb[0].mxu0
        %v2246 = vpop.f32.mrb[0].mxu0
        %v2247 = vadd.f32 0.0, %v2246
        %v2248 = vpop.f32.mrb[0].mxu0
        %2249 = vmatprep.mubr.bf16.mxu0 0
        %2250 = vmatmul.mubr.bf16.gmra.mrb[0].mxu0 %v1557
        %v2251 = vpop.f32.mrb[0].mxu0
        %v2252 = vadd.f32 0.0, %v2251
        %v2253 = vpop.f32.mrb[0].mxu0
        %v2254 = vpop.f32.mrb[0].mxu0
        %v2255 = vadd.f32 0.0, %v2254
        %v2256 = vpop.f32.mrb[0].mxu0
        %2257 = vmatprep.mubr.bf16.mxu0 0
        %2258 = vmatmul.mubr.bf16.gmra.mrb[0].mxu0 %v1560
        %v2259 = vpop.f32.mrb[0].mxu0
        %v2260 = vadd.f32 0.0, %v2259
        %v2261 = vpop.f32.mrb[0].mxu0
        %v2262 = vpop.f32.mrb[0].mxu0
        %v2263 = vadd.f32 0.0, %v2262
        %v2264 = vpop.f32.mrb[0].mxu0
        %2265 = vmatprep.mubr.bf16.mxu0 0
        %2266 = vmatmul.mubr.bf16.gmra.mrb[0].mxu0 %v1563
        %v2267 = vpop.f32.mrb[0].mxu0
        %v2268 = vadd.f32 0.0, %v2267
        %v2269 = vpop.f32.mrb[0].mxu0
        %v2270 = vpop.f32.mrb[0].mxu0
        %v2271 = vadd.f32 0.0, %v2270
        %v2272 = vpop.f32.mrb[0].mxu0
        %2273 = vmatprep.mubr.bf16.mxu0 0
        %2274 = vmatmul.mubr.bf16.gmra.mrb[0].mxu0 %v1566
        %v2275 = vpop.f32.mrb[0].mxu0
        %v2276 = vadd.f32 0.0, %v2275
        %v2277 = vpop.f32.mrb[0].mxu0
        %v2278 = vpop.f32.mrb[0].mxu0
        %v2279 = vadd.f32 0.0, %v2278
        %v2280 = vpop.f32.mrb[0].mxu0
        %2281 = vmatprep.mubr.bf16.mxu0 0
        %2282 = vmatmul.mubr.bf16.gmra.mrb[0].mxu0 %v2126
        %v2283 = vpop.f32.mrb[0].mxu0
        %v2284 = vadd.f32 0.0, %v2283
        %v2285 = vpop.f32.mrb[0].mxu0
        %v2286 = vpop.f32.mrb[0].mxu0
        %v2287 = vadd.f32 0.0, %v2286
        %v2288 = vpop.f32.mrb[0].mxu0
        %2289 = vdwg.mxu0
        %v2290 = vadd.f32 %v2106, %v2228
        %v2291 = vadd.f32 %v2107, %v2231
        %v2292 = vadd.f32 %v2108, %v2236
        %v2293 = vadd.f32 %v2109, %v2239
        %v2294 = vadd.f32 %v2110, %v2244
        %v2295 = vadd.f32 %v2111, %v2247
        %v2296 = vadd.f32 %v2112, %v2252
        %v2297 = vadd.f32 %v2113, %v2255
        %v2298 = vadd.f32 %v2114, %v2260
        %v2299 = vadd.f32 %v2115, %v2263
        %v2300 = vadd.f32 %v2116, %v2268
        %v2301 = vadd.f32 %v2117, %v2271
        %v2302 = vadd.f32 %v2118, %v2276
        %v2303 = vadd.f32 %v2119, %v2279
        %v2304 = vadd.f32 %v2120, %v2284
        %v2305 = vadd.f32 %v2121, %v2287
        %s2306 = scalar_lea.vmem [#allocation7], 384
        %v2307 = vld [vmem:[%s2306] sm:$0xf]
        %v2308 = vld [vmem:[%s2306 + $0x4] sm:$0xf]
        %v2309 = vld [vmem:[%s2306 + $0x8] sm:$0xf]
        %v2310 = vld [vmem:[%s2306 + $0xc] sm:$0xf]
        %v2311 = vld [vmem:[%s2306 + $0x10] sm:$0xf]
        %v2312 = vld [vmem:[%s2306 + $0x14] sm:$0xf]
        %v2313 = vld [vmem:[%s2306 + $0x18] sm:$0xf]
        %v2314 = vld [vmem:[%s2306 + $0x1c] sm:$0xf]
        %v2315 = vld [vmem:[%s2306 + $0x20] sm:$0xf]
        %v2316 = vld [vmem:[%s2306 + $0x24] sm:$0xf]
        %v2317 = vld [vmem:[%s2306 + $0x28] sm:$0xf]
        %v2318 = vld [vmem:[%s2306 + $0x2c] sm:$0xf]
        %v2319 = vld [vmem:[%s2306 + $0x30] sm:$0xf]
        %v2320 = vld [vmem:[%s2306 + $0x34] sm:$0xf]
        %v2321 = vld [vmem:[%s2306 + $0x38] sm:$0xf]
        %v2322 = vld [vmem:[%s2306 + $0x3c] sm:$0xf]
        %v2339 = vunpack.c.l.b16 %v2307
        %v2340 = vunpack.c.l.b16 %v2308
        %v2341 = vunpack.c.l.b16 %v2309
        %v2342 = vunpack.c.l.b16 %v2310
        %v2343 = vunpack.c.l.b16 %v2311
        %v2344 = vunpack.c.l.b16 %v2312
        %v2345 = vunpack.c.l.b16 %v2313
        %v2346 = vunpack.c.l.b16 %v2314
        %v2347 = vunpack.c.l.b16 %v2315
        %v2348 = vunpack.c.l.b16 %v2316
        %v2349 = vunpack.c.l.b16 %v2317
        %v2350 = vunpack.c.l.b16 %v2318
        %v2351 = vunpack.c.l.b16 %v2319
        %v2352 = vunpack.c.l.b16 %v2320
        %v2353 = vunpack.c.l.b16 %v2321
        %v2354 = vunpack.c.l.b16 %v2322
        %v2355 = vpack.c.b16 %v2340, %v2339
        %v2356 = vpack.c.b16 %v2342, %v2341
        %v2357 = vpack.c.b16 %v2344, %v2343
        %v2358 = vpack.c.b16 %v2346, %v2345
        %v2359 = vpack.c.b16 %v2348, %v2347
        %v2360 = vpack.c.b16 %v2350, %v2349
        %v2361 = vpack.c.b16 %v2352, %v2351
        %v2362 = vpack.c.b16 %v2354, %v2353
        %2371 = vmatprep.subr.bf16.mxu0 0
        %2372 = vmatpush1.bf16.msra.mxu0 %v2355
        %2373 = vmatprep.subr.bf16.mxu0 0
        %2374 = vmatpush1.bf16.msra.mxu0 %v2356
        %2375 = vmatprep.subr.bf16.mxu0 0
        %2376 = vmatpush1.bf16.msra.mxu0 %v2357
        %2377 = vmatprep.subr.bf16.mxu0 0
        %2378 = vmatpush1.bf16.msra.mxu0 %v2358
        %2379 = vmatprep.subr.bf16.mxu0 0
        %2380 = vmatpush1.bf16.msra.mxu0 %v2359
        %2381 = vmatprep.subr.bf16.mxu0 0
        %2382 = vmatpush1.bf16.msra.mxu0 %v2360
        %2383 = vmatprep.subr.bf16.mxu0 0
        %2384 = vmatpush1.bf16.msra.mxu0 %v2361
        %2385 = vmatprep.subr.bf16.mxu0 0
        %2386 = vmatpush1.bf16.msra.mxu0 %v2362
        %2387 = vmatprep.subr.bf16.mxu0 0
        %2388 = vmatpush1.bf16.msra.mxu0 0
        %2389 = vmatprep.subr.bf16.mxu0 0
        %2390 = vmatpush1.bf16.msra.mxu0 0
        %2391 = vmatprep.subr.bf16.mxu0 0
        %2392 = vmatpush1.bf16.msra.mxu0 0
        %2393 = vmatprep.subr.bf16.mxu0 0
        %2394 = vmatpush1.bf16.msra.mxu0 0
        %2395 = vmatprep.subr.bf16.mxu0 0
        %2396 = vmatpush1.bf16.msra.mxu0 0
        %2397 = vmatprep.subr.bf16.mxu0 0
        %2398 = vmatpush1.bf16.msra.mxu0 0
        %2399 = vmatprep.subr.bf16.mxu0 0
        %2400 = vmatpush1.bf16.msra.mxu0 0
        %2401 = vmatprep.subr.bf16.mxu0 0
        %2402 = vmatpush1.bf16.msra.mxu0 0
        %2403 = vmatprep.mubr.bf16.mxu0 0
        %2404 = vmatmul.mubr.bf16.gmra.mrb[0].mxu0 %v1082
        %v2405 = vpop.f32.mrb[0].mxu0
        %v2406 = vadd.f32 0.0, %v2405
        %v2407 = vpop.f32.mrb[0].mxu0
        %v2408 = vpop.f32.mrb[0].mxu0
        %v2409 = vadd.f32 0.0, %v2408
        %v2410 = vpop.f32.mrb[0].mxu0
        %2411 = vmatprep.mubr.bf16.mxu0 0
        %2412 = vmatmul.mubr.bf16.gmra.mrb[0].mxu0 %v1084
        %v2413 = vpop.f32.mrb[0].mxu0
        %v2414 = vadd.f32 0.0, %v2413
        %v2415 = vpop.f32.mrb[0].mxu0
        %v2416 = vpop.f32.mrb[0].mxu0
        %v2417 = vadd.f32 0.0, %v2416
        %v2418 = vpop.f32.mrb[0].mxu0
        %2419 = vmatprep.mubr.bf16.mxu0 0
        %2420 = vmatmul.mubr.bf16.gmra.mrb[0].mxu0 %v1086
        %v2421 = vpop.f32.mrb[0].mxu0
        %v2422 = vadd.f32 0.0, %v2421
        %v2423 = vpop.f32.mrb[0].mxu0
        %v2424 = vpop.f32.mrb[0].mxu0
        %v2425 = vadd.f32 0.0, %v2424
        %v2426 = vpop.f32.mrb[0].mxu0
        %2427 = vmatprep.mubr.bf16.mxu0 0
        %2428 = vmatmul.mubr.bf16.gmra.mrb[0].mxu0 %v1088
        %v2429 = vpop.f32.mrb[0].mxu0
        %v2430 = vadd.f32 0.0, %v2429
        %v2431 = vpop.f32.mrb[0].mxu0
        %v2432 = vpop.f32.mrb[0].mxu0
        %v2433 = vadd.f32 0.0, %v2432
        %v2434 = vpop.f32.mrb[0].mxu0
        %2435 = vmatprep.mubr.bf16.mxu0 0
        %2436 = vmatmul.mubr.bf16.gmra.mrb[0].mxu0 %v1090
        %v2437 = vpop.f32.mrb[0].mxu0
        %v2438 = vadd.f32 0.0, %v2437
        %v2439 = vpop.f32.mrb[0].mxu0
        %v2440 = vpop.f32.mrb[0].mxu0
        %v2441 = vadd.f32 0.0, %v2440
        %v2442 = vpop.f32.mrb[0].mxu0
        %2443 = vmatprep.mubr.bf16.mxu0 0
        %2444 = vmatmul.mubr.bf16.gmra.mrb[0].mxu0 %v1092
        %v2445 = vpop.f32.mrb[0].mxu0
        %v2446 = vadd.f32 0.0, %v2445
        %v2447 = vpop.f32.mrb[0].mxu0
        %v2448 = vpop.f32.mrb[0].mxu0
        %v2449 = vadd.f32 0.0, %v2448
        %v2450 = vpop.f32.mrb[0].mxu0
        %2451 = vmatprep.mubr.bf16.mxu0 0
        %2452 = vmatmul.mubr.bf16.gmra.mrb[0].mxu0 %v1094
        %v2453 = vpop.f32.mrb[0].mxu0
        %v2454 = vadd.f32 0.0, %v2453
        %v2455 = vpop.f32.mrb[0].mxu0
        %v2456 = vpop.f32.mrb[0].mxu0
        %v2457 = vadd.f32 0.0, %v2456
        %v2458 = vpop.f32.mrb[0].mxu0
        %2459 = vmatprep.mubr.bf16.mxu0 0
        %2460 = vmatmul.mubr.bf16.gmra.mrb[0].mxu0 %v1096
        %v2461 = vpop.f32.mrb[0].mxu0
        %v2462 = vadd.f32 0.0, %v2461
        %v2463 = vpop.f32.mrb[0].mxu0
        %v2464 = vpop.f32.mrb[0].mxu0
        %v2465 = vadd.f32 0.0, %v2464
        %v2466 = vpop.f32.mrb[0].mxu0
        %2467 = vdwg.mxu0
        %v2468 = vadd.f32 %v2290, %v2406
        %v2469 = vadd.f32 %v2291, %v2409
        %v2470 = vadd.f32 %v2292, %v2414
        %v2471 = vadd.f32 %v2293, %v2417
        %v2472 = vadd.f32 %v2294, %v2422
        %v2473 = vadd.f32 %v2295, %v2425
        %v2474 = vadd.f32 %v2296, %v2430
        %v2475 = vadd.f32 %v2297, %v2433
        %v2476 = vadd.f32 %v2298, %v2438
        %v2477 = vadd.f32 %v2299, %v2441
        %v2478 = vadd.f32 %v2300, %v2446
        %v2479 = vadd.f32 %v2301, %v2449
        %v2480 = vadd.f32 %v2302, %v2454
        %v2481 = vadd.f32 %v2303, %v2457
        %v2482 = vadd.f32 %v2304, %v2462
        %v2483 = vadd.f32 %v2305, %v2465
        %v2485 = vshrl.u32 %v1096, 16
        %v2487 = vshll.u32 %v1096, 16
        %v2489 = vrot.slane %v2487, 1
        %v2490 = vor.u32 %v2485, %v2489
        %v2492 = vshll.u32 %v1097, 16
        %v2494 = vrot.slane %v2492, 1
        %v2495 = vsel %vm1114, %v2490, %v2494
        %s2497 = scalar_lea.vmem [#allocation7], 448
        %v2498 = vld [vmem:[%s2497] sm:$0xf]
        %v2499 = vld [vmem:[%s2497 + $0x4] sm:$0xf]
        %v2500 = vld [vmem:[%s2497 + $0x8] sm:$0xf]
        %v2501 = vld [vmem:[%s2497 + $0xc] sm:$0xf]
        %v2502 = vld [vmem:[%s2497 + $0x10] sm:$0xf]
        %v2503 = vld [vmem:[%s2497 + $0x14] sm:$0xf]
        %v2504 = vld [vmem:[%s2497 + $0x18] sm:$0xf]
        %v2505 = vld [vmem:[%s2497 + $0x1c] sm:$0xf]
        %v2506 = vld [vmem:[%s2497 + $0x20] sm:$0xf]
        %v2507 = vld [vmem:[%s2497 + $0x24] sm:$0xf]
        %v2508 = vld [vmem:[%s2497 + $0x28] sm:$0xf]
        %v2509 = vld [vmem:[%s2497 + $0x2c] sm:$0xf]
        %v2510 = vld [vmem:[%s2497 + $0x30] sm:$0xf]
        %v2511 = vld [vmem:[%s2497 + $0x34] sm:$0xf]
        %v2512 = vld [vmem:[%s2497 + $0x38] sm:$0xf]
        %v2513 = vld [vmem:[%s2497 + $0x3c] sm:$0xf]
        %v2530 = vunpack.c.l.b16 %v2498
        %v2531 = vunpack.c.l.b16 %v2499
        %v2532 = vunpack.c.l.b16 %v2500
        %v2533 = vunpack.c.l.b16 %v2501
        %v2534 = vunpack.c.l.b16 %v2502
        %v2535 = vunpack.c.l.b16 %v2503
        %v2536 = vunpack.c.l.b16 %v2504
        %v2537 = vunpack.c.l.b16 %v2505
        %v2538 = vunpack.c.l.b16 %v2506
        %v2539 = vunpack.c.l.b16 %v2507
        %v2540 = vunpack.c.l.b16 %v2508
        %v2541 = vunpack.c.l.b16 %v2509
        %v2542 = vunpack.c.l.b16 %v2510
        %v2543 = vunpack.c.l.b16 %v2511
        %v2544 = vunpack.c.l.b16 %v2512
        %v2545 = vunpack.c.l.b16 %v2513
        %v2546 = vpack.c.b16 %v2531, %v2530
        %v2547 = vpack.c.b16 %v2533, %v2532
        %v2548 = vpack.c.b16 %v2535, %v2534
        %v2549 = vpack.c.b16 %v2537, %v2536
        %v2550 = vpack.c.b16 %v2539, %v2538
        %v2551 = vpack.c.b16 %v2541, %v2540
        %v2552 = vpack.c.b16 %v2543, %v2542
        %v2553 = vpack.c.b16 %v2545, %v2544
        %2562 = vmatprep.subr.bf16.mxu0 0
        %2563 = vmatpush1.bf16.msra.mxu0 %v2546
        %2564 = vmatprep.subr.bf16.mxu0 0
        %2565 = vmatpush1.bf16.msra.mxu0 %v2547
        %2566 = vmatprep.subr.bf16.mxu0 0
        %2567 = vmatpush1.bf16.msra.mxu0 %v2548
        %2568 = vmatprep.subr.bf16.mxu0 0
        %2569 = vmatpush1.bf16.msra.mxu0 %v2549
        %2570 = vmatprep.subr.bf16.mxu0 0
        %2571 = vmatpush1.bf16.msra.mxu0 %v2550
        %2572 = vmatprep.subr.bf16.mxu0 0
        %2573 = vmatpush1.bf16.msra.mxu0 %v2551
        %2574 = vmatprep.subr.bf16.mxu0 0
        %2575 = vmatpush1.bf16.msra.mxu0 %v2552
        %2576 = vmatprep.subr.bf16.mxu0 0
        %2577 = vmatpush1.bf16.msra.mxu0 %v2553
        %2578 = vmatprep.subr.bf16.mxu0 0
        %2579 = vmatpush1.bf16.msra.mxu0 0
        %2580 = vmatprep.subr.bf16.mxu0 0
        %2581 = vmatpush1.bf16.msra.mxu0 0
        %2582 = vmatprep.subr.bf16.mxu0 0
        %2583 = vmatpush1.bf16.msra.mxu0 0
        %2584 = vmatprep.subr.bf16.mxu0 0
        %2585 = vmatpush1.bf16.msra.mxu0 0
        %2586 = vmatprep.subr.bf16.mxu0 0
        %2587 = vmatpush1.bf16.msra.mxu0 0
        %2588 = vmatprep.subr.bf16.mxu0 0
        %2589 = vmatpush1.bf16.msra.mxu0 0
        %2590 = vmatprep.subr.bf16.mxu0 0
        %2591 = vmatpush1.bf16.msra.mxu0 0
        %2592 = vmatprep.subr.bf16.mxu0 0
        %2593 = vmatpush1.bf16.msra.mxu0 0
        %2594 = vmatprep.mubr.bf16.mxu0 0
        %2595 = vmatmul.mubr.bf16.gmra.mrb[0].mxu0 %v1150
        %v2596 = vpop.f32.mrb[0].mxu0
        %v2597 = vadd.f32 0.0, %v2596
        %v2598 = vpop.f32.mrb[0].mxu0
        %v2599 = vpop.f32.mrb[0].mxu0
        %v2600 = vadd.f32 0.0, %v2599
        %v2601 = vpop.f32.mrb[0].mxu0
        %2602 = vmatprep.mubr.bf16.mxu0 0
        %2603 = vmatmul.mubr.bf16.gmra.mrb[0].mxu0 %v1162
        %v2604 = vpop.f32.mrb[0].mxu0
        %v2605 = vadd.f32 0.0, %v2604
        %v2606 = vpop.f32.mrb[0].mxu0
        %v2607 = vpop.f32.mrb[0].mxu0
        %v2608 = vadd.f32 0.0, %v2607
        %v2609 = vpop.f32.mrb[0].mxu0
        %2610 = vmatprep.mubr.bf16.mxu0 0
        %2611 = vmatmul.mubr.bf16.gmra.mrb[0].mxu0 %v1174
        %v2612 = vpop.f32.mrb[0].mxu0
        %v2613 = vadd.f32 0.0, %v2612
        %v2614 = vpop.f32.mrb[0].mxu0
        %v2615 = vpop.f32.mrb[0].mxu0
        %v2616 = vadd.f32 0.0, %v2615
        %v2617 = vpop.f32.mrb[0].mxu0
        %2618 = vmatprep.mubr.bf16.mxu0 0
        %2619 = vmatmul.mubr.bf16.gmra.mrb[0].mxu0 %v1186
        %v2620 = vpop.f32.mrb[0].mxu0
        %v2621 = vadd.f32 0.0, %v2620
        %v2622 = vpop.f32.mrb[0].mxu0
        %v2623 = vpop.f32.mrb[0].mxu0
        %v2624 = vadd.f32 0.0, %v2623
        %v2625 = vpop.f32.mrb[0].mxu0
        %2626 = vmatprep.mubr.bf16.mxu0 0
        %2627 = vmatmul.mubr.bf16.gmra.mrb[0].mxu0 %v1198
        %v2628 = vpop.f32.mrb[0].mxu0
        %v2629 = vadd.f32 0.0, %v2628
        %v2630 = vpop.f32.mrb[0].mxu0
        %v2631 = vpop.f32.mrb[0].mxu0
        %v2632 = vadd.f32 0.0, %v2631
        %v2633 = vpop.f32.mrb[0].mxu0
        %2634 = vmatprep.mubr.bf16.mxu0 0
        %2635 = vmatmul.mubr.bf16.gmra.mrb[0].mxu0 %v1210
        %v2636 = vpop.f32.mrb[0].mxu0
        %v2637 = vadd.f32 0.0, %v2636
        %v2638 = vpop.f32.mrb[0].mxu0
        %v2639 = vpop.f32.mrb[0].mxu0
        %v2640 = vadd.f32 0.0, %v2639
        %v2641 = vpop.f32.mrb[0].mxu0
        %2642 = vmatprep.mubr.bf16.mxu0 0
        %2643 = vmatmul.mubr.bf16.gmra.mrb[0].mxu0 %v1942
        %v2644 = vpop.f32.mrb[0].mxu0
        %v2645 = vadd.f32 0.0, %v2644
        %v2646 = vpop.f32.mrb[0].mxu0
        %v2647 = vpop.f32.mrb[0].mxu0
        %v2648 = vadd.f32 0.0, %v2647
        %v2649 = vpop.f32.mrb[0].mxu0
        %2650 = vmatprep.mubr.bf16.mxu0 0
        %2651 = vmatmul.mubr.bf16.gmra.mrb[0].mxu0 %v2495
        %v2652 = vpop.f32.mrb[0].mxu0
        %v2653 = vadd.f32 0.0, %v2652
        %v2654 = vpop.f32.mrb[0].mxu0
        %v2655 = vpop.f32.mrb[0].mxu0
        %v2656 = vadd.f32 0.0, %v2655
        %v2657 = vpop.f32.mrb[0].mxu0
        %2658 = vdwg.mxu0
        %v2659 = vadd.f32 %v2468, %v2597
        %v2660 = vadd.f32 %v2469, %v2600
        %v2661 = vadd.f32 %v2470, %v2605
        %v2662 = vadd.f32 %v2471, %v2608
        %v2663 = vadd.f32 %v2472, %v2613
        %v2664 = vadd.f32 %v2473, %v2616
        %v2665 = vadd.f32 %v2474, %v2621
        %v2666 = vadd.f32 %v2475, %v2624
        %v2667 = vadd.f32 %v2476, %v2629
        %v2668 = vadd.f32 %v2477, %v2632
        %v2669 = vadd.f32 %v2478, %v2637
        %v2670 = vadd.f32 %v2479, %v2640
        %v2671 = vadd.f32 %v2480, %v2645
        %v2672 = vadd.f32 %v2481, %v2648
        %v2673 = vadd.f32 %v2482, %v2653
        %v2674 = vadd.f32 %v2483, %v2656
        %v2677 = vrot.slane %v1096, 1
        %v2678 = vrot.slane %v1097, 1
        %v2679 = vsel %vm1542, %v2677, %v2678
        %s2681 = scalar_lea.vmem [#allocation7], 512
        %v2682 = vld [vmem:[%s2681] sm:$0xf]
        %v2683 = vld [vmem:[%s2681 + $0x4] sm:$0xf]
        %v2684 = vld [vmem:[%s2681 + $0x8] sm:$0xf]
        %v2685 = vld [vmem:[%s2681 + $0xc] sm:$0xf]
        %v2686 = vld [vmem:[%s2681 + $0x10] sm:$0xf]
        %v2687 = vld [vmem:[%s2681 + $0x14] sm:$0xf]
        %v2688 = vld [vmem:[%s2681 + $0x18] sm:$0xf]
        %v2689 = vld [vmem:[%s2681 + $0x1c] sm:$0xf]
        %v2690 = vld [vmem:[%s2681 + $0x20] sm:$0xf]
        %v2691 = vld [vmem:[%s2681 + $0x24] sm:$0xf]
        %v2692 = vld [vmem:[%s2681 + $0x28] sm:$0xf]
        %v2693 = vld [vmem:[%s2681 + $0x2c] sm:$0xf]
        %v2694 = vld [vmem:[%s2681 + $0x30] sm:$0xf]
        %v2695 = vld [vmem:[%s2681 + $0x34] sm:$0xf]
        %v2696 = vld [vmem:[%s2681 + $0x38] sm:$0xf]
        %v2697 = vld [vmem:[%s2681 + $0x3c] sm:$0xf]
        %v2714 = vunpack.c.l.b16 %v2682
        %v2715 = vunpack.c.l.b16 %v2683
        %v2716 = vunpack.c.l.b16 %v2684
        %v2717 = vunpack.c.l.b16 %v2685
        %v2718 = vunpack.c.l.b16 %v2686
        %v2719 = vunpack.c.l.b16 %v2687
        %v2720 = vunpack.c.l.b16 %v2688
        %v2721 = vunpack.c.l.b16 %v2689
        %v2722 = vunpack.c.l.b16 %v2690
        %v2723 = vunpack.c.l.b16 %v2691
        %v2724 = vunpack.c.l.b16 %v2692
        %v2725 = vunpack.c.l.b16 %v2693
        %v2726 = vunpack.c.l.b16 %v2694
        %v2727 = vunpack.c.l.b16 %v2695
        %v2728 = vunpack.c.l.b16 %v2696
        %v2729 = vunpack.c.l.b16 %v2697
        %v2730 = vpack.c.b16 %v2715, %v2714
        %v2731 = vpack.c.b16 %v2717, %v2716
        %v2732 = vpack.c.b16 %v2719, %v2718
        %v2733 = vpack.c.b16 %v2721, %v2720
        %v2734 = vpack.c.b16 %v2723, %v2722
        %v2735 = vpack.c.b16 %v2725, %v2724
        %v2736 = vpack.c.b16 %v2727, %v2726
        %v2737 = vpack.c.b16 %v2729, %v2728
        %2746 = vmatprep.subr.bf16.mxu0 0
        %2747 = vmatpush1.bf16.msra.mxu0 %v2730
        %2748 = vmatprep.subr.bf16.mxu0 0
        %2749 = vmatpush1.bf16.msra.mxu0 %v2731
        %2750 = vmatprep.subr.bf16.mxu0 0
        %2751 = vmatpush1.bf16.msra.mxu0 %v2732
        %2752 = vmatprep.subr.bf16.mxu0 0
        %2753 = vmatpush1.bf16.msra.mxu0 %v2733
        %2754 = vmatprep.subr.bf16.mxu0 0
        %2755 = vmatpush1.bf16.msra.mxu0 %v2734
        %2756 = vmatprep.subr.bf16.mxu0 0
        %2757 = vmatpush1.bf16.msra.mxu0 %v2735
        %2758 = vmatprep.subr.bf16.mxu0 0
        %2759 = vmatpush1.bf16.msra.mxu0 %v2736
        %2760 = vmatprep.subr.bf16.mxu0 0
        %2761 = vmatpush1.bf16.msra.mxu0 %v2737
        %2762 = vmatprep.subr.bf16.mxu0 0
        %2763 = vmatpush1.bf16.msra.mxu0 0
        %2764 = vmatprep.subr.bf16.mxu0 0
        %2765 = vmatpush1.bf16.msra.mxu0 0
        %2766 = vmatprep.subr.bf16.mxu0 0
        %2767 = vmatpush1.bf16.msra.mxu0 0
        %2768 = vmatprep.subr.bf16.mxu0 0
        %2769 = vmatpush1.bf16.msra.mxu0 0
        %2770 = vmatprep.subr.bf16.mxu0 0
        %2771 = vmatpush1.bf16.msra.mxu0 0
        %2772 = vmatprep.subr.bf16.mxu0 0
        %2773 = vmatpush1.bf16.msra.mxu0 0
        %2774 = vmatprep.subr.bf16.mxu0 0
        %2775 = vmatpush1.bf16.msra.mxu0 0
        %2776 = vmatprep.subr.bf16.mxu0 0
        %2777 = vmatpush1.bf16.msra.mxu0 0
        %2778 = vmatprep.mubr.bf16.mxu0 0
        %2779 = vmatmul.mubr.bf16.gmra.mrb[0].mxu0 %v1551
        %v2780 = vpop.f32.mrb[0].mxu0
        %v2781 = vadd.f32 0.0, %v2780
        %v2782 = vpop.f32.mrb[0].mxu0
        %v2783 = vpop.f32.mrb[0].mxu0
        %v2784 = vadd.f32 0.0, %v2783
        %v2785 = vpop.f32.mrb[0].mxu0
        %2786 = vmatprep.mubr.bf16.mxu0 0
        %2787 = vmatmul.mubr.bf16.gmra.mrb[0].mxu0 %v1554
        %v2788 = vpop.f32.mrb[0].mxu0
        %v2789 = vadd.f32 0.0, %v2788
        %v2790 = vpop.f32.mrb[0].mxu0
        %v2791 = vpop.f32.mrb[0].mxu0
        %v2792 = vadd.f32 0.0, %v2791
        %v2793 = vpop.f32.mrb[0].mxu0
        %2794 = vmatprep.mubr.bf16.mxu0 0
        %2795 = vmatmul.mubr.bf16.gmra.mrb[0].mxu0 %v1557
        %v2796 = vpop.f32.mrb[0].mxu0
        %v2797 = vadd.f32 0.0, %v2796
        %v2798 = vpop.f32.mrb[0].mxu0
        %v2799 = vpop.f32.mrb[0].mxu0
        %v2800 = vadd.f32 0.0, %v2799
        %v2801 = vpop.f32.mrb[0].mxu0
        %2802 = vmatprep.mubr.bf16.mxu0 0
        %2803 = vmatmul.mubr.bf16.gmra.mrb[0].mxu0 %v1560
        %v2804 = vpop.f32.mrb[0].mxu0
        %v2805 = vadd.f32 0.0, %v2804
        %v2806 = vpop.f32.mrb[0].mxu0
        %v2807 = vpop.f32.mrb[0].mxu0
        %v2808 = vadd.f32 0.0, %v2807
        %v2809 = vpop.f32.mrb[0].mxu0
        %2810 = vmatprep.mubr.bf16.mxu0 0
        %2811 = vmatmul.mubr.bf16.gmra.mrb[0].mxu0 %v1563
        %v2812 = vpop.f32.mrb[0].mxu0
        %v2813 = vadd.f32 0.0, %v2812
        %v2814 = vpop.f32.mrb[0].mxu0
        %v2815 = vpop.f32.mrb[0].mxu0
        %v2816 = vadd.f32 0.0, %v2815
        %v2817 = vpop.f32.mrb[0].mxu0
        %2818 = vmatprep.mubr.bf16.mxu0 0
        %2819 = vmatmul.mubr.bf16.gmra.mrb[0].mxu0 %v1566
        %v2820 = vpop.f32.mrb[0].mxu0
        %v2821 = vadd.f32 0.0, %v2820
        %v2822 = vpop.f32.mrb[0].mxu0
        %v2823 = vpop.f32.mrb[0].mxu0
        %v2824 = vadd.f32 0.0, %v2823
        %v2825 = vpop.f32.mrb[0].mxu0
        %2826 = vmatprep.mubr.bf16.mxu0 0
        %2827 = vmatmul.mubr.bf16.gmra.mrb[0].mxu0 %v2126
        %v2828 = vpop.f32.mrb[0].mxu0
        %v2829 = vadd.f32 0.0, %v2828
        %v2830 = vpop.f32.mrb[0].mxu0
        %v2831 = vpop.f32.mrb[0].mxu0
        %v2832 = vadd.f32 0.0, %v2831
        %v2833 = vpop.f32.mrb[0].mxu0
        %2834 = vmatprep.mubr.bf16.mxu0 0
        %2835 = vmatmul.mubr.bf16.gmra.mrb[0].mxu0 %v2679
        %v2836 = vpop.f32.mrb[0].mxu0
        %v2837 = vadd.f32 0.0, %v2836
        %v2838 = vpop.f32.mrb[0].mxu0
        %v2839 = vpop.f32.mrb[0].mxu0
        %v2840 = vadd.f32 0.0, %v2839
        %v2841 = vpop.f32.mrb[0].mxu0
        %2842 = vdwg.mxu0
        %v2843 = vadd.f32 %v2659, %v2781
        %v2844 = vadd.f32 %v2660, %v2784
        %v2845 = vadd.f32 %v2661, %v2789
        %v2846 = vadd.f32 %v2662, %v2792
        %v2847 = vadd.f32 %v2663, %v2797
        %v2848 = vadd.f32 %v2664, %v2800
        %v2849 = vadd.f32 %v2665, %v2805
        %v2850 = vadd.f32 %v2666, %v2808
        %v2851 = vadd.f32 %v2667, %v2813
        %v2852 = vadd.f32 %v2668, %v2816
        %v2853 = vadd.f32 %v2669, %v2821
        %v2854 = vadd.f32 %v2670, %v2824
        %v2855 = vadd.f32 %v2671, %v2829
        %v2856 = vadd.f32 %v2672, %v2832
        %v2857 = vadd.f32 %v2673, %v2837
        %v2858 = vadd.f32 %v2674, %v2840
        %v2859 = vld [vmem:[%s4] sm:$0x1]
        %v2861 = vlaneseq
        %v2862 = vshrl.u32 %v2861, 7
        %v2863 = vsub.s32 0, %v2862
        %v2864 = vrot.slane %v2859, %v2863
        %v2866 = vadd.f32 %v2843, %v2864
        %v2867 = vadd.f32 %v2844, %v2864
        %v2868 = vadd.f32 %v2845, %v2864
        %v2869 = vadd.f32 %v2846, %v2864
        %v2870 = vadd.f32 %v2847, %v2864
        %v2871 = vadd.f32 %v2848, %v2864
        %v2872 = vadd.f32 %v2849, %v2864
        %v2873 = vadd.f32 %v2850, %v2864
        %v2874 = vadd.f32 %v2851, %v2864
        %v2875 = vadd.f32 %v2852, %v2864
        %v2876 = vadd.f32 %v2853, %v2864
        %v2877 = vadd.f32 %v2854, %v2864
        %v2878 = vadd.f32 %v2855, %v2864
        %v2879 = vadd.f32 %v2856, %v2864
        %v2880 = vadd.f32 %v2857, %v2864
        %v2881 = vadd.f32 %v2858, %v2864
        %v2882 = vmax.f32 %v2866, 0.0
        %v2883 = vmax.f32 %v2867, 0.0
        %v2884 = vmax.f32 %v2868, 0.0
        %v2885 = vmax.f32 %v2869, 0.0
        %v2886 = vmax.f32 %v2870, 0.0
        %v2887 = vmax.f32 %v2871, 0.0
        %v2888 = vmax.f32 %v2872, 0.0
        %v2889 = vmax.f32 %v2873, 0.0
        %v2890 = vmax.f32 %v2874, 0.0
        %v2891 = vmax.f32 %v2875, 0.0
        %v2892 = vmax.f32 %v2876, 0.0
        %v2893 = vmax.f32 %v2877, 0.0
        %v2894 = vmax.f32 %v2878, 0.0
        %v2895 = vmax.f32 %v2879, 0.0
        %v2896 = vmax.f32 %v2880, 0.0
        %v2897 = vmax.f32 %v2881, 0.0
        %v2898 = vpack.c.bf16 %v2883, %v2882
        %v2899 = vpack.c.bf16 %v2885, %v2884
        %v2900 = vpack.c.bf16 %v2887, %v2886
        %v2901 = vpack.c.bf16 %v2889, %v2888
        %v2902 = vpack.c.bf16 %v2891, %v2890
        %v2903 = vpack.c.bf16 %v2893, %v2892
        %v2904 = vpack.c.bf16 %v2895, %v2894
        %v2905 = vpack.c.bf16 %v2897, %v2896
        %v2906 = vld [vmem:[#allocation8] sm:$0xf]
        %v2907 = vld [vmem:[#allocation8 + $0x4] sm:$0xf]
        %v2908 = vld [vmem:[#allocation8 + $0x8] sm:$0xf]
        %v2909 = vld [vmem:[#allocation8 + $0xc] sm:$0xf]
        %v2910 = vld [vmem:[#allocation8 + $0x10] sm:$0xf]
        %v2911 = vld [vmem:[#allocation8 + $0x14] sm:$0xf]
        %v2912 = vld [vmem:[#allocation8 + $0x18] sm:$0xf]
        %v2913 = vld [vmem:[#allocation8 + $0x1c] sm:$0xf]
        %v2914 = vld [vmem:[#allocation8 + $0x20] sm:$0xf]
        %v2915 = vld [vmem:[#allocation8 + $0x24] sm:$0xf]
        %v2916 = vld [vmem:[#allocation8 + $0x28] sm:$0xf]
        %v2917 = vld [vmem:[#allocation8 + $0x2c] sm:$0xf]
        %v2918 = vld [vmem:[#allocation8 + $0x30] sm:$0xf]
        %v2919 = vld [vmem:[#allocation8 + $0x34] sm:$0xf]
        %v2920 = vld [vmem:[#allocation8 + $0x38] sm:$0xf]
        %v2921 = vld [vmem:[#allocation8 + $0x3c] sm:$0xf]
        %v2922 = vld [vmem:[%s6] sm:$0x1]
        %v2924 = vlaneseq
        %v2925 = vshrl.u32 %v2924, 7
        %v2926 = vsub.s32 0, %v2925
        %v2927 = vrot.slane %v2922, %v2926
        %v2945 = vunpack.c.l.b16 %v2906
        %v2946 = vunpack.c.l.b16 %v2907
        %v2947 = vunpack.c.l.b16 %v2908
        %v2948 = vunpack.c.l.b16 %v2909
        %v2949 = vunpack.c.l.b16 %v2910
        %v2950 = vunpack.c.l.b16 %v2911
        %v2951 = vunpack.c.l.b16 %v2912
        %v2952 = vunpack.c.l.b16 %v2913
        %v2953 = vunpack.c.l.b16 %v2914
        %v2954 = vunpack.c.l.b16 %v2915
        %v2955 = vunpack.c.l.b16 %v2916
        %v2956 = vunpack.c.l.b16 %v2917
        %v2957 = vunpack.c.l.b16 %v2918
        %v2958 = vunpack.c.l.b16 %v2919
        %v2959 = vunpack.c.l.b16 %v2920
        %v2960 = vunpack.c.l.b16 %v2921
        %v2961 = vpack.c.b16 %v2946, %v2945
        %v2962 = vpack.c.b16 %v2948, %v2947
        %v2963 = vpack.c.b16 %v2950, %v2949
        %v2964 = vpack.c.b16 %v2952, %v2951
        %v2965 = vpack.c.b16 %v2954, %v2953
        %v2966 = vpack.c.b16 %v2956, %v2955
        %v2967 = vpack.c.b16 %v2958, %v2957
        %v2968 = vpack.c.b16 %v2960, %v2959
        %2977 = vmatprep.subr.bf16.mxu0 0
        %2978 = vmatpush1.bf16.msra.mxu0 %v2961
        %2979 = vmatprep.subr.bf16.mxu0 0
        %2980 = vmatpush1.bf16.msra.mxu0 %v2962
        %2981 = vmatprep.subr.bf16.mxu0 0
        %2982 = vmatpush1.bf16.msra.mxu0 %v2963
        %2983 = vmatprep.subr.bf16.mxu0 0
        %2984 = vmatpush1.bf16.msra.mxu0 %v2964
        %2985 = vmatprep.subr.bf16.mxu0 0
        %2986 = vmatpush1.bf16.msra.mxu0 %v2965
        %2987 = vmatprep.subr.bf16.mxu0 0
        %2988 = vmatpush1.bf16.msra.mxu0 %v2966
        %2989 = vmatprep.subr.bf16.mxu0 0
        %2990 = vmatpush1.bf16.msra.mxu0 %v2967
        %2991 = vmatprep.subr.bf16.mxu0 0
        %2992 = vmatpush1.bf16.msra.mxu0 %v2968
        %2993 = vmatprep.subr.bf16.mxu0 0
        %2994 = vmatpush1.bf16.msra.mxu0 0
        %2995 = vmatprep.subr.bf16.mxu0 0
        %2996 = vmatpush1.bf16.msra.mxu0 0
        %2997 = vmatprep.subr.bf16.mxu0 0
        %2998 = vmatpush1.bf16.msra.mxu0 0
        %2999 = vmatprep.subr.bf16.mxu0 0
        %3000 = vmatpush1.bf16.msra.mxu0 0
        %3001 = vmatprep.subr.bf16.mxu0 0
        %3002 = vmatpush1.bf16.msra.mxu0 0
        %3003 = vmatprep.subr.bf16.mxu0 0
        %3004 = vmatpush1.bf16.msra.mxu0 0
        %3005 = vmatprep.subr.bf16.mxu0 0
        %3006 = vmatpush1.bf16.msra.mxu0 0
        %3007 = vmatprep.subr.bf16.mxu0 0
        %3008 = vmatpush1.bf16.msra.mxu0 0
        %3009 = vmatprep.mubr.bf16.mxu0 0
        %3010 = vmatmul.mubr.bf16.gmra.mrb[0].mxu0 %v2898
        %v3011 = vpop.f32.mrb[0].mxu0
        %v3012 = vadd.f32 %v2927, %v3011
        %v3013 = vpop.f32.mrb[0].mxu0
        %v3014 = vpop.f32.mrb[0].mxu0
        %v3015 = vadd.f32 %v2927, %v3014
        %v3016 = vpop.f32.mrb[0].mxu0
        %3017 = vmatprep.mubr.bf16.mxu0 0
        %3018 = vmatmul.mubr.bf16.gmra.mrb[0].mxu0 %v2899
        %v3019 = vpop.f32.mrb[0].mxu0
        %v3020 = vadd.f32 %v2927, %v3019
        %v3021 = vpop.f32.mrb[0].mxu0
        %v3022 = vpop.f32.mrb[0].mxu0
        %v3023 = vadd.f32 %v2927, %v3022
        %v3024 = vpop.f32.mrb[0].mxu0
        %3025 = vmatprep.mubr.bf16.mxu0 0
        %3026 = vmatmul.mubr.bf16.gmra.mrb[0].mxu0 %v2900
        %v3027 = vpop.f32.mrb[0].mxu0
        %v3028 = vadd.f32 %v2927, %v3027
        %v3029 = vpop.f32.mrb[0].mxu0
        %v3030 = vpop.f32.mrb[0].mxu0
        %v3031 = vadd.f32 %v2927, %v3030
        %v3032 = vpop.f32.mrb[0].mxu0
        %3033 = vmatprep.mubr.bf16.mxu0 0
        %3034 = vmatmul.mubr.bf16.gmra.mrb[0].mxu0 %v2901
        %v3035 = vpop.f32.mrb[0].mxu0
        %v3036 = vadd.f32 %v2927, %v3035
        %v3037 = vpop.f32.mrb[0].mxu0
        %v3038 = vpop.f32.mrb[0].mxu0
        %v3039 = vadd.f32 %v2927, %v3038
        %v3040 = vpop.f32.mrb[0].mxu0
        %3041 = vmatprep.mubr.bf16.mxu0 0
        %3042 = vmatmul.mubr.bf16.gmra.mrb[0].mxu0 %v2902
        %v3043 = vpop.f32.mrb[0].mxu0
        %v3044 = vadd.f32 %v2927, %v3043
        %v3045 = vpop.f32.mrb[0].mxu0
        %v3046 = vpop.f32.mrb[0].mxu0
        %v3047 = vadd.f32 %v2927, %v3046
        %v3048 = vpop.f32.mrb[0].mxu0
        %3049 = vmatprep.mubr.bf16.mxu0 0
        %3050 = vmatmul.mubr.bf16.gmra.mrb[0].mxu0 %v2903
        %v3051 = vpop.f32.mrb[0].mxu0
        %v3052 = vadd.f32 %v2927, %v3051
        %v3053 = vpop.f32.mrb[0].mxu0
        %v3054 = vpop.f32.mrb[0].mxu0
        %v3055 = vadd.f32 %v2927, %v3054
        %v3056 = vpop.f32.mrb[0].mxu0
        %3057 = vmatprep.mubr.bf16.mxu0 0
        %3058 = vmatmul.mubr.bf16.gmra.mrb[0].mxu0 %v2904
        %v3059 = vpop.f32.mrb[0].mxu0
        %v3060 = vadd.f32 %v2927, %v3059
        %v3061 = vpop.f32.mrb[0].mxu0
        %v3062 = vpop.f32.mrb[0].mxu0
        %v3063 = vadd.f32 %v2927, %v3062
        %v3064 = vpop.f32.mrb[0].mxu0
        %3065 = vmatprep.mubr.bf16.mxu0 0
        %3066 = vmatmul.mubr.bf16.gmra.mrb[0].mxu0 %v2905
        %v3067 = vpop.f32.mrb[0].mxu0
        %v3068 = vadd.f32 %v2927, %v3067
        %v3069 = vpop.f32.mrb[0].mxu0
        %v3070 = vpop.f32.mrb[0].mxu0
        %v3071 = vadd.f32 %v2927, %v3070
        %v3072 = vpop.f32.mrb[0].mxu0
        %3073 = vdwg.mxu0
        %s3074 = sadd.s32 %s357, 1
        %s3075 = smul.u32 %s3074, 4
        %s3076 = smul.addr %s3075, 4
        %s3077 = scalar_lea.vmem %s312, %s3076 [#allocation2]
        %v3078 = vld [vmem:[%s3077] sm:$0xf]
        %v3079 = vld [vmem:[%s3077 + $0x4] sm:$0xf]
        %v3080 = vld [vmem:[%s3077 + $0x8] sm:$0x1]
        %v3081 = vld [vmem:[%s3077 + $0x10] sm:$0xf]
        %v3082 = vld [vmem:[%s3077 + $0x14] sm:$0xf]
        %v3083 = vld [vmem:[%s3077 + $0x18] sm:$0x1]
        %v3084 = vld [vmem:[%s3077 + $0x20] sm:$0xf]
        %v3085 = vld [vmem:[%s3077 + $0x24] sm:$0xf]
        %v3086 = vld [vmem:[%s3077 + $0x28] sm:$0x1]
        %v3087 = vld [vmem:[%s3077 + $0x30] sm:$0xf]
        %v3088 = vld [vmem:[%s3077 + $0x34] sm:$0xf]
        %v3089 = vld [vmem:[%s3077 + $0x38] sm:$0x1]
        %v3090 = vld [vmem:[%s3077 + $0x40] sm:$0xf]
        %v3091 = vld [vmem:[%s3077 + $0x44] sm:$0xf]
        %v3092 = vld [vmem:[%s3077 + $0x48] sm:$0x1]
        %v3093 = vld [vmem:[%s3077 + $0x50] sm:$0xf]
        %v3094 = vld [vmem:[%s3077 + $0x54] sm:$0xf]
        %v3095 = vld [vmem:[%s3077 + $0x58] sm:$0x1]
        %v3096 = vld [vmem:[%s3077 + $0x60] sm:$0xf]
        %v3097 = vld [vmem:[%s3077 + $0x64] sm:$0xf]
        %v3098 = vld [vmem:[%s3077 + $0x68] sm:$0x1]
        %v3099 = vld [vmem:[%s3077 + $0x70] sm:$0xf]
        %v3100 = vld [vmem:[%s3077 + $0x74] sm:$0xf]
        %v3101 = vld [vmem:[%s3077 + $0x78] sm:$0x1]
        %vm3102 = vsmask.f32 3328
        %vm3103 = vsmask.f32 7440
        %vm3104 = vmor %vm3102, %vm3103
        %v3106 = vshrl.u32 %v3078, 16
        %v3108 = vrot.slane %v3106, 4
        %v3109 = vshll.u32 %v3078, 16
        %v3111 = vrot.slane %v3109, 5
        %v3112 = vor.u32 %v3108, %v3111
        %v3113 = vrot.slane %v3112, 4
        %v3115 = vshll.u32 %v3079, 16
        %v3117 = vrot.slane %v3115, 5
        %v3118 = vsel %vm3104, %v3113, %v3117
        %v3119 = vshrl.u32 %v3079, 16
        %v3121 = vrot.slane %v3119, 4
        %v3122 = vor.u32 %v3121, %v3117
        %v3123 = vrot.slane %v3122, 4
        %v3125 = vshll.u32 %v3080, 16
        %v3127 = vrot.slane %v3125, 5
        %v3128 = vsel %vm3104, %v3123, %v3127
        %v3130 = vshrl.u32 %v3081, 16
        %v3132 = vrot.slane %v3130, 4
        %v3133 = vshll.u32 %v3081, 16
        %v3135 = vrot.slane %v3133, 5
        %v3136 = vor.u32 %v3132, %v3135
        %v3137 = vrot.slane %v3136, 4
        %v3139 = vshll.u32 %v3082, 16
        %v3141 = vrot.slane %v3139, 5
        %v3142 = vsel %vm3104, %v3137, %v3141
        %v3143 = vshrl.u32 %v3082, 16
        %v3145 = vrot.slane %v3143, 4
        %v3146 = vor.u32 %v3145, %v3141
        %v3147 = vrot.slane %v3146, 4
        %v3149 = vshll.u32 %v3083, 16
        %v3151 = vrot.slane %v3149, 5
        %v3152 = vsel %vm3104, %v3147, %v3151
        %v3154 = vshrl.u32 %v3084, 16
        %v3156 = vrot.slane %v3154, 4
        %v3157 = vshll.u32 %v3084, 16
        %v3159 = vrot.slane %v3157, 5
        %v3160 = vor.u32 %v3156, %v3159
        %v3161 = vrot.slane %v3160, 4
        %v3163 = vshll.u32 %v3085, 16
        %v3165 = vrot.slane %v3163, 5
        %v3166 = vsel %vm3104, %v3161, %v3165
        %v3167 = vshrl.u32 %v3085, 16
        %v3169 = vrot.slane %v3167, 4
        %v3170 = vor.u32 %v3169, %v3165
        %v3171 = vrot.slane %v3170, 4
        %v3173 = vshll.u32 %v3086, 16
        %v3175 = vrot.slane %v3173, 5
        %v3176 = vsel %vm3104, %v3171, %v3175
        %v3178 = vshrl.u32 %v3087, 16
        %v3180 = vrot.slane %v3178, 4
        %v3181 = vshll.u32 %v3087, 16
        %v3183 = vrot.slane %v3181, 5
        %v3184 = vor.u32 %v3180, %v3183
        %v3185 = vrot.slane %v3184, 4
        %v3187 = vshll.u32 %v3088, 16
        %v3189 = vrot.slane %v3187, 5
        %v3190 = vsel %vm3104, %v3185, %v3189
        %v3191 = vshrl.u32 %v3088, 16
        %v3193 = vrot.slane %v3191, 4
        %v3194 = vor.u32 %v3193, %v3189
        %v3195 = vrot.slane %v3194, 4
        %v3197 = vshll.u32 %v3089, 16
        %v3199 = vrot.slane %v3197, 5
        %v3200 = vsel %vm3104, %v3195, %v3199
        %v3202 = vshrl.u32 %v3090, 16
        %v3204 = vrot.slane %v3202, 4
        %v3205 = vshll.u32 %v3090, 16
        %v3207 = vrot.slane %v3205, 5
        %v3208 = vor.u32 %v3204, %v3207
        %v3209 = vrot.slane %v3208, 4
        %v3211 = vshll.u32 %v3091, 16
        %v3213 = vrot.slane %v3211, 5
        %v3214 = vsel %vm3104, %v3209, %v3213
        %v3215 = vshrl.u32 %v3091, 16
        %v3217 = vrot.slane %v3215, 4
        %v3218 = vor.u32 %v3217, %v3213
        %v3219 = vrot.slane %v3218, 4
        %v3221 = vshll.u32 %v3092, 16
        %v3223 = vrot.slane %v3221, 5
        %v3224 = vsel %vm3104, %v3219, %v3223
        %v3226 = vshrl.u32 %v3093, 16
        %v3228 = vrot.slane %v3226, 4
        %v3229 = vshll.u32 %v3093, 16
        %v3231 = vrot.slane %v3229, 5
        %v3232 = vor.u32 %v3228, %v3231
        %v3233 = vrot.slane %v3232, 4
        %v3235 = vshll.u32 %v3094, 16
        %v3237 = vrot.slane %v3235, 5
        %v3238 = vsel %vm3104, %v3233, %v3237
        %v3239 = vshrl.u32 %v3094, 16
        %v3241 = vrot.slane %v3239, 4
        %v3242 = vor.u32 %v3241, %v3237
        %v3243 = vrot.slane %v3242, 4
        %v3245 = vshll.u32 %v3095, 16
        %v3247 = vrot.slane %v3245, 5
        %v3248 = vsel %vm3104, %v3243, %v3247
        %v3250 = vshrl.u32 %v3096, 16
        %v3252 = vrot.slane %v3250, 4
        %v3253 = vshll.u32 %v3096, 16
        %v3255 = vrot.slane %v3253, 5
        %v3256 = vor.u32 %v3252, %v3255
        %v3257 = vrot.slane %v3256, 4
        %v3259 = vshll.u32 %v3097, 16
        %v3261 = vrot.slane %v3259, 5
        %v3262 = vsel %vm3104, %v3257, %v3261
        %v3263 = vshrl.u32 %v3097, 16
        %v3265 = vrot.slane %v3263, 4
        %v3266 = vor.u32 %v3265, %v3261
        %v3267 = vrot.slane %v3266, 4
        %v3269 = vshll.u32 %v3098, 16
        %v3271 = vrot.slane %v3269, 5
        %v3272 = vsel %vm3104, %v3267, %v3271
        %v3274 = vshrl.u32 %v3099, 16
        %v3276 = vrot.slane %v3274, 4
        %v3277 = vshll.u32 %v3099, 16
        %v3279 = vrot.slane %v3277, 5
        %v3280 = vor.u32 %v3276, %v3279
        %v3281 = vrot.slane %v3280, 4
        %v3283 = vshll.u32 %v3100, 16
        %v3285 = vrot.slane %v3283, 5
        %v3286 = vsel %vm3104, %v3281, %v3285
        %v3287 = vshrl.u32 %v3100, 16
        %v3289 = vrot.slane %v3287, 4
        %v3290 = vor.u32 %v3289, %v3285
        %v3291 = vrot.slane %v3290, 4
        %v3293 = vshll.u32 %v3101, 16
        %v3295 = vrot.slane %v3293, 5
        %v3296 = vsel %vm3104, %v3291, %v3295
        %v3313 = vunpack.c.l.bf16 %v3118
        %v3314 = vunpack.c.l.bf16 %v3128
        %v3315 = vunpack.c.l.bf16 %v3142
        %v3316 = vunpack.c.l.bf16 %v3152
        %v3317 = vunpack.c.l.bf16 %v3166
        %v3318 = vunpack.c.l.bf16 %v3176
        %v3319 = vunpack.c.l.bf16 %v3190
        %v3320 = vunpack.c.l.bf16 %v3200
        %v3321 = vunpack.c.l.bf16 %v3214
        %v3322 = vunpack.c.l.bf16 %v3224
        %v3323 = vunpack.c.l.bf16 %v3238
        %v3324 = vunpack.c.l.bf16 %v3248
        %v3325 = vunpack.c.l.bf16 %v3262
        %v3326 = vunpack.c.l.bf16 %v3272
        %v3327 = vunpack.c.l.bf16 %v3286
        %v3328 = vunpack.c.l.bf16 %v3296
        %v3329 = vadd.f32 %v3012, %v3313
        %v3330 = vadd.f32 %v3015, %v3314
        %v3331 = vadd.f32 %v3020, %v3315
        %v3332 = vadd.f32 %v3023, %v3316
        %v3333 = vadd.f32 %v3028, %v3317
        %v3334 = vadd.f32 %v3031, %v3318
        %v3335 = vadd.f32 %v3036, %v3319
        %v3336 = vadd.f32 %v3039, %v3320
        %v3337 = vadd.f32 %v3044, %v3321
        %v3338 = vadd.f32 %v3047, %v3322
        %v3339 = vadd.f32 %v3052, %v3323
        %v3340 = vadd.f32 %v3055, %v3324
        %v3341 = vadd.f32 %v3060, %v3325
        %v3342 = vadd.f32 %v3063, %v3326
        %v3343 = vadd.f32 %v3068, %v3327
        %v3344 = vadd.f32 %v3071, %v3328
        %v3345 = vmax.f32 %v3329, 0.0
        %v3346 = vmax.f32 %v3330, 0.0
        %v3347 = vmax.f32 %v3331, 0.0
        %v3348 = vmax.f32 %v3332, 0.0
        %v3349 = vmax.f32 %v3333, 0.0
        %v3350 = vmax.f32 %v3334, 0.0
        %v3351 = vmax.f32 %v3335, 0.0
        %v3352 = vmax.f32 %v3336, 0.0
        %v3353 = vmax.f32 %v3337, 0.0
        %v3354 = vmax.f32 %v3338, 0.0
        %v3355 = vmax.f32 %v3339, 0.0
        %v3356 = vmax.f32 %v3340, 0.0
        %v3357 = vmax.f32 %v3341, 0.0
        %v3358 = vmax.f32 %v3342, 0.0
        %v3359 = vmax.f32 %v3343, 0.0
        %v3360 = vmax.f32 %v3344, 0.0
        %3361 = vst [vmem:[%s354] sm:$0xff] %v3345
        %3362 = vst [vmem:[%s354 + $0x8] sm:$0xff] %v3346
        %3363 = vst [vmem:[%s354 + $0x10] sm:$0xff] %v3347
        %3364 = vst [vmem:[%s354 + $0x18] sm:$0xff] %v3348
        %3365 = vst [vmem:[%s354 + $0x20] sm:$0xff] %v3349
        %3366 = vst [vmem:[%s354 + $0x28] sm:$0xff] %v3350
        %3367 = vst [vmem:[%s354 + $0x30] sm:$0xff] %v3351
        %3368 = vst [vmem:[%s354 + $0x38] sm:$0xff] %v3352
        %3369 = vst [vmem:[%s354 + $0x40] sm:$0xff] %v3353
        %3370 = vst [vmem:[%s354 + $0x48] sm:$0xff] %v3354
        %3371 = vst [vmem:[%s354 + $0x50] sm:$0xff] %v3355
        %3372 = vst [vmem:[%s354 + $0x58] sm:$0xff] %v3356
        %3373 = vst [vmem:[%s354 + $0x60] sm:$0xff] %v3357
        %3374 = vst [vmem:[%s354 + $0x68] sm:$0xff] %v3358
        %3375 = vst [vmem:[%s354 + $0x70] sm:$0xff] %v3359
        %3376 = vst [vmem:[%s354 + $0x78] sm:$0xff] %v3360
        %s3377 = sand.u32 %s200, 1
        %s3378 = scalar_lea.sflag [#allocation4], %s3377
        %s3379 = sand.u32 %s200, 1
        %s3380 = smul.addr %s3379, 128
        %s3381 = scalar_lea.vmem [#allocation10], %s3380
        // Predicated region
        $region65: #{tpu_custom_call.1} parent=47 // pred_check
          %p3382 = pneg %p210
        $region66: #{tpu_custom_call.1} parent=47 // pred_check_branch
          %3384 = sbr.rel (%p3382) target = $region68
        $region67: #{tpu_custom_call.1} parent=47 // pred_region
          %s3385 = smul.u32 8, %s31
          %s3387 = ssub.s32 2048, 2048
          %3388 = vsyncadd %s3378, %s3387
          %s3389 = smul.addr %s3385, 2
          %s3390 = smul.addr %s30, 32
          %s3391 = sadd.s32 %s3389, %s3390
          %s3392 = smul.addr %s3391, 128
          %s3393 = scalar_lea.hbm %s7, %s3392
          %s3394 = sshll.u32 %s3381, 4
          %s3395 = int_to_ptr.vmem [resolvable:$true] %s3394
          %3400 = dma.vmem_to_hbm [thread:$0]  %s3395, 2048, %s3393, %s3378, 128, 128, 8
        $region68: #{tpu_custom_call.1} parent=47 // pred_fallthru
          _
      $region48: #{tpu_custom_call.1} parent=5 // pred_fallthru
        _
      %p3401 = scmp.le.s32.totalorder 2, %s21
      // Predicated region
      $region69: #{tpu_custom_call.1} parent=5 // pred_check
        %p3402 = pneg %p3401
      $region70: #{tpu_custom_call.1} parent=5 // pred_check_branch
        %3404 = sbr.rel (%p3402) target = $region72
      $region71: #{tpu_custom_call.1} parent=5 // pred_region
        %s3405 = ssub.s32 %s21, 2
        // Predicated region
        $region73: #{tpu_custom_call.1} parent=71 // pred_check
          %p3406 = pneg %p216
        $region74: #{tpu_custom_call.1} parent=71 // pred_check_branch
          %3408 = sbr.rel (%p3406) target = $region76
        $region75: #{tpu_custom_call.1} parent=71 // pred_region
          %s3409 = sand.u32 %s201, 1
          %s3410 = scalar_lea.sflag [#allocation4], %s3409
          %s3411 = sand.u32 %s201, 1
          %s3412 = smul.addr %s3411, 128
          %s3413 = scalar_lea.vmem [#allocation10], %s3412
          %3414 = dma.done %s3410, 2048
        $region76: #{tpu_custom_call.1} parent=71 // pred_fallthru
          _
      $region72: #{tpu_custom_call.1} parent=5 // pred_fallthru
        _
    $region6: #{tpu_custom_call.1} parent=1 // loop_footer
      %s25 = sadd.s32 1, %s21
    $region7: #{tpu_custom_call.1} parent=1 // loop_footer_branch
      %20 = sbr.rel target = $region3
    $region8: #{tpu_custom_call.1} parent=1 // loop_exit
      _
    %3415 = vsyncpa [#allocation3], 1
    %s3416 = scalar_lea.sflag [#allocation3], 1
    %3417 = vsyncpa %s3416, 1
    %3418 = vsyncpa [#allocation6], 1
    %3419 = vsyncpa [#allocation9], 1
    %3420 = vsyncpa [#allocation4], 1
    %s3421 = scalar_lea.sflag [#allocation4], 1
    %3422 = vsyncpa %s3421, 1

</llo_original>
